<compile_context>
chip_gen: v5e
topology: v5e:2x2
jax: 0.10.0
libtpu: 0.0.40
codegen_flags: <defaults>
</compile_context>

<pallas_src>
import functools

import jax
import jax.numpy as jnp
from jax.experimental import pallas as pl
from jax.experimental.pallas import tpu as pltpu


# ----------------------------------------------------------------------------
# helpers
# ----------------------------------------------------------------------------
def _round_up(x, m):
    return (x + m - 1) // m * m


def _cdiv(a, b):
    return (a + b - 1) // b


def _pad_axis(x, axis, target):
    pad = target - x.shape[axis]
    if pad == 0:
        return x
    widths = [(0, 0)] * x.ndim
    widths[axis] = (0, pad)
    return jnp.pad(x, widths)


def _pick_tile(m, tm_max=512):
    """Row-tile size (multiple of 16, minimal pad rows) and padded M.

    tm_max=512 keeps the per-tile VMEM footprint a few MiB — safe under v5e's
    16 MiB scoped default; on v6e/v7x it can be raised to 1024 (together with
    pltpu.CompilerParams(vmem_limit_bytes=...)) to halve grid-step overhead.
    """
    ntiles = max(_cdiv(m, tm_max), 1)
    tm = _round_up(max(_cdiv(m, ntiles), 1), 16)
    return tm, tm * ntiles


# ----------------------------------------------------------------------------
# Pallas kernel 1: fused box head   o = x @ W + b   (cls + bbox, one matmul)
#   x: [tm, K] f32 (cast to bf16 in-kernel), W: [K, n_pad] bf16 (resident),
#   b: [1, n_pad] f32, o: [tm, n_pad] bf16 lane-dense unmasked store.
# ----------------------------------------------------------------------------
def _fused_linear_kernel(x_ref, w_ref, b_ref, o_ref):
    x = x_ref[...].astype(jnp.bfloat16)                       # in-kernel cast
    acc = jnp.dot(x, w_ref[...], preferred_element_type=jnp.float32)
    acc = acc + b_ref[...]                                    # f32 epilogue
    o_ref[...] = acc.astype(o_ref.dtype)                      # bf16 store


def pallas_box_head(x, w_p, b_p, *, n_valid, tm_max=512):
    """x:[M,K] f32 @ pre-padded/pre-cast w_p:[K,n_pad] bf16 + b_p:[1,n_pad] f32."""
    M, K = x.shape
    n_pad = w_p.shape[1]
    tm, m_pad = _pick_tile(M, tm_max)
    x_p = _pad_axis(x, 0, m_pad)

    out = pl.pallas_call(
        _fused_linear_kernel,
        out_shape=jax.ShapeDtypeStruct((m_pad, n_pad), jnp.bfloat16),
        grid=(m_pad // tm,),
        in_specs=[
            pl.BlockSpec((tm, K), lambda i: (i, 0)),
            pl.BlockSpec((K, n_pad), lambda i: (0, 0)),       # resident weight
            pl.BlockSpec((1, n_pad), lambda i: (0, 0)),       # resident bias row
        ],
        out_specs=pl.BlockSpec((tm, n_pad), lambda i: (i, 0)),
        compiler_params=pltpu.CompilerParams(dimension_semantics=("parallel",)),
    )(x_p, w_p, b_p)
    return out[:M, :n_valid].astype(jnp.float32)


# ----------------------------------------------------------------------------
# Pallas kernel 2: fused mask head
#   h   = relu(x @ W1 + b1)        W1: deconv weight, columns (p,q,co)-major
#   out = h @ W2' + b2'            W2': block-diagonal [4*hidden, 4*slab] so
#                                  all four (p,q) positions share one
#                                  128-lane output slab (slab=32 for nc<=32).
# The [tm, 4*hidden] intermediate never touches HBM; output is [tm, 128] bf16.
# ----------------------------------------------------------------------------
def _fused_mask_head_kernel(x_ref, w1_ref, b1_ref, w2_ref, b2_ref, o_ref):
    x = x_ref[...].astype(jnp.bfloat16)                       # in-kernel cast
    h = jnp.dot(x, w1_ref[...], preferred_element_type=jnp.float32)
    h = jnp.maximum(h + b1_ref[...], 0.0)                     # f32 epilogue
    h = h.astype(jnp.bfloat16)                                # back to MXU rate
    out = jnp.dot(h, w2_ref[...], preferred_element_type=jnp.float32)
    out = out + b2_ref[...]
    o_ref[...] = out.astype(o_ref.dtype)                      # bf16 store


def pallas_mask_head(x_flat, w1_p, b1_p, w2_bd, b2_bd, *, tm_max=512):
    """x_flat:[M,C_in] f32 -> [M, 4*slab] bf16 (deconv 2x2 s2 + ReLU + 1x1 conv)."""
    M, K = x_flat.shape
    four_hidden = w1_p.shape[1]
    n_out = w2_bd.shape[1]                                    # 4*slab (128-multiple)
    tm, m_pad = _pick_tile(M, tm_max)
    x_p = _pad_axis(x_flat, 0, m_pad)

    out = pl.pallas_call(
        _fused_mask_head_kernel,
        out_shape=jax.ShapeDtypeStruct((m_pad, n_out), jnp.bfloat16),
        grid=(m_pad // tm,),
        in_specs=[
            pl.BlockSpec((tm, K), lambda i: (i, 0)),
            pl.BlockSpec((K, four_hidden), lambda i: (0, 0)),
            pl.BlockSpec((1, four_hidden), lambda i: (0, 0)),
            pl.BlockSpec((four_hidden, n_out), lambda i: (0, 0)),
            pl.BlockSpec((1, n_out), lambda i: (0, 0)),
        ],
        out_specs=pl.BlockSpec((tm, n_out), lambda i: (i, 0)),
        compiler_params=pltpu.CompilerParams(dimension_semantics=("parallel",)),
    )(x_p, w1_p, b1_p, w2_bd, b2_bd)
    return out[:M]


# ----------------------------------------------------------------------------
# One-time parameter preparation (hoisted out of the forward path)
# ----------------------------------------------------------------------------
def prepare_params(params, *, num_classes, hidden):
    # --- FastRCNNPredictor: fuse cls + bbox along N, pad to 128 lanes -------
    fused_w = jnp.concatenate([params["cls_w"], params["bbox_w"]], axis=1)
    fused_b = jnp.concatenate([params["cls_b"], params["bbox_b"]])
    n_box = fused_w.shape[1]                                   # 5 * num_classes
    n_box_pad = _round_up(n_box, 128)
    box_w = _pad_axis(fused_w, 1, n_box_pad).astype(jnp.bfloat16)
    box_b = _pad_axis(fused_b.reshape(1, n_box), 1, n_box_pad).astype(jnp.float32)

    # --- MaskRCNNPredictor stage 1: ConvTranspose2d(k=2,s=2) as matmul ------
    # PyTorch weight [C_in, C_out, 2, 2] -> columns (p, q, co)-major.
    c_in = params["deconv_w"].shape[0]
    w1 = jnp.transpose(params["deconv_w"], (0, 2, 3, 1)).reshape(c_in, 4 * hidden)
    w1 = w1.astype(jnp.bfloat16)
    b1 = jnp.tile(params["deconv_b"], 4).reshape(1, 4 * hidden).astype(jnp.float32)

    # --- stage 2: block-diagonal 1x1-conv weight --------------------------------
    # Block s (= p*2+q) occupies rows s*hidden:(s+1)*hidden and a 32-lane column
    # slab, so the whole mask-head output fits in 4*slab = 128 lanes.
    slab = _round_up(num_classes, 32)
    w2_bd = jnp.zeros((4 * hidden, 4 * slab), jnp.float32)
    for s in range(4):
        w2_bd = w2_bd.at[s * hidden:(s + 1) * hidden,
                         s * slab:s * slab + num_classes].set(params["logits_w"])
    w2_bd = w2_bd.astype(jnp.bfloat16)
    b2_bd = jnp.tile(_pad_axis(params["logits_b"], 0, slab), 4)
    b2_bd = b2_bd.reshape(1, 4 * slab).astype(jnp.float32)

    return {"box_w": box_w, "box_b": box_b,
            "mask_w1": w1, "mask_b1": b1,
            "mask_w2": w2_bd, "mask_b2": b2_bd}


# ----------------------------------------------------------------------------
# Heads forward (hot path — only row padding + kernels + cheap reshapes)
# ----------------------------------------------------------------------------
def fast_rcnn_predictor(box_features, prep, *, num_classes):
    n_box = 5 * num_classes
    fused = pallas_box_head(box_features, prep["box_w"], prep["box_b"], n_valid=n_box)
    return fused[:, :num_classes], fused[:, num_classes:]


def mask_rcnn_predictor(x_nchw, prep, *, num_classes, hidden):
    R, C_in, H, W = x_nchw.shape
    # TODO(synk): this NCHW->NHWC transpose is one extra HBM pass; emit NHWC
    # mask features upstream (RoIAlign) to remove it entirely.
    x_flat = jnp.transpose(x_nchw, (0, 2, 3, 1)).reshape(R * H * W, C_in)

    slab = _round_up(num_classes, 32)
    out = pallas_mask_head(x_flat, prep["mask_w1"], prep["mask_b1"],
                           prep["mask_w2"], prep["mask_b2"])

    # [R*H*W, 4*slab] -> [R, H, W, p, q, k] -> [R, k, 2H, 2W]
    out = out.reshape(R, H, W, 2, 2, slab)[..., :num_classes]
    out = jnp.transpose(out, (0, 5, 1, 3, 2, 4)).reshape(R, num_classes, 2 * H, 2 * W)
    return out.astype(jnp.float32)


def maskrcnn_heads_forward(box_features, mask_features, prep, *, num_classes, hidden):
    cls_logits, bbox_deltas = fast_rcnn_predictor(
        box_features, prep, num_classes=num_classes)
    mask_logits = mask_rcnn_predictor(
        mask_features, prep, num_classes=num_classes, hidden=hidden)
    return {"cls_logits": cls_logits,
            "bbox_deltas": bbox_deltas,
            "mask_logits": mask_logits}


# ----------------------------------------------------------------------------
# Deterministic parameter initialization (shapes per the module's __init__)
# ----------------------------------------------------------------------------
def init_params(key, num_classes, in_features, in_features_mask, hidden):
    ks = jax.random.split(key, 4)

    def w(k, shape, fan_in):
        return jax.random.normal(k, shape, jnp.float32) / jnp.sqrt(float(fan_in))

    return {
        # FastRCNNPredictor
        "cls_w": w(ks[0], (in_features, num_classes), in_features),
        "cls_b": jnp.zeros((num_classes,), jnp.float32),
        "bbox_w": w(ks[1], (in_features, num_classes * 4), in_features),
        "bbox_b": jnp.zeros((num_classes * 4,), jnp.float32),
        # MaskRCNNPredictor: PyTorch ConvTranspose2d weight is [C_in, C_out, 2, 2]
        "deconv_w": w(ks[2], (in_features_mask, hidden, 2, 2), in_features_mask),
        "deconv_b": jnp.zeros((hidden,), jnp.float32),
        # PyTorch Conv2d weight [num_classes, hidden, 1, 1] stored as [hidden, num_classes]
        "logits_w": w(ks[3], (hidden, num_classes), hidden),
        "logits_b": jnp.zeros((num_classes,), jnp.float32),
    }


if __name__ == "__main__":
    key = jax.random.PRNGKey(0)
    num_classes = 5
    in_features = 1024        # box predictor input size in maskrcnn_resnet50_fpn_v2
    in_features_mask = 256    # mask predictor input channels
    hidden = 256              # hidden_layer in __init__

    k_img, k_box, k_mask, k_param = jax.random.split(key, 4)
    # images mirror the module signature (NCHW); backbone itself is TODO above.
    images = jax.random.normal(k_img, (2, 3, 64, 64), jnp.float32)
    box_features = jax.random.normal(k_box, (8, in_features), jnp.float32)
    mask_features = jax.random.normal(k_mask, (4, in_features_mask, 14, 14), jnp.float32)

    params = init_params(k_param, num_classes, in_features, in_features_mask, hidden)
    # One-time prep: fuse / pad / reorder / cast weights outside the hot path.
    prep = prepare_params(params, num_classes=num_classes, hidden=hidden)

    forward = jax.jit(functools.partial(
        maskrcnn_heads_forward, num_classes=num_classes, hidden=hidden))
    out = forward(box_features, mask_features, prep)
    jax.block_until_ready(out)

    # --- pure-JAX reference check -------------------------------------------
    hp = jax.lax.Precision.HIGHEST
    ref_cls = jnp.dot(box_features, params["cls_w"], precision=hp) + params["cls_b"]
    ref_bbox = jnp.dot(box_features, params["bbox_w"], precision=hp) + params["bbox_b"]
    R = mask_features.shape[0]
    t = jnp.einsum("nchw,cdpq->ndhpwq", mask_features, params["deconv_w"], precision=hp)
    t = t.reshape(R, hidden, 28, 28) + params["deconv_b"][None, :, None, None]
    t = jnp.maximum(t, 0.0)
    ref_mask = (jnp.einsum("ndhw,dk->nkhw", t, params["logits_w"], precision=hp)
                + params["logits_b"][None, :, None, None])

    assert out["cls_logits"].shape == (8, num_classes)
    assert out["bbox_deltas"].shape == (8, num_classes * 4)
    assert out["mask_logits"].shape == (4, num_classes, 28, 28)
    assert jnp.allclose(out["cls_logits"], ref_cls, atol=3e-2, rtol=3e-2)
    assert jnp.allclose(out["bbox_deltas"], ref_bbox, atol=3e-2, rtol=3e-2)
    assert jnp.allclose(out["mask_logits"], ref_mask, atol=3e-2, rtol=3e-2)

    print("KERNEL_OK")
</pallas_src>

<mosaic_0001>
module attributes {stable_mosaic.version = 11 : i64} {
  func.func @_fused_linear_kernel(%arg0: i32, %arg1: memref<16x1024xf32, #tpu.memory_space<vmem>>, %arg2: memref<1024x128xbf16, #tpu.memory_space<vmem>>, %arg3: memref<1x128xf32, #tpu.memory_space<vmem>>, %arg4: memref<16x128xbf16, #tpu.memory_space<vmem>>) attributes {dimension_semantics = [#tpu.dimension_semantics<parallel>], iteration_bounds = array<i64: 1>, scalar_prefetch = 0 : i64, scratch_operands = 0 : i64, tpu.core_type = #tpu.core_type<tc>, window_params = [{transform_indices = @transform_0, window_bounds = array<i64: 16, 1024>}, {pipeline_mode = #tpu.pipeline_mode<synchronous>, transform_indices = @transform_1, window_bounds = array<i64: 1024, 128>}, {pipeline_mode = #tpu.pipeline_mode<synchronous>, transform_indices = @transform_2, window_bounds = array<i64: 1, 128>}, {transform_indices = @transform_3, window_bounds = array<i64: 16, 128>}]} {
    %c0 = arith.constant 0 : index
    %c0_0 = arith.constant 0 : index
    %0 = vector.load %arg1[%c0, %c0_0] : memref<16x1024xf32, #tpu.memory_space<vmem>>, vector<16x1024xf32>
    %1 = arith.truncf %0 : vector<16x1024xf32> to vector<16x1024xbf16>
    %c0_1 = arith.constant 0 : index
    %c0_2 = arith.constant 0 : index
    %2 = vector.load %arg2[%c0_1, %c0_2] : memref<1024x128xbf16, #tpu.memory_space<vmem>>, vector<1024x128xbf16>
    %cst = arith.constant dense<0.000000e+00> : vector<16x128xf32>
    %3 = tpu.matmul %1, %2, %cst {dimension_numbers = #tpu.dot_dimension_numbers<[1], [0], [0], [1], [0, 0, 1, 1], [], []>} : vector<16x1024xbf16>, vector<1024x128xbf16>, vector<16x128xf32> -> vector<16x128xf32>
    %c0_3 = arith.constant 0 : index
    %c0_4 = arith.constant 0 : index
    %4 = vector.load %arg3[%c0_3, %c0_4] : memref<1x128xf32, #tpu.memory_space<vmem>>, vector<1x128xf32>
    %5 = vector.broadcast %4 : vector<1x128xf32> to vector<16x128xf32>
    %6 = arith.addf %3, %5 : vector<16x128xf32>
    %7 = arith.truncf %6 : vector<16x128xf32> to vector<16x128xbf16>
    %c0_5 = arith.constant 0 : index
    %c0_6 = arith.constant 0 : index
    %8 = vector.load %arg4[%c0_5, %c0_6] : memref<16x128xbf16, #tpu.memory_space<vmem>>, vector<16x128xbf16>
    tpu.vector_store %arg4[%c0_5, %c0_6], %7 {strides = array<i32>} : memref<16x128xbf16, #tpu.memory_space<vmem>>, vector<16x128xbf16>,
    return
  }
  func.func @transform_0(%arg0: i32) -> (i32, i32) {
    %c0_i32 = arith.constant 0 : i32
    %c0_i32_0 = arith.constant 0 : i32
    return %arg0, %c0_i32 : i32, i32
  }
  func.func @transform_1(%arg0: i32) -> (i32, i32) {
    %c0_i32 = arith.constant 0 : i32
    %c0_i32_0 = arith.constant 0 : i32
    %c0_i32_1 = arith.constant 0 : i32
    return %c0_i32, %c0_i32_0 : i32, i32
  }
  func.func @transform_2(%arg0: i32) -> (i32, i32) {
    %c0_i32 = arith.constant 0 : i32
    %c0_i32_0 = arith.constant 0 : i32
    %c0_i32_1 = arith.constant 0 : i32
    return %c0_i32, %c0_i32_0 : i32, i32
  }
  func.func @transform_3(%arg0: i32) -> (i32, i32) {
    %c0_i32 = arith.constant 0 : i32
    %c0_i32_0 = arith.constant 0 : i32
    return %arg0, %c0_i32 : i32, i32
  }
}

module attributes {stable_mosaic.version = 11 : i64} {
  func.func @_fused_mask_head_kernel(%arg0: i32, %arg1: memref<400x256xf32, #tpu.memory_space<vmem>>, %arg2: memref<256x1024xbf16, #tpu.memory_space<vmem>>, %arg3: memref<1x1024xf32, #tpu.memory_space<vmem>>, %arg4: memref<1024x128xbf16, #tpu.memory_space<vmem>>, %arg5: memref<1x128xf32, #tpu.memory_space<vmem>>, %arg6: memref<400x128xbf16, #tpu.memory_space<vmem>>) attributes {dimension_semantics = [#tpu.dimension_semantics<parallel>], iteration_bounds = array<i64: 2>, scalar_prefetch = 0 : i64, scratch_operands = 0 : i64, tpu.core_type = #tpu.core_type<tc>, window_params = [{transform_indices = @transform_0, window_bounds = array<i64: 400, 256>}, {pipeline_mode = #tpu.pipeline_mode<synchronous>, transform_indices = @transform_1, window_bounds = array<i64: 256, 1024>}, {pipeline_mode = #tpu.pipeline_mode<synchronous>, transform_indices = @transform_2, window_bounds = array<i64: 1, 1024>}, {pipeline_mode = #tpu.pipeline_mode<synchronous>, transform_indices = @transform_3, window_bounds = array<i64: 1024, 128>}, {pipeline_mode = #tpu.pipeline_mode<synchronous>, transform_indices = @transform_4, window_bounds = array<i64: 1, 128>}, {transform_indices = @transform_5, window_bounds = array<i64: 400, 128>}]} {
    %c0 = arith.constant 0 : index
    %c0_0 = arith.constant 0 : index
    %0 = vector.load %arg1[%c0, %c0_0] : memref<400x256xf32, #tpu.memory_space<vmem>>, vector<400x256xf32>
    %1 = arith.truncf %0 : vector<400x256xf32> to vector<400x256xbf16>
    %c0_1 = arith.constant 0 : index
    %c0_2 = arith.constant 0 : index
    %2 = vector.load %arg2[%c0_1, %c0_2] : memref<256x1024xbf16, #tpu.memory_space<vmem>>, vector<256x1024xbf16>
    %cst = arith.constant dense<0.000000e+00> : vector<400x1024xf32>
    %3 = tpu.matmul %1, %2, %cst {dimension_numbers = #tpu.dot_dimension_numbers<[1], [0], [0], [1], [0, 0, 1, 1], [], []>} : vector<400x256xbf16>, vector<256x1024xbf16>, vector<400x1024xf32> -> vector<400x1024xf32>
    %c0_3 = arith.constant 0 : index
    %c0_4 = arith.constant 0 : index
    %4 = vector.load %arg3[%c0_3, %c0_4] : memref<1x1024xf32, #tpu.memory_space<vmem>>, vector<1x1024xf32>
    %5 = vector.broadcast %4 : vector<1x1024xf32> to vector<400x1024xf32>
    %6 = arith.addf %3, %5 : vector<400x1024xf32>
    %cst_5 = arith.constant 0.000000e+00 : f32
    %7 = vector.broadcast %cst_5 : f32 to vector<400x1024xf32>
    %8 = arith.maximumf %6, %7 : vector<400x1024xf32>
    %9 = arith.truncf %8 : vector<400x1024xf32> to vector<400x1024xbf16>
    %c0_6 = arith.constant 0 : index
    %c0_7 = arith.constant 0 : index
    %10 = vector.load %arg4[%c0_6, %c0_7] : memref<1024x128xbf16, #tpu.memory_space<vmem>>, vector<1024x128xbf16>
    %cst_8 = arith.constant dense<0.000000e+00> : vector<400x128xf32>
    %11 = tpu.matmul %9, %10, %cst_8 {dimension_numbers = #tpu.dot_dimension_numbers<[1], [0], [0], [1], [0, 0, 1, 1], [], []>} : vector<400x1024xbf16>, vector<1024x128xbf16>, vector<400x128xf32> -> vector<400x128xf32>
    %c0_9 = arith.constant 0 : index
    %c0_10 = arith.constant 0 : index
    %12 = vector.load %arg5[%c0_9, %c0_10] : memref<1x128xf32, #tpu.memory_space<vmem>>, vector<1x128xf32>
    %13 = vector.broadcast %12 : vector<1x128xf32> to vector<400x128xf32>
    %14 = arith.addf %11, %13 : vector<400x128xf32>
    %15 = arith.truncf %14 : vector<400x128xf32> to vector<400x128xbf16>
    %c0_11 = arith.constant 0 : index
    %c0_12 = arith.constant 0 : index
    %16 = vector.load %arg6[%c0_11, %c0_12] : memref<400x128xbf16, #tpu.memory_space<vmem>>, vector<400x128xbf16>
    tpu.vector_store %arg6[%c0_11, %c0_12], %15 {strides = array<i32>} : memref<400x128xbf16, #tpu.memory_space<vmem>>, vector<400x128xbf16>,
    return
  }
  func.func @transform_0(%arg0: i32) -> (i32, i32) {
    %c0_i32 = arith.constant 0 : i32
    %c0_i32_0 = arith.constant 0 : i32
    return %arg0, %c0_i32 : i32, i32
  }
  func.func @transform_1(%arg0: i32) -> (i32, i32) {
    %c0_i32 = arith.constant 0 : i32
    %c0_i32_0 = arith.constant 0 : i32
    %c0_i32_1 = arith.constant 0 : i32
    return %c0_i32, %c0_i32_0 : i32, i32
  }
  func.func @transform_2(%arg0: i32) -> (i32, i32) {
    %c0_i32 = arith.constant 0 : i32
    %c0_i32_0 = arith.constant 0 : i32
    %c0_i32_1 = arith.constant 0 : i32
    return %c0_i32, %c0_i32_0 : i32, i32
  }
  func.func @transform_3(%arg0: i32) -> (i32, i32) {
    %c0_i32 = arith.constant 0 : i32
    %c0_i32_0 = arith.constant 0 : i32
    %c0_i32_1 = arith.constant 0 : i32
    return %c0_i32, %c0_i32_0 : i32, i32
  }
  func.func @transform_4(%arg0: i32) -> (i32, i32) {
    %c0_i32 = arith.constant 0 : i32
    %c0_i32_0 = arith.constant 0 : i32
    %c0_i32_1 = arith.constant 0 : i32
    return %c0_i32, %c0_i32_0 : i32, i32
  }
  func.func @transform_5(%arg0: i32) -> (i32, i32) {
    %c0_i32 = arith.constant 0 : i32
    %c0_i32_0 = arith.constant 0 : i32
    return %arg0, %c0_i32 : i32, i32
  }
}

</mosaic_0001>

<llo_original>
// kernel: maskrcnn_heads_forward.2
$region0: #{maskrcnn_heads_forward.2}
  #allocation0 [shape = 'u32[]', space=smem, size = 0x4, offset = 0x4, fixed_abs, tag = 'smem constant byte address 0x4 - core index']
  #allocation1 [shape = 'u32[72,128]{1,0:T(1,128)}', space=vmem, size = 0x9000, scoped, tag = 'internal scratch']
  %s0 = inlined_call_operand.vmem [shape: f32[16,1024], index: 0, kind: input, shape index: {}]
  %s1 = inlined_call_operand.hbm [shape: bf16[1024,128], index: 1, kind: input, shape index: {}]
  %s2 = inlined_call_operand.hbm [shape: f32[1,128], index: 2, kind: input, shape index: {}]
  %s3 = inlined_call_operand.vmem [shape: bf16[16,128], index: 3, kind: output, shape index: {}]
  %s4 = sld [smem:[#allocation0]]
  $region30: #{maskrcnn_heads_forward.2} parent=0
    _
  %s6 = ssub.s32 1, %s4
  %s7 = scalar_select 0, %s6, %s4
  $region1: #{maskrcnn_heads_forward.2} parent=0
    #allocation2 [shape = 'u8[262144]{0}', space=vmem, size = 0x40000, scoped, tag = 'input window, operand 1, single buffered']
    #allocation3 [shape = 's32[1]{0}', space=sflag, size = 0x4, scoped, tag = 'scoped memory for maskrcnn_heads_forward.2']
    #allocation4 [shape = 'u8[512]{0}', space=vmem, size = 0x400, scoped, tag = 'input window, operand 2, single buffered']
    #allocation5 [shape = 's32[1]{0}', space=sflag, size = 0x4, scoped, tag = 'scoped memory for maskrcnn_heads_forward.2']
    %8 = vsyncpa [#allocation3], 0
    %9 = vsyncpa [#allocation5], 0
    // Predicated region
    $region2: #{maskrcnn_heads_forward.2} parent=1 // pred_check
      _
    $region3: #{maskrcnn_heads_forward.2} parent=1 // pred_check_branch
      %11 = sbr.rel (0) target = $region5
    $region4: #{maskrcnn_heads_forward.2} parent=1 // pred_region
      _
    $region5: #{maskrcnn_heads_forward.2} parent=1 // pred_fallthru
      _
    // Predicated region
    $region6: #{maskrcnn_heads_forward.2} parent=1 // pred_check
      _
    $region7: #{maskrcnn_heads_forward.2} parent=1 // pred_check_branch
      %13 = sbr.rel (0) target = $region9
    $region8: #{maskrcnn_heads_forward.2} parent=1 // pred_region
      %15 = vsyncadd [#allocation3], 0
      %s16 = sshll.u32 %s1, 4
      %s17 = int_to_ptr.hbm [resolvable:$true] %s16
      %s18 = sshll.u32 [#allocation2], 4
      %s19 = int_to_ptr.vmem [resolvable:$true] %s18
      %24 = dma.hbm_to_vmem [thread:$0]  %s17, 8192, %s19, [#allocation3], 64, 64, 4
    $region9: #{maskrcnn_heads_forward.2} parent=1 // pred_fallthru
      _
    // Predicated region
    $region10: #{maskrcnn_heads_forward.2} parent=1 // pred_check
      _
    $region11: #{maskrcnn_heads_forward.2} parent=1 // pred_check_branch
      %26 = sbr.rel (0) target = $region13
    $region12: #{maskrcnn_heads_forward.2} parent=1 // pred_region
      %28 = vsyncadd [#allocation5], 0
      %s30 = sshll.u32 %s2, 4
      %s31 = int_to_ptr.hbm [resolvable:$true] %s30
      %s32 = sshll.u32 [#allocation4], 4
      %s33 = int_to_ptr.vmem [resolvable:$true] %s32
      %35 = dma.hbm_to_vmem [thread:$0]  %s31, 16, %s33, [#allocation5]
    $region13: #{maskrcnn_heads_forward.2} parent=1 // pred_fallthru
      _
    // Predicated region
    $region14: #{maskrcnn_heads_forward.2} parent=1 // pred_check
      _
    $region15: #{maskrcnn_heads_forward.2} parent=1 // pred_check_branch
      %37 = sbr.rel (0) target = $region17
    $region16: #{maskrcnn_heads_forward.2} parent=1 // pred_region
      %39 = dma.done [#allocation3], 8192
    $region17: #{maskrcnn_heads_forward.2} parent=1 // pred_fallthru
      _
    // Predicated region
    $region18: #{maskrcnn_heads_forward.2} parent=1 // pred_check
      _
    $region19: #{maskrcnn_heads_forward.2} parent=1 // pred_check_branch
      %41 = sbr.rel (0) target = $region21
    $region20: #{maskrcnn_heads_forward.2} parent=1 // pred_region
      %43 = dma.done [#allocation5], 16
    $region21: #{maskrcnn_heads_forward.2} parent=1 // pred_fallthru
      _
    %v44 = vld [vmem:[%s0] sm:$0xff]
    %v45 = vld [vmem:[%s0 + $0x8] sm:$0xff]
    %v46 = vld [vmem:[%s0 + $0x10] sm:$0xff]
    %v47 = vld [vmem:[%s0 + $0x18] sm:$0xff]
    %v48 = vld [vmem:[%s0 + $0x20] sm:$0xff]
    %v49 = vld [vmem:[%s0 + $0x28] sm:$0xff]
    %v50 = vld [vmem:[%s0 + $0x30] sm:$0xff]
    %v51 = vld [vmem:[%s0 + $0x38] sm:$0xff]
    %v52 = vld [vmem:[%s0 + $0x40] sm:$0xff]
    %v53 = vld [vmem:[%s0 + $0x48] sm:$0xff]
    %v54 = vld [vmem:[%s0 + $0x50] sm:$0xff]
    %v55 = vld [vmem:[%s0 + $0x58] sm:$0xff]
    %v56 = vld [vmem:[%s0 + $0x60] sm:$0xff]
    %v57 = vld [vmem:[%s0 + $0x68] sm:$0xff]
    %v58 = vld [vmem:[%s0 + $0x70] sm:$0xff]
    %v59 = vld [vmem:[%s0 + $0x78] sm:$0xff]
    %v60 = vpack.c.bf16 %v52, %v44
    %v61 = vpack.c.bf16 %v53, %v45
    %v62 = vpack.c.bf16 %v54, %v46
    %v63 = vpack.c.bf16 %v55, %v47
    %v64 = vpack.c.bf16 %v56, %v48
    %v65 = vpack.c.bf16 %v57, %v49
    %v66 = vpack.c.bf16 %v58, %v50
    %v67 = vpack.c.bf16 %v59, %v51
    %v68 = vld [vmem:[#allocation2] sm:$0xf]
    %v69 = vld [vmem:[#allocation2 + $0x4] sm:$0xf]
    %v70 = vld [vmem:[#allocation2 + $0x8] sm:$0xf]
    %v71 = vld [vmem:[#allocation2 + $0xc] sm:$0xf]
    %v72 = vld [vmem:[#allocation2 + $0x10] sm:$0xf]
    %v73 = vld [vmem:[#allocation2 + $0x14] sm:$0xf]
    %v74 = vld [vmem:[#allocation2 + $0x18] sm:$0xf]
    %v75 = vld [vmem:[#allocation2 + $0x1c] sm:$0xf]
    %v76 = vld [vmem:[#allocation2 + $0x20] sm:$0xf]
    %v77 = vld [vmem:[#allocation2 + $0x24] sm:$0xf]
    %v78 = vld [vmem:[#allocation2 + $0x28] sm:$0xf]
    %v79 = vld [vmem:[#allocation2 + $0x2c] sm:$0xf]
    %v80 = vld [vmem:[#allocation2 + $0x30] sm:$0xf]
    %v81 = vld [vmem:[#allocation2 + $0x34] sm:$0xf]
    %v82 = vld [vmem:[#allocation2 + $0x38] sm:$0xf]
    %v83 = vld [vmem:[#allocation2 + $0x3c] sm:$0xf]
    %v84 = vld [vmem:[#allocation2 + $0x40] sm:$0xf]
    %v85 = vld [vmem:[#allocation2 + $0x44] sm:$0xf]
    %v86 = vld [vmem:[#allocation2 + $0x48] sm:$0xf]
    %v87 = vld [vmem:[#allocation2 + $0x4c] sm:$0xf]
    %v88 = vld [vmem:[#allocation2 + $0x50] sm:$0xf]
    %v89 = vld [vmem:[#allocation2 + $0x54] sm:$0xf]
    %v90 = vld [vmem:[#allocation2 + $0x58] sm:$0xf]
    %v91 = vld [vmem:[#allocation2 + $0x5c] sm:$0xf]
    %v92 = vld [vmem:[#allocation2 + $0x60] sm:$0xf]
    %v93 = vld [vmem:[#allocation2 + $0x64] sm:$0xf]
    %v94 = vld [vmem:[#allocation2 + $0x68] sm:$0xf]
    %v95 = vld [vmem:[#allocation2 + $0x6c] sm:$0xf]
    %v96 = vld [vmem:[#allocation2 + $0x70] sm:$0xf]
    %v97 = vld [vmem:[#allocation2 + $0x74] sm:$0xf]
    %v98 = vld [vmem:[#allocation2 + $0x78] sm:$0xf]
    %v99 = vld [vmem:[#allocation2 + $0x7c] sm:$0xf]
    %v100 = vld [vmem:[#allocation2 + $0x80] sm:$0xf]
    %v101 = vld [vmem:[#allocation2 + $0x84] sm:$0xf]
    %v102 = vld [vmem:[#allocation2 + $0x88] sm:$0xf]
    %v103 = vld [vmem:[#allocation2 + $0x8c] sm:$0xf]
    %v104 = vld [vmem:[#allocation2 + $0x90] sm:$0xf]
    %v105 = vld [vmem:[#allocation2 + $0x94] sm:$0xf]
    %v106 = vld [vmem:[#allocation2 + $0x98] sm:$0xf]
    %v107 = vld [vmem:[#allocation2 + $0x9c] sm:$0xf]
    %v108 = vld [vmem:[#allocation2 + $0xa0] sm:$0xf]
    %v109 = vld [vmem:[#allocation2 + $0xa4] sm:$0xf]
    %v110 = vld [vmem:[#allocation2 + $0xa8] sm:$0xf]
    %v111 = vld [vmem:[#allocation2 + $0xac] sm:$0xf]
    %v112 = vld [vmem:[#allocation2 + $0xb0] sm:$0xf]
    %v113 = vld [vmem:[#allocation2 + $0xb4] sm:$0xf]
    %v114 = vld [vmem:[#allocation2 + $0xb8] sm:$0xf]
    %v115 = vld [vmem:[#allocation2 + $0xbc] sm:$0xf]
    %v116 = vld [vmem:[#allocation2 + $0xc0] sm:$0xf]
    %v117 = vld [vmem:[#allocation2 + $0xc4] sm:$0xf]
    %v118 = vld [vmem:[#allocation2 + $0xc8] sm:$0xf]
    %v119 = vld [vmem:[#allocation2 + $0xcc] sm:$0xf]
    %v120 = vld [vmem:[#allocation2 + $0xd0] sm:$0xf]
    %v121 = vld [vmem:[#allocation2 + $0xd4] sm:$0xf]
    %v122 = vld [vmem:[#allocation2 + $0xd8] sm:$0xf]
    %v123 = vld [vmem:[#allocation2 + $0xdc] sm:$0xf]
    %v124 = vld [vmem:[#allocation2 + $0xe0] sm:$0xf]
    %v125 = vld [vmem:[#allocation2 + $0xe4] sm:$0xf]
    %v126 = vld [vmem:[#allocation2 + $0xe8] sm:$0xf]
    %v127 = vld [vmem:[#allocation2 + $0xec] sm:$0xf]
    %v128 = vld [vmem:[#allocation2 + $0xf0] sm:$0xf]
    %v129 = vld [vmem:[#allocation2 + $0xf4] sm:$0xf]
    %v130 = vld [vmem:[#allocation2 + $0xf8] sm:$0xf]
    %v131 = vld [vmem:[#allocation2 + $0xfc] sm:$0xf]
    %v132 = vld [vmem:[#allocation2 + $0x100] sm:$0xf]
    %v133 = vld [vmem:[#allocation2 + $0x104] sm:$0xf]
    %v134 = vld [vmem:[#allocation2 + $0x108] sm:$0xf]
    %v135 = vld [vmem:[#allocation2 + $0x10c] sm:$0xf]
    %v136 = vld [vmem:[#allocation2 + $0x110] sm:$0xf]
    %v137 = vld [vmem:[#allocation2 + $0x114] sm:$0xf]
    %v138 = vld [vmem:[#allocation2 + $0x118] sm:$0xf]
    %v139 = vld [vmem:[#allocation2 + $0x11c] sm:$0xf]
    %v140 = vld [vmem:[#allocation2 + $0x120] sm:$0xf]
    %v141 = vld [vmem:[#allocation2 + $0x124] sm:$0xf]
    %v142 = vld [vmem:[#allocation2 + $0x128] sm:$0xf]
    %v143 = vld [vmem:[#allocation2 + $0x12c] sm:$0xf]
    %v144 = vld [vmem:[#allocation2 + $0x130] sm:$0xf]
    %v145 = vld [vmem:[#allocation2 + $0x134] sm:$0xf]
    %v146 = vld [vmem:[#allocation2 + $0x138] sm:$0xf]
    %v147 = vld [vmem:[#allocation2 + $0x13c] sm:$0xf]
    %v148 = vld [vmem:[#allocation2 + $0x140] sm:$0xf]
    %v149 = vld [vmem:[#allocation2 + $0x144] sm:$0xf]
    %v150 = vld [vmem:[#allocation2 + $0x148] sm:$0xf]
    %v151 = vld [vmem:[#allocation2 + $0x14c] sm:$0xf]
    %v152 = vld [vmem:[#allocation2 + $0x150] sm:$0xf]
    %v153 = vld [vmem:[#allocation2 + $0x154] sm:$0xf]
    %v154 = vld [vmem:[#allocation2 + $0x158] sm:$0xf]
    %v155 = vld [vmem:[#allocation2 + $0x15c] sm:$0xf]
    %v156 = vld [vmem:[#allocation2 + $0x160] sm:$0xf]
    %v157 = vld [vmem:[#allocation2 + $0x164] sm:$0xf]
    %v158 = vld [vmem:[#allocation2 + $0x168] sm:$0xf]
    %v159 = vld [vmem:[#allocation2 + $0x16c] sm:$0xf]
    %v160 = vld [vmem:[#allocation2 + $0x170] sm:$0xf]
    %v161 = vld [vmem:[#allocation2 + $0x174] sm:$0xf]
    %v162 = vld [vmem:[#allocation2 + $0x178] sm:$0xf]
    %v163 = vld [vmem:[#allocation2 + $0x17c] sm:$0xf]
    %v164 = vld [vmem:[#allocation2 + $0x180] sm:$0xf]
    %v165 = vld [vmem:[#allocation2 + $0x184] sm:$0xf]
    %v166 = vld [vmem:[#allocation2 + $0x188] sm:$0xf]
    %v167 = vld [vmem:[#allocation2 + $0x18c] sm:$0xf]
    %v168 = vld [vmem:[#allocation2 + $0x190] sm:$0xf]
    %v169 = vld [vmem:[#allocation2 + $0x194] sm:$0xf]
    %v170 = vld [vmem:[#allocation2 + $0x198] sm:$0xf]
    %v171 = vld [vmem:[#allocation2 + $0x19c] sm:$0xf]
    %v172 = vld [vmem:[#allocation2 + $0x1a0] sm:$0xf]
    %v173 = vld [vmem:[#allocation2 + $0x1a4] sm:$0xf]
    %v174 = vld [vmem:[#allocation2 + $0x1a8] sm:$0xf]
    %v175 = vld [vmem:[#allocation2 + $0x1ac] sm:$0xf]
    %v176 = vld [vmem:[#allocation2 + $0x1b0] sm:$0xf]
    %v177 = vld [vmem:[#allocation2 + $0x1b4] sm:$0xf]
    %v178 = vld [vmem:[#allocation2 + $0x1b8] sm:$0xf]
    %v179 = vld [vmem:[#allocation2 + $0x1bc] sm:$0xf]
    %v180 = vld [vmem:[#allocation2 + $0x1c0] sm:$0xf]
    %v181 = vld [vmem:[#allocation2 + $0x1c4] sm:$0xf]
    %v182 = vld [vmem:[#allocation2 + $0x1c8] sm:$0xf]
    %v183 = vld [vmem:[#allocation2 + $0x1cc] sm:$0xf]
    %v184 = vld [vmem:[#allocation2 + $0x1d0] sm:$0xf]
    %v185 = vld [vmem:[#allocation2 + $0x1d4] sm:$0xf]
    %v186 = vld [vmem:[#allocation2 + $0x1d8] sm:$0xf]
    %v187 = vld [vmem:[#allocation2 + $0x1dc] sm:$0xf]
    %v188 = vld [vmem:[#allocation2 + $0x1e0] sm:$0xf]
    %v189 = vld [vmem:[#allocation2 + $0x1e4] sm:$0xf]
    %v190 = vld [vmem:[#allocation2 + $0x1e8] sm:$0xf]
    %v191 = vld [vmem:[#allocation2 + $0x1ec] sm:$0xf]
    %v192 = vld [vmem:[#allocation2 + $0x1f0] sm:$0xf]
    %v193 = vld [vmem:[#allocation2 + $0x1f4] sm:$0xf]
    %v194 = vld [vmem:[#allocation2 + $0x1f8] sm:$0xf]
    %v195 = vld [vmem:[#allocation2 + $0x1fc] sm:$0xf]
    %v196 = vld [vmem:[#allocation4] sm:$0x1]
    %v198 = vperm.slane %v196, 0
    %v328 = vunpack.c.l.b16 %v68
    %v329 = vunpack.c.l.b16 %v69
    %v330 = vunpack.c.l.b16 %v70
    %v331 = vunpack.c.l.b16 %v71
    %v332 = vunpack.c.l.b16 %v72
    %v333 = vunpack.c.l.b16 %v73
    %v334 = vunpack.c.l.b16 %v74
    %v335 = vunpack.c.l.b16 %v75
    %v336 = vunpack.c.l.b16 %v76
    %v337 = vunpack.c.l.b16 %v77
    %v338 = vunpack.c.l.b16 %v78
    %v339 = vunpack.c.l.b16 %v79
    %v340 = vunpack.c.l.b16 %v80
    %v341 = vunpack.c.l.b16 %v81
    %v342 = vunpack.c.l.b16 %v82
    %v343 = vunpack.c.l.b16 %v83
    %v344 = vunpack.c.l.b16 %v84
    %v345 = vunpack.c.l.b16 %v85
    %v346 = vunpack.c.l.b16 %v86
    %v347 = vunpack.c.l.b16 %v87
    %v348 = vunpack.c.l.b16 %v88
    %v349 = vunpack.c.l.b16 %v89
    %v350 = vunpack.c.l.b16 %v90
    %v351 = vunpack.c.l.b16 %v91
    %v352 = vunpack.c.l.b16 %v92
    %v353 = vunpack.c.l.b16 %v93
    %v354 = vunpack.c.l.b16 %v94
    %v355 = vunpack.c.l.b16 %v95
    %v356 = vunpack.c.l.b16 %v96
    %v357 = vunpack.c.l.b16 %v97
    %v358 = vunpack.c.l.b16 %v98
    %v359 = vunpack.c.l.b16 %v99
    %v360 = vunpack.c.l.b16 %v100
    %v361 = vunpack.c.l.b16 %v101
    %v362 = vunpack.c.l.b16 %v102
    %v363 = vunpack.c.l.b16 %v103
    %v364 = vunpack.c.l.b16 %v104
    %v365 = vunpack.c.l.b16 %v105
    %v366 = vunpack.c.l.b16 %v106
    %v367 = vunpack.c.l.b16 %v107
    %v368 = vunpack.c.l.b16 %v108
    %v369 = vunpack.c.l.b16 %v109
    %v370 = vunpack.c.l.b16 %v110
    %v371 = vunpack.c.l.b16 %v111
    %v372 = vunpack.c.l.b16 %v112
    %v373 = vunpack.c.l.b16 %v113
    %v374 = vunpack.c.l.b16 %v114
    %v375 = vunpack.c.l.b16 %v115
    %v376 = vunpack.c.l.b16 %v116
    %v377 = vunpack.c.l.b16 %v117
    %v378 = vunpack.c.l.b16 %v118
    %v379 = vunpack.c.l.b16 %v119
    %v380 = vunpack.c.l.b16 %v120
    %v381 = vunpack.c.l.b16 %v121
    %v382 = vunpack.c.l.b16 %v122
    %v383 = vunpack.c.l.b16 %v123
    %v384 = vunpack.c.l.b16 %v124
    %v385 = vunpack.c.l.b16 %v125
    %v386 = vunpack.c.l.b16 %v126
    %v387 = vunpack.c.l.b16 %v127
    %v388 = vunpack.c.l.b16 %v128
    %v389 = vunpack.c.l.b16 %v129
    %v390 = vunpack.c.l.b16 %v130
    %v391 = vunpack.c.l.b16 %v131
    %v392 = vunpack.c.l.b16 %v132
    %v393 = vunpack.c.l.b16 %v133
    %v394 = vunpack.c.l.b16 %v134
    %v395 = vunpack.c.l.b16 %v135
    %v396 = vunpack.c.l.b16 %v136
    %v397 = vunpack.c.l.b16 %v137
    %v398 = vunpack.c.l.b16 %v138
    %v399 = vunpack.c.l.b16 %v139
    %v400 = vunpack.c.l.b16 %v140
    %v401 = vunpack.c.l.b16 %v141
    %v402 = vunpack.c.l.b16 %v142
    %v403 = vunpack.c.l.b16 %v143
    %v404 = vunpack.c.l.b16 %v144
    %v405 = vunpack.c.l.b16 %v145
    %v406 = vunpack.c.l.b16 %v146
    %v407 = vunpack.c.l.b16 %v147
    %v408 = vunpack.c.l.b16 %v148
    %v409 = vunpack.c.l.b16 %v149
    %v410 = vunpack.c.l.b16 %v150
    %v411 = vunpack.c.l.b16 %v151
    %v412 = vunpack.c.l.b16 %v152
    %v413 = vunpack.c.l.b16 %v153
    %v414 = vunpack.c.l.b16 %v154
    %v415 = vunpack.c.l.b16 %v155
    %v416 = vunpack.c.l.b16 %v156
    %v417 = vunpack.c.l.b16 %v157
    %v418 = vunpack.c.l.b16 %v158
    %v419 = vunpack.c.l.b16 %v159
    %v420 = vunpack.c.l.b16 %v160
    %v421 = vunpack.c.l.b16 %v161
    %v422 = vunpack.c.l.b16 %v162
    %v423 = vunpack.c.l.b16 %v163
    %v424 = vunpack.c.l.b16 %v164
    %v425 = vunpack.c.l.b16 %v165
    %v426 = vunpack.c.l.b16 %v166
    %v427 = vunpack.c.l.b16 %v167
    %v428 = vunpack.c.l.b16 %v168
    %v429 = vunpack.c.l.b16 %v169
    %v430 = vunpack.c.l.b16 %v170
    %v431 = vunpack.c.l.b16 %v171
    %v432 = vunpack.c.l.b16 %v172
    %v433 = vunpack.c.l.b16 %v173
    %v434 = vunpack.c.l.b16 %v174
    %v435 = vunpack.c.l.b16 %v175
    %v436 = vunpack.c.l.b16 %v176
    %v437 = vunpack.c.l.b16 %v177
    %v438 = vunpack.c.l.b16 %v178
    %v439 = vunpack.c.l.b16 %v179
    %v440 = vunpack.c.l.b16 %v180
    %v441 = vunpack.c.l.b16 %v181
    %v442 = vunpack.c.l.b16 %v182
    %v443 = vunpack.c.l.b16 %v183
    %v444 = vunpack.c.l.b16 %v184
    %v445 = vunpack.c.l.b16 %v185
    %v446 = vunpack.c.l.b16 %v186
    %v447 = vunpack.c.l.b16 %v187
    %v448 = vunpack.c.l.b16 %v188
    %v449 = vunpack.c.l.b16 %v189
    %v450 = vunpack.c.l.b16 %v190
    %v451 = vunpack.c.l.b16 %v191
    %v452 = vunpack.c.l.b16 %v192
    %v453 = vunpack.c.l.b16 %v193
    %v454 = vunpack.c.l.b16 %v194
    %v455 = vunpack.c.l.b16 %v195
    %v456 = vpack.c.b16 %v329, %v328
    %v457 = vpack.c.b16 %v331, %v330
    %v458 = vpack.c.b16 %v333, %v332
    %v459 = vpack.c.b16 %v335, %v334
    %v460 = vpack.c.b16 %v337, %v336
    %v461 = vpack.c.b16 %v339, %v338
    %v462 = vpack.c.b16 %v341, %v340
    %v463 = vpack.c.b16 %v343, %v342
    %v464 = vpack.c.b16 %v345, %v344
    %v465 = vpack.c.b16 %v347, %v346
    %v466 = vpack.c.b16 %v349, %v348
    %v467 = vpack.c.b16 %v351, %v350
    %v468 = vpack.c.b16 %v353, %v352
    %v469 = vpack.c.b16 %v355, %v354
    %v470 = vpack.c.b16 %v357, %v356
    %v471 = vpack.c.b16 %v359, %v358
    %v472 = vpack.c.b16 %v361, %v360
    %v473 = vpack.c.b16 %v363, %v362
    %v474 = vpack.c.b16 %v365, %v364
    %v475 = vpack.c.b16 %v367, %v366
    %v476 = vpack.c.b16 %v369, %v368
    %v477 = vpack.c.b16 %v371, %v370
    %v478 = vpack.c.b16 %v373, %v372
    %v479 = vpack.c.b16 %v375, %v374
    %v480 = vpack.c.b16 %v377, %v376
    %v481 = vpack.c.b16 %v379, %v378
    %v482 = vpack.c.b16 %v381, %v380
    %v483 = vpack.c.b16 %v383, %v382
    %v484 = vpack.c.b16 %v385, %v384
    %v485 = vpack.c.b16 %v387, %v386
    %v486 = vpack.c.b16 %v389, %v388
    %v487 = vpack.c.b16 %v391, %v390
    %v488 = vpack.c.b16 %v393, %v392
    %v489 = vpack.c.b16 %v395, %v394
    %v490 = vpack.c.b16 %v397, %v396
    %v491 = vpack.c.b16 %v399, %v398
    %v492 = vpack.c.b16 %v401, %v400
    %v493 = vpack.c.b16 %v403, %v402
    %v494 = vpack.c.b16 %v405, %v404
    %v495 = vpack.c.b16 %v407, %v406
    %v496 = vpack.c.b16 %v409, %v408
    %v497 = vpack.c.b16 %v411, %v410
    %v498 = vpack.c.b16 %v413, %v412
    %v499 = vpack.c.b16 %v415, %v414
    %v500 = vpack.c.b16 %v417, %v416
    %v501 = vpack.c.b16 %v419, %v418
    %v502 = vpack.c.b16 %v421, %v420
    %v503 = vpack.c.b16 %v423, %v422
    %v504 = vpack.c.b16 %v425, %v424
    %v505 = vpack.c.b16 %v427, %v426
    %v506 = vpack.c.b16 %v429, %v428
    %v507 = vpack.c.b16 %v431, %v430
    %v508 = vpack.c.b16 %v433, %v432
    %v509 = vpack.c.b16 %v435, %v434
    %v510 = vpack.c.b16 %v437, %v436
    %v511 = vpack.c.b16 %v439, %v438
    %v512 = vpack.c.b16 %v441, %v440
    %v513 = vpack.c.b16 %v443, %v442
    %v514 = vpack.c.b16 %v445, %v444
    %v515 = vpack.c.b16 %v447, %v446
    %v516 = vpack.c.b16 %v449, %v448
    %v517 = vpack.c.b16 %v451, %v450
    %v518 = vpack.c.b16 %v453, %v452
    %v519 = vpack.c.b16 %v455, %v454
    %584 = vmatpush.bf16.msra.mxu0 %v463
    %585 = vmatpush.bf16.msra.mxu0 %v462
    %586 = vmatpush.bf16.msra.mxu0 %v461
    %587 = vmatpush.bf16.msra.mxu0 %v460
    %588 = vmatpush.bf16.msra.mxu0 %v459
    %589 = vmatpush.bf16.msra.mxu0 %v458
    %590 = vmatpush.bf16.msra.mxu0 %v457
    %591 = vmatpush.bf16.msra.mxu0 %v456
    %592 = vmatmul.bf16.gmra.mxu0 %v60
    %v593 = vpop.f32.mrf.mxu0
    %v594 = vadd.f32 %v198, %v593
    %v595 = vpop.f32.mrf.mxu0
    %v596 = vadd.f32 %v198, %v595
    %597 = vdwg.mxu0
    %598 = vmatpush.bf16.msra.mxu0 %v471
    %599 = vmatpush.bf16.msra.mxu0 %v470
    %600 = vmatpush.bf16.msra.mxu0 %v469
    %601 = vmatpush.bf16.msra.mxu0 %v468
    %602 = vmatpush.bf16.msra.mxu0 %v467
    %603 = vmatpush.bf16.msra.mxu0 %v466
    %604 = vmatpush.bf16.msra.mxu0 %v465
    %605 = vmatpush.bf16.msra.mxu0 %v464
    %606 = vmatmul.bf16.gmra.mxu0 %v61
    %v607 = vpop.f32.mrf.mxu0
    %v608 = vadd.f32 %v594, %v607
    %v609 = vpop.f32.mrf.mxu0
    %v610 = vadd.f32 %v596, %v609
    %611 = vdwg.mxu0
    %612 = vmatpush.bf16.msra.mxu0 %v479
    %613 = vmatpush.bf16.msra.mxu0 %v478
    %614 = vmatpush.bf16.msra.mxu0 %v477
    %615 = vmatpush.bf16.msra.mxu0 %v476
    %616 = vmatpush.bf16.msra.mxu0 %v475
    %617 = vmatpush.bf16.msra.mxu0 %v474
    %618 = vmatpush.bf16.msra.mxu0 %v473
    %619 = vmatpush.bf16.msra.mxu0 %v472
    %620 = vmatmul.bf16.gmra.mxu0 %v62
    %v621 = vpop.f32.mrf.mxu0
    %v622 = vadd.f32 %v608, %v621
    %v623 = vpop.f32.mrf.mxu0
    %v624 = vadd.f32 %v610, %v623
    %625 = vdwg.mxu0
    %626 = vmatpush.bf16.msra.mxu0 %v487
    %627 = vmatpush.bf16.msra.mxu0 %v486
    %628 = vmatpush.bf16.msra.mxu0 %v485
    %629 = vmatpush.bf16.msra.mxu0 %v484
    %630 = vmatpush.bf16.msra.mxu0 %v483
    %631 = vmatpush.bf16.msra.mxu0 %v482
    %632 = vmatpush.bf16.msra.mxu0 %v481
    %633 = vmatpush.bf16.msra.mxu0 %v480
    %634 = vmatmul.bf16.gmra.mxu0 %v63
    %v635 = vpop.f32.mrf.mxu0
    %v636 = vadd.f32 %v622, %v635
    %v637 = vpop.f32.mrf.mxu0
    %v638 = vadd.f32 %v624, %v637
    %639 = vdwg.mxu0
    %640 = vmatpush.bf16.msra.mxu0 %v495
    %641 = vmatpush.bf16.msra.mxu0 %v494
    %642 = vmatpush.bf16.msra.mxu0 %v493
    %643 = vmatpush.bf16.msra.mxu0 %v492
    %644 = vmatpush.bf16.msra.mxu0 %v491
    %645 = vmatpush.bf16.msra.mxu0 %v490
    %646 = vmatpush.bf16.msra.mxu0 %v489
    %647 = vmatpush.bf16.msra.mxu0 %v488
    %648 = vmatmul.bf16.gmra.mxu0 %v64
    %v649 = vpop.f32.mrf.mxu0
    %v650 = vadd.f32 %v636, %v649
    %v651 = vpop.f32.mrf.mxu0
    %v652 = vadd.f32 %v638, %v651
    %653 = vdwg.mxu0
    %654 = vmatpush.bf16.msra.mxu0 %v503
    %655 = vmatpush.bf16.msra.mxu0 %v502
    %656 = vmatpush.bf16.msra.mxu0 %v501
    %657 = vmatpush.bf16.msra.mxu0 %v500
    %658 = vmatpush.bf16.msra.mxu0 %v499
    %659 = vmatpush.bf16.msra.mxu0 %v498
    %660 = vmatpush.bf16.msra.mxu0 %v497
    %661 = vmatpush.bf16.msra.mxu0 %v496
    %662 = vmatmul.bf16.gmra.mxu0 %v65
    %v663 = vpop.f32.mrf.mxu0
    %v664 = vadd.f32 %v650, %v663
    %v665 = vpop.f32.mrf.mxu0
    %v666 = vadd.f32 %v652, %v665
    %667 = vdwg.mxu0
    %668 = vmatpush.bf16.msra.mxu0 %v511
    %669 = vmatpush.bf16.msra.mxu0 %v510
    %670 = vmatpush.bf16.msra.mxu0 %v509
    %671 = vmatpush.bf16.msra.mxu0 %v508
    %672 = vmatpush.bf16.msra.mxu0 %v507
    %673 = vmatpush.bf16.msra.mxu0 %v506
    %674 = vmatpush.bf16.msra.mxu0 %v505
    %675 = vmatpush.bf16.msra.mxu0 %v504
    %676 = vmatmul.bf16.gmra.mxu0 %v66
    %v677 = vpop.f32.mrf.mxu0
    %v678 = vadd.f32 %v664, %v677
    %v679 = vpop.f32.mrf.mxu0
    %v680 = vadd.f32 %v666, %v679
    %681 = vdwg.mxu0
    %682 = vmatpush.bf16.msra.mxu0 %v519
    %683 = vmatpush.bf16.msra.mxu0 %v518
    %684 = vmatpush.bf16.msra.mxu0 %v517
    %685 = vmatpush.bf16.msra.mxu0 %v516
    %686 = vmatpush.bf16.msra.mxu0 %v515
    %687 = vmatpush.bf16.msra.mxu0 %v514
    %688 = vmatpush.bf16.msra.mxu0 %v513
    %689 = vmatpush.bf16.msra.mxu0 %v512
    %690 = vmatmul.bf16.gmra.mxu0 %v67
    %v691 = vpop.f32.mrf.mxu0
    %v692 = vadd.f32 %v678, %v691
    %v693 = vpop.f32.mrf.mxu0
    %v694 = vadd.f32 %v680, %v693
    %695 = vdwg.mxu0
    %v696 = vpack.c.bf16 %v692, %v692
    %v697 = vpack.c.bf16 %v694, %v694
    %698 = vst [vmem:[%s3] sm:$0xf] %v696
    %699 = vst [vmem:[%s3 + $0x4] sm:$0xf] %v697
    // Predicated region
    $region22: #{maskrcnn_heads_forward.2} parent=1 // pred_check
      _
    $region23: #{maskrcnn_heads_forward.2} parent=1 // pred_check_branch
      %701 = sbr.rel (0) target = $region25
    $region24: #{maskrcnn_heads_forward.2} parent=1 // pred_region
      _
    $region25: #{maskrcnn_heads_forward.2} parent=1 // pred_fallthru
      _
    // Predicated region
    $region26: #{maskrcnn_heads_forward.2} parent=1 // pred_check
      _
    $region27: #{maskrcnn_heads_forward.2} parent=1 // pred_check_branch
      %703 = sbr.rel (0) target = $region29
    $region28: #{maskrcnn_heads_forward.2} parent=1 // pred_region
      _
    $region29: #{maskrcnn_heads_forward.2} parent=1 // pred_fallthru
      _
    %704 = vsyncpa [#allocation3], 1
    %705 = vsyncpa [#allocation5], 1

// kernel: maskrcnn_heads_forward.3
$region0: #{maskrcnn_heads_forward.3}
  #allocation0 [shape = 'u32[]', space=smem, size = 0x4, offset = 0x4, fixed_abs, tag = 'smem constant byte address 0x4 - core index']
  #allocation1 [shape = 'u32[72,128]{1,0:T(1,128)}', space=vmem, size = 0x9000, scoped, tag = 'internal scratch']
  %s0 = inlined_call_operand.vmem [shape: f32[800,256], index: 0, kind: input, shape index: {}]
  %s1 = inlined_call_operand.vmem [shape: bf16[256,1024], index: 1, kind: input, shape index: {}]
  %s2 = inlined_call_operand.vmem [shape: f32[1,1024], index: 2, kind: input, shape index: {}]
  %s3 = inlined_call_operand.vmem [shape: bf16[1024,128], index: 3, kind: input, shape index: {}]
  %s4 = inlined_call_operand.vmem [shape: f32[1,128], index: 4, kind: input, shape index: {}]
  %s5 = inlined_call_operand.vmem [shape: bf16[800,128], index: 5, kind: output, shape index: {}]
  %s6 = sld [smem:[#allocation0]]
  $region53: #{maskrcnn_heads_forward.3} parent=0
    _
  %s8 = ssub.s32 1, %s6
  %s9 = scalar_select 0, %s8, %s6
  loop: start=0, step=1, limit=4
  $region2: #{maskrcnn_heads_forward.3} parent=0 // loop_pre_header
    _
  $region3: #{maskrcnn_heads_forward.3} parent=0 // loop_header
    %s11 = sphi 0, %s15
    %p12 = scmp.ge.s32.totalorder %s11, 4
    %s21 = sphi 0, %s23
    %s24 = sphi 0, %s21
    %s25 = sphi 0, %s24
    %s41 = sphi 0, %s25
    %s45 = sphi 0, %s45
    %s47 = sphi 0, %s45
    %s48 = sphi 0, %s47
    %s62 = sphi 0, %s48
    %s66 = sphi 0, %s66
    %s68 = sphi 0, %s66
    %s69 = sphi 0, %s68
    %s83 = sphi 0, %s69
    %s87 = sphi 0, %s87
    %s89 = sphi 0, %s87
    %s90 = sphi 0, %s89
    %s104 = sphi 0, %s90
    %s108 = sphi 0, %s108
    %s110 = sphi 0, %s108
    %s111 = sphi 0, %s110
    %s125 = sphi 0, %s111
    %s131 = sphi 0, %s133
    %s134 = sphi 0, %s131
    %s135 = sphi 0, %s134
    %s151 = sphi 0, %s135
  $region4: #{maskrcnn_heads_forward.3} parent=0 // loop_header_branch
    %14 = sbr.rel (%p12) target = $region8
  $region5: #{maskrcnn_heads_forward.3} parent=0 // loop_body
    %s16 = ssub.s32 %s11, 1
    %s17 = ssub.s32 %s11, 2
    %s18 = sadd.s32 %s11, 1
    %s19 = ssub.s32 %s11, %s18
    %p20 = scmp.eq.s32.totalorder %s19, 0
    %s22 = sadd.s32 %s21, 1
    %s23 = scalar_select %p20, %s21, %s22
    %p26 = pneg %p20
    %p27 = scmp.eq.s32.totalorder %s11, 1
    %p28 = por %p26, %p27
    %p29 = scmp.ne.s32.totalorder %s21, %s24
    %p30 = scmp.eq.s32.totalorder %s11, 0
    %p31 = por %p29, %p30
    %p32 = scmp.ne.s32.totalorder %s21, %s24
    %p33 = scmp.eq.s32.totalorder %s16, 1
    %p34 = por %p32, %p33
    %p35 = scmp.ne.s32.totalorder %s24, %s25
    %p36 = scmp.eq.s32.totalorder %s16, 0
    %p37 = por %p35, %p36
    %p38 = scmp.ne.s32.totalorder %s24, %s25
    %p39 = scmp.eq.s32.totalorder %s17, 1
    %p40 = por %p38, %p39
    %p42 = scmp.ne.s32.totalorder %s25, %s41
    %p43 = scmp.eq.s32.totalorder %s17, 0
    %p44 = por %p42, %p43
    %s46 = sadd.s32 %s45, 1
    %p49 = scmp.eq.s32.totalorder %s11, 1
    %p50 = scmp.ne.s32.totalorder %s45, %s47
    %p51 = scmp.eq.s32.totalorder %s11, 0
    %p52 = por %p50, %p51
    %p53 = scmp.ne.s32.totalorder %s45, %s47
    %p54 = scmp.eq.s32.totalorder %s16, 1
    %p55 = por %p53, %p54
    %p56 = scmp.ne.s32.totalorder %s47, %s48
    %p57 = scmp.eq.s32.totalorder %s16, 0
    %p58 = por %p56, %p57
    %p59 = scmp.ne.s32.totalorder %s47, %s48
    %p60 = scmp.eq.s32.totalorder %s17, 1
    %p61 = por %p59, %p60
    %p63 = scmp.ne.s32.totalorder %s48, %s62
    %p64 = scmp.eq.s32.totalorder %s17, 0
    %p65 = por %p63, %p64
    %s67 = sadd.s32 %s66, 1
    %p70 = scmp.eq.s32.totalorder %s11, 1
    %p71 = scmp.ne.s32.totalorder %s66, %s68
    %p72 = scmp.eq.s32.totalorder %s11, 0
    %p73 = por %p71, %p72
    %p74 = scmp.ne.s32.totalorder %s66, %s68
    %p75 = scmp.eq.s32.totalorder %s16, 1
    %p76 = por %p74, %p75
    %p77 = scmp.ne.s32.totalorder %s68, %s69
    %p78 = scmp.eq.s32.totalorder %s16, 0
    %p79 = por %p77, %p78
    %p80 = scmp.ne.s32.totalorder %s68, %s69
    %p81 = scmp.eq.s32.totalorder %s17, 1
    %p82 = por %p80, %p81
    %p84 = scmp.ne.s32.totalorder %s69, %s83
    %p85 = scmp.eq.s32.totalorder %s17, 0
    %p86 = por %p84, %p85
    %s88 = sadd.s32 %s87, 1
    %p91 = scmp.eq.s32.totalorder %s11, 1
    %p92 = scmp.ne.s32.totalorder %s87, %s89
    %p93 = scmp.eq.s32.totalorder %s11, 0
    %p94 = por %p92, %p93
    %p95 = scmp.ne.s32.totalorder %s87, %s89
    %p96 = scmp.eq.s32.totalorder %s16, 1
    %p97 = por %p95, %p96
    %p98 = scmp.ne.s32.totalorder %s89, %s90
    %p99 = scmp.eq.s32.totalorder %s16, 0
    %p100 = por %p98, %p99
    %p101 = scmp.ne.s32.totalorder %s89, %s90
    %p102 = scmp.eq.s32.totalorder %s17, 1
    %p103 = por %p101, %p102
    %p105 = scmp.ne.s32.totalorder %s90, %s104
    %p106 = scmp.eq.s32.totalorder %s17, 0
    %p107 = por %p105, %p106
    %s109 = sadd.s32 %s108, 1
    %p112 = scmp.eq.s32.totalorder %s11, 1
    %p113 = scmp.ne.s32.totalorder %s108, %s110
    %p114 = scmp.eq.s32.totalorder %s11, 0
    %p115 = por %p113, %p114
    %p116 = scmp.ne.s32.totalorder %s108, %s110
    %p117 = scmp.eq.s32.totalorder %s16, 1
    %p118 = por %p116, %p117
    %p119 = scmp.ne.s32.totalorder %s110, %s111
    %p120 = scmp.eq.s32.totalorder %s16, 0
    %p121 = por %p119, %p120
    %p122 = scmp.ne.s32.totalorder %s110, %s111
    %p123 = scmp.eq.s32.totalorder %s17, 1
    %p124 = por %p122, %p123
    %p126 = scmp.ne.s32.totalorder %s111, %s125
    %p127 = scmp.eq.s32.totalorder %s17, 0
    %p128 = por %p126, %p127
    %s129 = ssub.s32 %s11, %s18
    %p130 = scmp.eq.s32.totalorder %s129, 0
    %s132 = sadd.s32 %s131, 1
    %s133 = scalar_select %p130, %s131, %s132
    %p136 = pneg %p130
    %p137 = scmp.eq.s32.totalorder %s11, 1
    %p138 = por %p136, %p137
    %p139 = scmp.ne.s32.totalorder %s131, %s134
    %p140 = scmp.eq.s32.totalorder %s11, 0
    %p141 = por %p139, %p140
    %p142 = scmp.ne.s32.totalorder %s131, %s134
    %p143 = scmp.eq.s32.totalorder %s16, 1
    %p144 = por %p142, %p143
    %p145 = scmp.ne.s32.totalorder %s134, %s135
    %p146 = scmp.eq.s32.totalorder %s16, 0
    %p147 = por %p145, %p146
    %p148 = scmp.ne.s32.totalorder %s134, %s135
    %p149 = scmp.eq.s32.totalorder %s17, 1
    %p150 = por %p148, %p149
    %p152 = scmp.ne.s32.totalorder %s135, %s151
    %p153 = scmp.eq.s32.totalorder %s17, 0
    %p154 = por %p152, %p153
    %p155 = scmp.le.s32.totalorder 1, %s11
    %p156 = scmp.lt.s32.totalorder %s11, 3
    %p157 = pnand %p155, %p156
    %p158 = pneg %p157
    // Predicated region
    $region9: #{maskrcnn_heads_forward.3} parent=5 // pred_check
      _
    $region10: #{maskrcnn_heads_forward.3} parent=5 // pred_check_branch
      %160 = sbr.rel (%p157) target = $region12
    $region11: #{maskrcnn_heads_forward.3} parent=5 // pred_region
      %s161 = ssub.s32 %s11, 1
      // Predicated region
      $region13: #{maskrcnn_heads_forward.3} parent=11 // pred_check
        %p162 = pneg %p58
      $region14: #{maskrcnn_heads_forward.3} parent=11 // pred_check_branch
        %164 = sbr.rel (%p162) target = $region16
      $region15: #{maskrcnn_heads_forward.3} parent=11 // pred_region
        _
      $region16: #{maskrcnn_heads_forward.3} parent=11 // pred_fallthru
        _
      // Predicated region
      $region17: #{maskrcnn_heads_forward.3} parent=11 // pred_check
        %p165 = pneg %p79
      $region18: #{maskrcnn_heads_forward.3} parent=11 // pred_check_branch
        %167 = sbr.rel (%p165) target = $region20
      $region19: #{maskrcnn_heads_forward.3} parent=11 // pred_region
        _
      $region20: #{maskrcnn_heads_forward.3} parent=11 // pred_fallthru
        _
      // Predicated region
      $region21: #{maskrcnn_heads_forward.3} parent=11 // pred_check
        %p168 = pneg %p100
      $region22: #{maskrcnn_heads_forward.3} parent=11 // pred_check_branch
        %170 = sbr.rel (%p168) target = $region24
      $region23: #{maskrcnn_heads_forward.3} parent=11 // pred_region
        _
      $region24: #{maskrcnn_heads_forward.3} parent=11 // pred_fallthru
        _
      // Predicated region
      $region25: #{maskrcnn_heads_forward.3} parent=11 // pred_check
        %p171 = pneg %p121
      $region26: #{maskrcnn_heads_forward.3} parent=11 // pred_check_branch
        %173 = sbr.rel (%p171) target = $region28
      $region27: #{maskrcnn_heads_forward.3} parent=11 // pred_region
        _
      $region28: #{maskrcnn_heads_forward.3} parent=11 // pred_fallthru
        _
    $region12: #{maskrcnn_heads_forward.3} parent=5 // pred_fallthru
      _
    %p174 = scmp.lt.s32.totalorder %s11, 2
    // Predicated region
    $region29: #{maskrcnn_heads_forward.3} parent=5 // pred_check
      %p175 = pneg %p174
    $region30: #{maskrcnn_heads_forward.3} parent=5 // pred_check_branch
      %177 = sbr.rel (%p175) target = $region32
    $region31: #{maskrcnn_heads_forward.3} parent=5 // pred_region
      // Predicated region
      $region33: #{maskrcnn_heads_forward.3} parent=31 // pred_check
        %p178 = pneg %p31
      $region34: #{maskrcnn_heads_forward.3} parent=31 // pred_check_branch
        %180 = sbr.rel (%p178) target = $region36
      $region35: #{maskrcnn_heads_forward.3} parent=31 // pred_region
        %s181 = smul.u32 50, %s11
        %p182 = scmp.lt.s32.totalorder %s181, 99
        %s183 = scalar_select %p182, %s181, 99
        %s184 = smul.addr %s183, 2
        %s185 = smul.addr %s184, 8
        %s186 = scalar_lea.vmem %s0, %s185
        %s187 = smul.u32 50, %s11
      $region36: #{maskrcnn_heads_forward.3} parent=31 // pred_fallthru
        _
    $region32: #{maskrcnn_heads_forward.3} parent=5 // pred_fallthru
      _
    %p188 = scmp.le.s32.totalorder 1, %s11
    %p189 = scmp.lt.s32.totalorder %s11, 3
    %p190 = pnand %p188, %p189
    %p191 = pneg %p190
    // Predicated region
    $region37: #{maskrcnn_heads_forward.3} parent=5 // pred_check
      _
    $region38: #{maskrcnn_heads_forward.3} parent=5 // pred_check_branch
      %193 = sbr.rel (%p190) target = $region40
    $region39: #{maskrcnn_heads_forward.3} parent=5 // pred_region
      %s194 = ssub.s32 %s11, 1
      %s195 = smul.u32 50, %s16
      %p196 = scmp.lt.s32.totalorder %s195, 99
      %s197 = scalar_select %p196, %s195, 99
      %s198 = smul.addr %s197, 2
      %s199 = smul.addr %s198, 8
      %s200 = scalar_lea.vmem %s0, %s199
      %p201 = pneg %p37
      %p202 = pneg %p34
      %p203 = pneg %p58
      %p204 = pneg %p55
      %p205 = pneg %p79
      %p206 = pneg %p76
      %p207 = pneg %p100
      %p208 = pneg %p97
      %p209 = pneg %p121
      %p210 = pneg %p118
      %p211 = pneg %p147
      %p212 = pneg %p144
      %s213 = smul.u32 50, %s16
      %p214 = scmp.lt.s32.totalorder %s213, 99
      %s215 = scalar_select %p214, %s213, 99
      %s216 = smul.addr %s215, 4
      %s217 = scalar_lea.vmem %s5, %s216
      %s218 = smul.u32 50, %s16
      %p219 = scmp.lt.s32.totalorder %s218, 99
      %s220 = scalar_select %p219, %s218, 99
      %s221 = smul.addr %s220, 2
      %s222 = smul.addr %s221, 8
      %s223 = scalar_lea.vmem %s0, %s222
      %s224 = smul.u32 50, %s16
      %s225 = smul.u32 50, %s16
      %p226 = scmp.lt.s32.totalorder %s225, 99
      %s227 = scalar_select %p226, %s225, 99
      %s228 = smul.addr %s227, 4
      %s229 = scalar_lea.vmem %s5, %s228
      %s230 = smul.u32 50, %s16
      %v231 = vld [vmem:[%s223] sm:$0xff]
      %v232 = vld [vmem:[%s223 + $0x8] sm:$0xff]
      %v233 = vld [vmem:[%s223 + $0x10] sm:$0xff]
      %v234 = vld [vmem:[%s223 + $0x18] sm:$0xff]
      %v235 = vld [vmem:[%s223 + $0x20] sm:$0xff]
      %v236 = vld [vmem:[%s223 + $0x28] sm:$0xff]
      %v237 = vld [vmem:[%s223 + $0x30] sm:$0xff]
      %v238 = vld [vmem:[%s223 + $0x38] sm:$0xff]
      %v239 = vld [vmem:[%s223 + $0x40] sm:$0xff]
      %v240 = vld [vmem:[%s223 + $0x48] sm:$0xff]
      %v241 = vld [vmem:[%s223 + $0x50] sm:$0xff]
      %v242 = vld [vmem:[%s223 + $0x58] sm:$0xff]
      %v243 = vld [vmem:[%s223 + $0x60] sm:$0xff]
      %v244 = vld [vmem:[%s223 + $0x68] sm:$0xff]
      %v245 = vld [vmem:[%s223 + $0x70] sm:$0xff]
      %v246 = vld [vmem:[%s223 + $0x78] sm:$0xff]
      %v247 = vld [vmem:[%s223 + $0x80] sm:$0xff]
      %v248 = vld [vmem:[%s223 + $0x88] sm:$0xff]
      %v249 = vld [vmem:[%s223 + $0x90] sm:$0xff]
      %v250 = vld [vmem:[%s223 + $0x98] sm:$0xff]
      %v251 = vld [vmem:[%s223 + $0xa0] sm:$0xff]
      %v252 = vld [vmem:[%s223 + $0xa8] sm:$0xff]
      %v253 = vld [vmem:[%s223 + $0xb0] sm:$0xff]
      %v254 = vld [vmem:[%s223 + $0xb8] sm:$0xff]
      %v255 = vld [vmem:[%s223 + $0xc0] sm:$0xff]
      %v256 = vld [vmem:[%s223 + $0xc8] sm:$0xff]
      %v257 = vld [vmem:[%s223 + $0xd0] sm:$0xff]
      %v258 = vld [vmem:[%s223 + $0xd8] sm:$0xff]
      %v259 = vld [vmem:[%s223 + $0xe0] sm:$0xff]
      %v260 = vld [vmem:[%s223 + $0xe8] sm:$0xff]
      %v261 = vld [vmem:[%s223 + $0xf0] sm:$0xff]
      %v262 = vld [vmem:[%s223 + $0xf8] sm:$0xff]
      %v263 = vld [vmem:[%s223 + $0x100] sm:$0xff]
      %v264 = vld [vmem:[%s223 + $0x108] sm:$0xff]
      %v265 = vld [vmem:[%s223 + $0x110] sm:$0xff]
      %v266 = vld [vmem:[%s223 + $0x118] sm:$0xff]
      %v267 = vld [vmem:[%s223 + $0x120] sm:$0xff]
      %v268 = vld [vmem:[%s223 + $0x128] sm:$0xff]
      %v269 = vld [vmem:[%s223 + $0x130] sm:$0xff]
      %v270 = vld [vmem:[%s223 + $0x138] sm:$0xff]
      %v271 = vld [vmem:[%s223 + $0x140] sm:$0xff]
      %v272 = vld [vmem:[%s223 + $0x148] sm:$0xff]
      %v273 = vld [vmem:[%s223 + $0x150] sm:$0xff]
      %v274 = vld [vmem:[%s223 + $0x158] sm:$0xff]
      %v275 = vld [vmem:[%s223 + $0x160] sm:$0xff]
      %v276 = vld [vmem:[%s223 + $0x168] sm:$0xff]
      %v277 = vld [vmem:[%s223 + $0x170] sm:$0xff]
      %v278 = vld [vmem:[%s223 + $0x178] sm:$0xff]
      %v279 = vld [vmem:[%s223 + $0x180] sm:$0xff]
      %v280 = vld [vmem:[%s223 + $0x188] sm:$0xff]
      %v281 = vld [vmem:[%s223 + $0x190] sm:$0xff]
      %v282 = vld [vmem:[%s223 + $0x198] sm:$0xff]
      %v283 = vld [vmem:[%s223 + $0x1a0] sm:$0xff]
      %v284 = vld [vmem:[%s223 + $0x1a8] sm:$0xff]
      %v285 = vld [vmem:[%s223 + $0x1b0] sm:$0xff]
      %v286 = vld [vmem:[%s223 + $0x1b8] sm:$0xff]
      %v287 = vld [vmem:[%s223 + $0x1c0] sm:$0xff]
      %v288 = vld [vmem:[%s223 + $0x1c8] sm:$0xff]
      %v289 = vld [vmem:[%s223 + $0x1d0] sm:$0xff]
      %v290 = vld [vmem:[%s223 + $0x1d8] sm:$0xff]
      %v291 = vld [vmem:[%s223 + $0x1e0] sm:$0xff]
      %v292 = vld [vmem:[%s223 + $0x1e8] sm:$0xff]
      %v293 = vld [vmem:[%s223 + $0x1f0] sm:$0xff]
      %v294 = vld [vmem:[%s223 + $0x1f8] sm:$0xff]
      %v295 = vld [vmem:[%s223 + $0x200] sm:$0xff]
      %v296 = vld [vmem:[%s223 + $0x208] sm:$0xff]
      %v297 = vld [vmem:[%s223 + $0x210] sm:$0xff]
      %v298 = vld [vmem:[%s223 + $0x218] sm:$0xff]
      %v299 = vld [vmem:[%s223 + $0x220] sm:$0xff]
      %v300 = vld [vmem:[%s223 + $0x228] sm:$0xff]
      %v301 = vld [vmem:[%s223 + $0x230] sm:$0xff]
      %v302 = vld [vmem:[%s223 + $0x238] sm:$0xff]
      %v303 = vld [vmem:[%s223 + $0x240] sm:$0xff]
      %v304 = vld [vmem:[%s223 + $0x248] sm:$0xff]
      %v305 = vld [vmem:[%s223 + $0x250] sm:$0xff]
      %v306 = vld [vmem:[%s223 + $0x258] sm:$0xff]
      %v307 = vld [vmem:[%s223 + $0x260] sm:$0xff]
      %v308 = vld [vmem:[%s223 + $0x268] sm:$0xff]
      %v309 = vld [vmem:[%s223 + $0x270] sm:$0xff]
      %v310 = vld [vmem:[%s223 + $0x278] sm:$0xff]
      %v311 = vld [vmem:[%s223 + $0x280] sm:$0xff]
      %v312 = vld [vmem:[%s223 + $0x288] sm:$0xff]
      %v313 = vld [vmem:[%s223 + $0x290] sm:$0xff]
      %v314 = vld [vmem:[%s223 + $0x298] sm:$0xff]
      %v315 = vld [vmem:[%s223 + $0x2a0] sm:$0xff]
      %v316 = vld [vmem:[%s223 + $0x2a8] sm:$0xff]
      %v317 = vld [vmem:[%s223 + $0x2b0] sm:$0xff]
      %v318 = vld [vmem:[%s223 + $0x2b8] sm:$0xff]
      %v319 = vld [vmem:[%s223 + $0x2c0] sm:$0xff]
      %v320 = vld [vmem:[%s223 + $0x2c8] sm:$0xff]
      %v321 = vld [vmem:[%s223 + $0x2d0] sm:$0xff]
      %v322 = vld [vmem:[%s223 + $0x2d8] sm:$0xff]
      %v323 = vld [vmem:[%s223 + $0x2e0] sm:$0xff]
      %v324 = vld [vmem:[%s223 + $0x2e8] sm:$0xff]
      %v325 = vld [vmem:[%s223 + $0x2f0] sm:$0xff]
      %v326 = vld [vmem:[%s223 + $0x2f8] sm:$0xff]
      %v327 = vld [vmem:[%s223 + $0x300] sm:$0xff]
      %v328 = vld [vmem:[%s223 + $0x308] sm:$0xff]
      %v329 = vld [vmem:[%s223 + $0x310] sm:$0xff]
      %v330 = vld [vmem:[%s223 + $0x318] sm:$0xff]
      %v331 = vpack.c.bf16 %v233, %v231
      %v332 = vpack.c.bf16 %v234, %v232
      %v333 = vpack.c.bf16 %v237, %v235
      %v334 = vpack.c.bf16 %v238, %v236
      %v335 = vpack.c.bf16 %v241, %v239
      %v336 = vpack.c.bf16 %v242, %v240
      %v337 = vpack.c.bf16 %v245, %v243
      %v338 = vpack.c.bf16 %v246, %v244
      %v339 = vpack.c.bf16 %v249, %v247
      %v340 = vpack.c.bf16 %v250, %v248
      %v341 = vpack.c.bf16 %v253, %v251
      %v342 = vpack.c.bf16 %v254, %v252
      %v343 = vpack.c.bf16 %v257, %v255
      %v344 = vpack.c.bf16 %v258, %v256
      %v345 = vpack.c.bf16 %v261, %v259
      %v346 = vpack.c.bf16 %v262, %v260
      %v347 = vpack.c.bf16 %v265, %v263
      %v348 = vpack.c.bf16 %v266, %v264
      %v349 = vpack.c.bf16 %v269, %v267
      %v350 = vpack.c.bf16 %v270, %v268
      %v351 = vpack.c.bf16 %v273, %v271
      %v352 = vpack.c.bf16 %v274, %v272
      %v353 = vpack.c.bf16 %v277, %v275
      %v354 = vpack.c.bf16 %v278, %v276
      %v355 = vpack.c.bf16 %v281, %v279
      %v356 = vpack.c.bf16 %v282, %v280
      %v357 = vpack.c.bf16 %v285, %v283
      %v358 = vpack.c.bf16 %v286, %v284
      %v359 = vpack.c.bf16 %v289, %v287
      %v360 = vpack.c.bf16 %v290, %v288
      %v361 = vpack.c.bf16 %v293, %v291
      %v362 = vpack.c.bf16 %v294, %v292
      %v363 = vpack.c.bf16 %v297, %v295
      %v364 = vpack.c.bf16 %v298, %v296
      %v365 = vpack.c.bf16 %v301, %v299
      %v366 = vpack.c.bf16 %v302, %v300
      %v367 = vpack.c.bf16 %v305, %v303
      %v368 = vpack.c.bf16 %v306, %v304
      %v369 = vpack.c.bf16 %v309, %v307
      %v370 = vpack.c.bf16 %v310, %v308
      %v371 = vpack.c.bf16 %v313, %v311
      %v372 = vpack.c.bf16 %v314, %v312
      %v373 = vpack.c.bf16 %v317, %v315
      %v374 = vpack.c.bf16 %v318, %v316
      %v375 = vpack.c.bf16 %v321, %v319
      %v376 = vpack.c.bf16 %v322, %v320
      %v377 = vpack.c.bf16 %v325, %v323
      %v378 = vpack.c.bf16 %v326, %v324
      %v379 = vpack.c.bf16 %v329, %v327
      %v380 = vpack.c.bf16 %v330, %v328
      %v381 = vld [vmem:[%s1] sm:$0xff]
      %v382 = vld [vmem:[%s1 + $0x8] sm:$0xff]
      %v383 = vld [vmem:[%s1 + $0x10] sm:$0xff]
      %v384 = vld [vmem:[%s1 + $0x18] sm:$0xff]
      %v385 = vld [vmem:[%s1 + $0x20] sm:$0xff]
      %v386 = vld [vmem:[%s1 + $0x28] sm:$0xff]
      %v387 = vld [vmem:[%s1 + $0x30] sm:$0xff]
      %v388 = vld [vmem:[%s1 + $0x38] sm:$0xff]
      %v389 = vld [vmem:[%s1 + $0x40] sm:$0xff]
      %v390 = vld [vmem:[%s1 + $0x48] sm:$0xff]
      %v391 = vld [vmem:[%s1 + $0x50] sm:$0xff]
      %v392 = vld [vmem:[%s1 + $0x58] sm:$0xff]
      %v393 = vld [vmem:[%s1 + $0x60] sm:$0xff]
      %v394 = vld [vmem:[%s1 + $0x68] sm:$0xff]
      %v395 = vld [vmem:[%s1 + $0x70] sm:$0xff]
      %v396 = vld [vmem:[%s1 + $0x78] sm:$0xff]
      %v397 = vld [vmem:[%s1 + $0x80] sm:$0xff]
      %v398 = vld [vmem:[%s1 + $0x88] sm:$0xff]
      %v399 = vld [vmem:[%s1 + $0x90] sm:$0xff]
      %v400 = vld [vmem:[%s1 + $0x98] sm:$0xff]
      %v401 = vld [vmem:[%s1 + $0xa0] sm:$0xff]
      %v402 = vld [vmem:[%s1 + $0xa8] sm:$0xff]
      %v403 = vld [vmem:[%s1 + $0xb0] sm:$0xff]
      %v404 = vld [vmem:[%s1 + $0xb8] sm:$0xff]
      %v405 = vld [vmem:[%s1 + $0xc0] sm:$0xff]
      %v406 = vld [vmem:[%s1 + $0xc8] sm:$0xff]
      %v407 = vld [vmem:[%s1 + $0xd0] sm:$0xff]
      %v408 = vld [vmem:[%s1 + $0xd8] sm:$0xff]
      %v409 = vld [vmem:[%s1 + $0xe0] sm:$0xff]
      %v410 = vld [vmem:[%s1 + $0xe8] sm:$0xff]
      %v411 = vld [vmem:[%s1 + $0xf0] sm:$0xff]
      %v412 = vld [vmem:[%s1 + $0xf8] sm:$0xff]
      %v413 = vld [vmem:[%s1 + $0x100] sm:$0xff]
      %v414 = vld [vmem:[%s1 + $0x108] sm:$0xff]
      %v415 = vld [vmem:[%s1 + $0x110] sm:$0xff]
      %v416 = vld [vmem:[%s1 + $0x118] sm:$0xff]
      %v417 = vld [vmem:[%s1 + $0x120] sm:$0xff]
      %v418 = vld [vmem:[%s1 + $0x128] sm:$0xff]
      %v419 = vld [vmem:[%s1 + $0x130] sm:$0xff]
      %v420 = vld [vmem:[%s1 + $0x138] sm:$0xff]
      %v421 = vld [vmem:[%s1 + $0x140] sm:$0xff]
      %v422 = vld [vmem:[%s1 + $0x148] sm:$0xff]
      %v423 = vld [vmem:[%s1 + $0x150] sm:$0xff]
      %v424 = vld [vmem:[%s1 + $0x158] sm:$0xff]
      %v425 = vld [vmem:[%s1 + $0x160] sm:$0xff]
      %v426 = vld [vmem:[%s1 + $0x168] sm:$0xff]
      %v427 = vld [vmem:[%s1 + $0x170] sm:$0xff]
      %v428 = vld [vmem:[%s1 + $0x178] sm:$0xff]
      %v429 = vld [vmem:[%s1 + $0x180] sm:$0xff]
      %v430 = vld [vmem:[%s1 + $0x188] sm:$0xff]
      %v431 = vld [vmem:[%s1 + $0x190] sm:$0xff]
      %v432 = vld [vmem:[%s1 + $0x198] sm:$0xff]
      %v433 = vld [vmem:[%s1 + $0x1a0] sm:$0xff]
      %v434 = vld [vmem:[%s1 + $0x1a8] sm:$0xff]
      %v435 = vld [vmem:[%s1 + $0x1b0] sm:$0xff]
      %v436 = vld [vmem:[%s1 + $0x1b8] sm:$0xff]
      %v437 = vld [vmem:[%s1 + $0x1c0] sm:$0xff]
      %v438 = vld [vmem:[%s1 + $0x1c8] sm:$0xff]
      %v439 = vld [vmem:[%s1 + $0x1d0] sm:$0xff]
      %v440 = vld [vmem:[%s1 + $0x1d8] sm:$0xff]
      %v441 = vld [vmem:[%s1 + $0x1e0] sm:$0xff]
      %v442 = vld [vmem:[%s1 + $0x1e8] sm:$0xff]
      %v443 = vld [vmem:[%s1 + $0x1f0] sm:$0xff]
      %v444 = vld [vmem:[%s1 + $0x1f8] sm:$0xff]
      %v445 = vld [vmem:[%s1 + $0x200] sm:$0xff]
      %v446 = vld [vmem:[%s1 + $0x208] sm:$0xff]
      %v447 = vld [vmem:[%s1 + $0x210] sm:$0xff]
      %v448 = vld [vmem:[%s1 + $0x218] sm:$0xff]
      %v449 = vld [vmem:[%s1 + $0x220] sm:$0xff]
      %v450 = vld [vmem:[%s1 + $0x228] sm:$0xff]
      %v451 = vld [vmem:[%s1 + $0x230] sm:$0xff]
      %v452 = vld [vmem:[%s1 + $0x238] sm:$0xff]
      %v453 = vld [vmem:[%s1 + $0x240] sm:$0xff]
      %v454 = vld [vmem:[%s1 + $0x248] sm:$0xff]
      %v455 = vld [vmem:[%s1 + $0x250] sm:$0xff]
      %v456 = vld [vmem:[%s1 + $0x258] sm:$0xff]
      %v457 = vld [vmem:[%s1 + $0x260] sm:$0xff]
      %v458 = vld [vmem:[%s1 + $0x268] sm:$0xff]
      %v459 = vld [vmem:[%s1 + $0x270] sm:$0xff]
      %v460 = vld [vmem:[%s1 + $0x278] sm:$0xff]
      %v461 = vld [vmem:[%s1 + $0x280] sm:$0xff]
      %v462 = vld [vmem:[%s1 + $0x288] sm:$0xff]
      %v463 = vld [vmem:[%s1 + $0x290] sm:$0xff]
      %v464 = vld [vmem:[%s1 + $0x298] sm:$0xff]
      %v465 = vld [vmem:[%s1 + $0x2a0] sm:$0xff]
      %v466 = vld [vmem:[%s1 + $0x2a8] sm:$0xff]
      %v467 = vld [vmem:[%s1 + $0x2b0] sm:$0xff]
      %v468 = vld [vmem:[%s1 + $0x2b8] sm:$0xff]
      %v469 = vld [vmem:[%s1 + $0x2c0] sm:$0xff]
      %v470 = vld [vmem:[%s1 + $0x2c8] sm:$0xff]
      %v471 = vld [vmem:[%s1 + $0x2d0] sm:$0xff]
      %v472 = vld [vmem:[%s1 + $0x2d8] sm:$0xff]
      %v473 = vld [vmem:[%s1 + $0x2e0] sm:$0xff]
      %v474 = vld [vmem:[%s1 + $0x2e8] sm:$0xff]
      %v475 = vld [vmem:[%s1 + $0x2f0] sm:$0xff]
      %v476 = vld [vmem:[%s1 + $0x2f8] sm:$0xff]
      %v477 = vld [vmem:[%s1 + $0x300] sm:$0xff]
      %v478 = vld [vmem:[%s1 + $0x308] sm:$0xff]
      %v479 = vld [vmem:[%s1 + $0x310] sm:$0xff]
      %v480 = vld [vmem:[%s1 + $0x318] sm:$0xff]
      %v481 = vld [vmem:[%s1 + $0x320] sm:$0xff]
      %v482 = vld [vmem:[%s1 + $0x328] sm:$0xff]
      %v483 = vld [vmem:[%s1 + $0x330] sm:$0xff]
      %v484 = vld [vmem:[%s1 + $0x338] sm:$0xff]
      %v485 = vld [vmem:[%s1 + $0x340] sm:$0xff]
      %v486 = vld [vmem:[%s1 + $0x348] sm:$0xff]
      %v487 = vld [vmem:[%s1 + $0x350] sm:$0xff]
      %v488 = vld [vmem:[%s1 + $0x358] sm:$0xff]
      %v489 = vld [vmem:[%s1 + $0x360] sm:$0xff]
      %v490 = vld [vmem:[%s1 + $0x368] sm:$0xff]
      %v491 = vld [vmem:[%s1 + $0x370] sm:$0xff]
      %v492 = vld [vmem:[%s1 + $0x378] sm:$0xff]
      %v493 = vld [vmem:[%s1 + $0x380] sm:$0xff]
      %v494 = vld [vmem:[%s1 + $0x388] sm:$0xff]
      %v495 = vld [vmem:[%s1 + $0x390] sm:$0xff]
      %v496 = vld [vmem:[%s1 + $0x398] sm:$0xff]
      %v497 = vld [vmem:[%s1 + $0x3a0] sm:$0xff]
      %v498 = vld [vmem:[%s1 + $0x3a8] sm:$0xff]
      %v499 = vld [vmem:[%s1 + $0x3b0] sm:$0xff]
      %v500 = vld [vmem:[%s1 + $0x3b8] sm:$0xff]
      %v501 = vld [vmem:[%s1 + $0x3c0] sm:$0xff]
      %v502 = vld [vmem:[%s1 + $0x3c8] sm:$0xff]
      %v503 = vld [vmem:[%s1 + $0x3d0] sm:$0xff]
      %v504 = vld [vmem:[%s1 + $0x3d8] sm:$0xff]
      %v505 = vld [vmem:[%s1 + $0x3e0] sm:$0xff]
      %v506 = vld [vmem:[%s1 + $0x3e8] sm:$0xff]
      %v507 = vld [vmem:[%s1 + $0x3f0] sm:$0xff]
      %v508 = vld [vmem:[%s1 + $0x3f8] sm:$0xff]
      %v509 = vld [vmem:[%s2] sm:$0xff]
      %v511 = vperm.slane %v509, 0
      %v512 = vperm.slane %v509, 1
      %v513 = vperm.slane %v509, 2
      %v514 = vperm.slane %v509, 3
      %v515 = vperm.slane %v509, 4
      %v516 = vperm.slane %v509, 5
      %v517 = vperm.slane %v509, 6
      %v518 = vperm.slane %v509, 7
      %v655 = vunpack.c.l.b16 %v381
      %v656 = vunpack.c.h.b16 %v381
      %v657 = vunpack.c.l.b16 %v382
      %v658 = vunpack.c.h.b16 %v382
      %v659 = vunpack.c.l.b16 %v383
      %v660 = vunpack.c.h.b16 %v383
      %v661 = vunpack.c.l.b16 %v384
      %v662 = vunpack.c.h.b16 %v384
      %v663 = vunpack.c.l.b16 %v385
      %v664 = vunpack.c.h.b16 %v385
      %v665 = vunpack.c.l.b16 %v386
      %v666 = vunpack.c.h.b16 %v386
      %v667 = vunpack.c.l.b16 %v387
      %v668 = vunpack.c.h.b16 %v387
      %v669 = vunpack.c.l.b16 %v388
      %v670 = vunpack.c.h.b16 %v388
      %v671 = vunpack.c.l.b16 %v389
      %v672 = vunpack.c.h.b16 %v389
      %v673 = vunpack.c.l.b16 %v390
      %v674 = vunpack.c.h.b16 %v390
      %v675 = vunpack.c.l.b16 %v391
      %v676 = vunpack.c.h.b16 %v391
      %v677 = vunpack.c.l.b16 %v392
      %v678 = vunpack.c.h.b16 %v392
      %v679 = vunpack.c.l.b16 %v393
      %v680 = vunpack.c.h.b16 %v393
      %v681 = vunpack.c.l.b16 %v394
      %v682 = vunpack.c.h.b16 %v394
      %v683 = vunpack.c.l.b16 %v395
      %v684 = vunpack.c.h.b16 %v395
      %v685 = vunpack.c.l.b16 %v396
      %v686 = vunpack.c.h.b16 %v396
      %v687 = vunpack.c.l.b16 %v397
      %v688 = vunpack.c.h.b16 %v397
      %v689 = vunpack.c.l.b16 %v398
      %v690 = vunpack.c.h.b16 %v398
      %v691 = vunpack.c.l.b16 %v399
      %v692 = vunpack.c.h.b16 %v399
      %v693 = vunpack.c.l.b16 %v400
      %v694 = vunpack.c.h.b16 %v400
      %v695 = vunpack.c.l.b16 %v401
      %v696 = vunpack.c.h.b16 %v401
      %v697 = vunpack.c.l.b16 %v402
      %v698 = vunpack.c.h.b16 %v402
      %v699 = vunpack.c.l.b16 %v403
      %v700 = vunpack.c.h.b16 %v403
      %v701 = vunpack.c.l.b16 %v404
      %v702 = vunpack.c.h.b16 %v404
      %v703 = vunpack.c.l.b16 %v405
      %v704 = vunpack.c.h.b16 %v405
      %v705 = vunpack.c.l.b16 %v406
      %v706 = vunpack.c.h.b16 %v406
      %v707 = vunpack.c.l.b16 %v407
      %v708 = vunpack.c.h.b16 %v407
      %v709 = vunpack.c.l.b16 %v408
      %v710 = vunpack.c.h.b16 %v408
      %v711 = vunpack.c.l.b16 %v409
      %v712 = vunpack.c.h.b16 %v409
      %v713 = vunpack.c.l.b16 %v410
      %v714 = vunpack.c.h.b16 %v410
      %v715 = vunpack.c.l.b16 %v411
      %v716 = vunpack.c.h.b16 %v411
      %v717 = vunpack.c.l.b16 %v412
      %v718 = vunpack.c.h.b16 %v412
      %v719 = vunpack.c.l.b16 %v413
      %v720 = vunpack.c.h.b16 %v413
      %v721 = vunpack.c.l.b16 %v414
      %v722 = vunpack.c.h.b16 %v414
      %v723 = vunpack.c.l.b16 %v415
      %v724 = vunpack.c.h.b16 %v415
      %v725 = vunpack.c.l.b16 %v416
      %v726 = vunpack.c.h.b16 %v416
      %v727 = vunpack.c.l.b16 %v417
      %v728 = vunpack.c.h.b16 %v417
      %v729 = vunpack.c.l.b16 %v418
      %v730 = vunpack.c.h.b16 %v418
      %v731 = vunpack.c.l.b16 %v419
      %v732 = vunpack.c.h.b16 %v419
      %v733 = vunpack.c.l.b16 %v420
      %v734 = vunpack.c.h.b16 %v420
      %v735 = vunpack.c.l.b16 %v421
      %v736 = vunpack.c.h.b16 %v421
      %v737 = vunpack.c.l.b16 %v422
      %v738 = vunpack.c.h.b16 %v422
      %v739 = vunpack.c.l.b16 %v423
      %v740 = vunpack.c.h.b16 %v423
      %v741 = vunpack.c.l.b16 %v424
      %v742 = vunpack.c.h.b16 %v424
      %v743 = vunpack.c.l.b16 %v425
      %v744 = vunpack.c.h.b16 %v425
      %v745 = vunpack.c.l.b16 %v426
      %v746 = vunpack.c.h.b16 %v426
      %v747 = vunpack.c.l.b16 %v427
      %v748 = vunpack.c.h.b16 %v427
      %v749 = vunpack.c.l.b16 %v428
      %v750 = vunpack.c.h.b16 %v428
      %v751 = vunpack.c.l.b16 %v429
      %v752 = vunpack.c.h.b16 %v429
      %v753 = vunpack.c.l.b16 %v430
      %v754 = vunpack.c.h.b16 %v430
      %v755 = vunpack.c.l.b16 %v431
      %v756 = vunpack.c.h.b16 %v431
      %v757 = vunpack.c.l.b16 %v432
      %v758 = vunpack.c.h.b16 %v432
      %v759 = vunpack.c.l.b16 %v433
      %v760 = vunpack.c.h.b16 %v433
      %v761 = vunpack.c.l.b16 %v434
      %v762 = vunpack.c.h.b16 %v434
      %v763 = vunpack.c.l.b16 %v435
      %v764 = vunpack.c.h.b16 %v435
      %v765 = vunpack.c.l.b16 %v436
      %v766 = vunpack.c.h.b16 %v436
      %v767 = vunpack.c.l.b16 %v437
      %v768 = vunpack.c.h.b16 %v437
      %v769 = vunpack.c.l.b16 %v438
      %v770 = vunpack.c.h.b16 %v438
      %v771 = vunpack.c.l.b16 %v439
      %v772 = vunpack.c.h.b16 %v439
      %v773 = vunpack.c.l.b16 %v440
      %v774 = vunpack.c.h.b16 %v440
      %v775 = vunpack.c.l.b16 %v441
      %v776 = vunpack.c.h.b16 %v441
      %v777 = vunpack.c.l.b16 %v442
      %v778 = vunpack.c.h.b16 %v442
      %v779 = vunpack.c.l.b16 %v443
      %v780 = vunpack.c.h.b16 %v443
      %v781 = vunpack.c.l.b16 %v444
      %v782 = vunpack.c.h.b16 %v444
      %v783 = vunpack.c.l.b16 %v445
      %v784 = vunpack.c.h.b16 %v445
      %v785 = vunpack.c.l.b16 %v446
      %v786 = vunpack.c.h.b16 %v446
      %v787 = vunpack.c.l.b16 %v447
      %v788 = vunpack.c.h.b16 %v447
      %v789 = vunpack.c.l.b16 %v448
      %v790 = vunpack.c.h.b16 %v448
      %v791 = vunpack.c.l.b16 %v449
      %v792 = vunpack.c.h.b16 %v449
      %v793 = vunpack.c.l.b16 %v450
      %v794 = vunpack.c.h.b16 %v450
      %v795 = vunpack.c.l.b16 %v451
      %v796 = vunpack.c.h.b16 %v451
      %v797 = vunpack.c.l.b16 %v452
      %v798 = vunpack.c.h.b16 %v452
      %v799 = vunpack.c.l.b16 %v453
      %v800 = vunpack.c.h.b16 %v453
      %v801 = vunpack.c.l.b16 %v454
      %v802 = vunpack.c.h.b16 %v454
      %v803 = vunpack.c.l.b16 %v455
      %v804 = vunpack.c.h.b16 %v455
      %v805 = vunpack.c.l.b16 %v456
      %v806 = vunpack.c.h.b16 %v456
      %v807 = vunpack.c.l.b16 %v457
      %v808 = vunpack.c.h.b16 %v457
      %v809 = vunpack.c.l.b16 %v458
      %v810 = vunpack.c.h.b16 %v458
      %v811 = vunpack.c.l.b16 %v459
      %v812 = vunpack.c.h.b16 %v459
      %v813 = vunpack.c.l.b16 %v460
      %v814 = vunpack.c.h.b16 %v460
      %v815 = vunpack.c.l.b16 %v461
      %v816 = vunpack.c.h.b16 %v461
      %v817 = vunpack.c.l.b16 %v462
      %v818 = vunpack.c.h.b16 %v462
      %v819 = vunpack.c.l.b16 %v463
      %v820 = vunpack.c.h.b16 %v463
      %v821 = vunpack.c.l.b16 %v464
      %v822 = vunpack.c.h.b16 %v464
      %v823 = vunpack.c.l.b16 %v465
      %v824 = vunpack.c.h.b16 %v465
      %v825 = vunpack.c.l.b16 %v466
      %v826 = vunpack.c.h.b16 %v466
      %v827 = vunpack.c.l.b16 %v467
      %v828 = vunpack.c.h.b16 %v467
      %v829 = vunpack.c.l.b16 %v468
      %v830 = vunpack.c.h.b16 %v468
      %v831 = vunpack.c.l.b16 %v469
      %v832 = vunpack.c.h.b16 %v469
      %v833 = vunpack.c.l.b16 %v470
      %v834 = vunpack.c.h.b16 %v470
      %v835 = vunpack.c.l.b16 %v471
      %v836 = vunpack.c.h.b16 %v471
      %v837 = vunpack.c.l.b16 %v472
      %v838 = vunpack.c.h.b16 %v472
      %v839 = vunpack.c.l.b16 %v473
      %v840 = vunpack.c.h.b16 %v473
      %v841 = vunpack.c.l.b16 %v474
      %v842 = vunpack.c.h.b16 %v474
      %v843 = vunpack.c.l.b16 %v475
      %v844 = vunpack.c.h.b16 %v475
      %v845 = vunpack.c.l.b16 %v476
      %v846 = vunpack.c.h.b16 %v476
      %v847 = vunpack.c.l.b16 %v477
      %v848 = vunpack.c.h.b16 %v477
      %v849 = vunpack.c.l.b16 %v478
      %v850 = vunpack.c.h.b16 %v478
      %v851 = vunpack.c.l.b16 %v479
      %v852 = vunpack.c.h.b16 %v479
      %v853 = vunpack.c.l.b16 %v480
      %v854 = vunpack.c.h.b16 %v480
      %v855 = vunpack.c.l.b16 %v481
      %v856 = vunpack.c.h.b16 %v481
      %v857 = vunpack.c.l.b16 %v482
      %v858 = vunpack.c.h.b16 %v482
      %v859 = vunpack.c.l.b16 %v483
      %v860 = vunpack.c.h.b16 %v483
      %v861 = vunpack.c.l.b16 %v484
      %v862 = vunpack.c.h.b16 %v484
      %v863 = vunpack.c.l.b16 %v485
      %v864 = vunpack.c.h.b16 %v485
      %v865 = vunpack.c.l.b16 %v486
      %v866 = vunpack.c.h.b16 %v486
      %v867 = vunpack.c.l.b16 %v487
      %v868 = vunpack.c.h.b16 %v487
      %v869 = vunpack.c.l.b16 %v488
      %v870 = vunpack.c.h.b16 %v488
      %v871 = vunpack.c.l.b16 %v489
      %v872 = vunpack.c.h.b16 %v489
      %v873 = vunpack.c.l.b16 %v490
      %v874 = vunpack.c.h.b16 %v490
      %v875 = vunpack.c.l.b16 %v491
      %v876 = vunpack.c.h.b16 %v491
      %v877 = vunpack.c.l.b16 %v492
      %v878 = vunpack.c.h.b16 %v492
      %v879 = vunpack.c.l.b16 %v493
      %v880 = vunpack.c.h.b16 %v493
      %v881 = vunpack.c.l.b16 %v494
      %v882 = vunpack.c.h.b16 %v494
      %v883 = vunpack.c.l.b16 %v495
      %v884 = vunpack.c.h.b16 %v495
      %v885 = vunpack.c.l.b16 %v496
      %v886 = vunpack.c.h.b16 %v496
      %v887 = vunpack.c.l.b16 %v497
      %v888 = vunpack.c.h.b16 %v497
      %v889 = vunpack.c.l.b16 %v498
      %v890 = vunpack.c.h.b16 %v498
      %v891 = vunpack.c.l.b16 %v499
      %v892 = vunpack.c.h.b16 %v499
      %v893 = vunpack.c.l.b16 %v500
      %v894 = vunpack.c.h.b16 %v500
      %v895 = vunpack.c.l.b16 %v501
      %v896 = vunpack.c.h.b16 %v501
      %v897 = vunpack.c.l.b16 %v502
      %v898 = vunpack.c.h.b16 %v502
      %v899 = vunpack.c.l.b16 %v503
      %v900 = vunpack.c.h.b16 %v503
      %v901 = vunpack.c.l.b16 %v504
      %v902 = vunpack.c.h.b16 %v504
      %v903 = vunpack.c.l.b16 %v505
      %v904 = vunpack.c.h.b16 %v505
      %v905 = vunpack.c.l.b16 %v506
      %v906 = vunpack.c.h.b16 %v506
      %v907 = vunpack.c.l.b16 %v507
      %v908 = vunpack.c.h.b16 %v507
      %v909 = vunpack.c.l.b16 %v508
      %v910 = vunpack.c.h.b16 %v508
      %v911 = vpack.c.b16 %v663, %v655
      %v912 = vpack.c.b16 %v664, %v656
      %v913 = vpack.c.b16 %v665, %v657
      %v914 = vpack.c.b16 %v666, %v658
      %v915 = vpack.c.b16 %v667, %v659
      %v916 = vpack.c.b16 %v668, %v660
      %v917 = vpack.c.b16 %v669, %v661
      %v918 = vpack.c.b16 %v670, %v662
      %v919 = vpack.c.b16 %v679, %v671
      %v920 = vpack.c.b16 %v680, %v672
      %v921 = vpack.c.b16 %v681, %v673
      %v922 = vpack.c.b16 %v682, %v674
      %v923 = vpack.c.b16 %v683, %v675
      %v924 = vpack.c.b16 %v684, %v676
      %v925 = vpack.c.b16 %v685, %v677
      %v926 = vpack.c.b16 %v686, %v678
      %v927 = vpack.c.b16 %v695, %v687
      %v928 = vpack.c.b16 %v696, %v688
      %v929 = vpack.c.b16 %v697, %v689
      %v930 = vpack.c.b16 %v698, %v690
      %v931 = vpack.c.b16 %v699, %v691
      %v932 = vpack.c.b16 %v700, %v692
      %v933 = vpack.c.b16 %v701, %v693
      %v934 = vpack.c.b16 %v702, %v694
      %v935 = vpack.c.b16 %v711, %v703
      %v936 = vpack.c.b16 %v712, %v704
      %v937 = vpack.c.b16 %v713, %v705
      %v938 = vpack.c.b16 %v714, %v706
      %v939 = vpack.c.b16 %v715, %v707
      %v940 = vpack.c.b16 %v716, %v708
      %v941 = vpack.c.b16 %v717, %v709
      %v942 = vpack.c.b16 %v718, %v710
      %v943 = vpack.c.b16 %v727, %v719
      %v944 = vpack.c.b16 %v728, %v720
      %v945 = vpack.c.b16 %v729, %v721
      %v946 = vpack.c.b16 %v730, %v722
      %v947 = vpack.c.b16 %v731, %v723
      %v948 = vpack.c.b16 %v732, %v724
      %v949 = vpack.c.b16 %v733, %v725
      %v950 = vpack.c.b16 %v734, %v726
      %v951 = vpack.c.b16 %v743, %v735
      %v952 = vpack.c.b16 %v744, %v736
      %v953 = vpack.c.b16 %v745, %v737
      %v954 = vpack.c.b16 %v746, %v738
      %v955 = vpack.c.b16 %v747, %v739
      %v956 = vpack.c.b16 %v748, %v740
      %v957 = vpack.c.b16 %v749, %v741
      %v958 = vpack.c.b16 %v750, %v742
      %v959 = vpack.c.b16 %v759, %v751
      %v960 = vpack.c.b16 %v760, %v752
      %v961 = vpack.c.b16 %v761, %v753
      %v962 = vpack.c.b16 %v762, %v754
      %v963 = vpack.c.b16 %v763, %v755
      %v964 = vpack.c.b16 %v764, %v756
      %v965 = vpack.c.b16 %v765, %v757
      %v966 = vpack.c.b16 %v766, %v758
      %v967 = vpack.c.b16 %v775, %v767
      %v968 = vpack.c.b16 %v776, %v768
      %v969 = vpack.c.b16 %v777, %v769
      %v970 = vpack.c.b16 %v778, %v770
      %v971 = vpack.c.b16 %v779, %v771
      %v972 = vpack.c.b16 %v780, %v772
      %v973 = vpack.c.b16 %v781, %v773
      %v974 = vpack.c.b16 %v782, %v774
      %v975 = vpack.c.b16 %v791, %v783
      %v976 = vpack.c.b16 %v792, %v784
      %v977 = vpack.c.b16 %v793, %v785
      %v978 = vpack.c.b16 %v794, %v786
      %v979 = vpack.c.b16 %v795, %v787
      %v980 = vpack.c.b16 %v796, %v788
      %v981 = vpack.c.b16 %v797, %v789
      %v982 = vpack.c.b16 %v798, %v790
      %v983 = vpack.c.b16 %v807, %v799
      %v984 = vpack.c.b16 %v808, %v800
      %v985 = vpack.c.b16 %v809, %v801
      %v986 = vpack.c.b16 %v810, %v802
      %v987 = vpack.c.b16 %v811, %v803
      %v988 = vpack.c.b16 %v812, %v804
      %v989 = vpack.c.b16 %v813, %v805
      %v990 = vpack.c.b16 %v814, %v806
      %v991 = vpack.c.b16 %v823, %v815
      %v992 = vpack.c.b16 %v824, %v816
      %v993 = vpack.c.b16 %v825, %v817
      %v994 = vpack.c.b16 %v826, %v818
      %v995 = vpack.c.b16 %v827, %v819
      %v996 = vpack.c.b16 %v828, %v820
      %v997 = vpack.c.b16 %v829, %v821
      %v998 = vpack.c.b16 %v830, %v822
      %v999 = vpack.c.b16 %v839, %v831
      %v1000 = vpack.c.b16 %v840, %v832
      %v1001 = vpack.c.b16 %v841, %v833
      %v1002 = vpack.c.b16 %v842, %v834
      %v1003 = vpack.c.b16 %v843, %v835
      %v1004 = vpack.c.b16 %v844, %v836
      %v1005 = vpack.c.b16 %v845, %v837
      %v1006 = vpack.c.b16 %v846, %v838
      %v1007 = vpack.c.b16 %v855, %v847
      %v1008 = vpack.c.b16 %v856, %v848
      %v1009 = vpack.c.b16 %v857, %v849
      %v1010 = vpack.c.b16 %v858, %v850
      %v1011 = vpack.c.b16 %v859, %v851
      %v1012 = vpack.c.b16 %v860, %v852
      %v1013 = vpack.c.b16 %v861, %v853
      %v1014 = vpack.c.b16 %v862, %v854
      %v1015 = vpack.c.b16 %v871, %v863
      %v1016 = vpack.c.b16 %v872, %v864
      %v1017 = vpack.c.b16 %v873, %v865
      %v1018 = vpack.c.b16 %v874, %v866
      %v1019 = vpack.c.b16 %v875, %v867
      %v1020 = vpack.c.b16 %v876, %v868
      %v1021 = vpack.c.b16 %v877, %v869
      %v1022 = vpack.c.b16 %v878, %v870
      %v1023 = vpack.c.b16 %v887, %v879
      %v1024 = vpack.c.b16 %v888, %v880
      %v1025 = vpack.c.b16 %v889, %v881
      %v1026 = vpack.c.b16 %v890, %v882
      %v1027 = vpack.c.b16 %v891, %v883
      %v1028 = vpack.c.b16 %v892, %v884
      %v1029 = vpack.c.b16 %v893, %v885
      %v1030 = vpack.c.b16 %v894, %v886
      %v1031 = vpack.c.b16 %v903, %v895
      %v1032 = vpack.c.b16 %v904, %v896
      %v1033 = vpack.c.b16 %v905, %v897
      %v1034 = vpack.c.b16 %v906, %v898
      %v1035 = vpack.c.b16 %v907, %v899
      %v1036 = vpack.c.b16 %v908, %v900
      %v1037 = vpack.c.b16 %v909, %v901
      %v1038 = vpack.c.b16 %v910, %v902
      %1167 = vmatpush.bf16.msra.mxu0 %v967
      %1168 = vmatpush.bf16.msra.mxu0 %v959
      %1169 = vmatpush.bf16.msra.mxu0 %v951
      %1170 = vmatpush.bf16.msra.mxu0 %v943
      %1171 = vmatpush.bf16.msra.mxu0 %v935
      %1172 = vmatpush.bf16.msra.mxu0 %v927
      %1173 = vmatpush.bf16.msra.mxu0 %v919
      %1174 = vmatpush.bf16.msra.mxu0 %v911
      %1175 = vmatmul.bf16.gmra.mxu0 %v331
      %v1176 = vpop.f32.mrf.mxu0
      %v1177 = vadd.f32 %v511, %v1176
      %v1178 = vpop.f32.mrf.mxu0
      %v1179 = vadd.f32 %v511, %v1178
      %1180 = vmatmul.bf16.gmra.mxu0 %v333
      %v1181 = vpop.f32.mrf.mxu0
      %v1182 = vadd.f32 %v511, %v1181
      %v1183 = vpop.f32.mrf.mxu0
      %v1184 = vadd.f32 %v511, %v1183
      %1185 = vmatmul.bf16.gmra.mxu0 %v335
      %v1186 = vpop.f32.mrf.mxu0
      %v1187 = vadd.f32 %v511, %v1186
      %v1188 = vpop.f32.mrf.mxu0
      %v1189 = vadd.f32 %v511, %v1188
      %1190 = vmatmul.bf16.gmra.mxu0 %v337
      %v1191 = vpop.f32.mrf.mxu0
      %v1192 = vadd.f32 %v511, %v1191
      %v1193 = vpop.f32.mrf.mxu0
      %v1194 = vadd.f32 %v511, %v1193
      %1195 = vmatmul.bf16.gmra.mxu0 %v339
      %v1196 = vpop.f32.mrf.mxu0
      %v1197 = vadd.f32 %v511, %v1196
      %v1198 = vpop.f32.mrf.mxu0
      %v1199 = vadd.f32 %v511, %v1198
      %1200 = vmatmul.bf16.gmra.mxu0 %v341
      %v1201 = vpop.f32.mrf.mxu0
      %v1202 = vadd.f32 %v511, %v1201
      %v1203 = vpop.f32.mrf.mxu0
      %v1204 = vadd.f32 %v511, %v1203
      %1205 = vmatmul.bf16.gmra.mxu0 %v343
      %v1206 = vpop.f32.mrf.mxu0
      %v1207 = vadd.f32 %v511, %v1206
      %v1208 = vpop.f32.mrf.mxu0
      %v1209 = vadd.f32 %v511, %v1208
      %1210 = vmatmul.bf16.gmra.mxu0 %v345
      %v1211 = vpop.f32.mrf.mxu0
      %v1212 = vadd.f32 %v511, %v1211
      %v1213 = vpop.f32.mrf.mxu0
      %v1214 = vadd.f32 %v511, %v1213
      %1215 = vmatmul.bf16.gmra.mxu0 %v347
      %v1216 = vpop.f32.mrf.mxu0
      %v1217 = vadd.f32 %v511, %v1216
      %v1218 = vpop.f32.mrf.mxu0
      %v1219 = vadd.f32 %v511, %v1218
      %1220 = vmatmul.bf16.gmra.mxu0 %v349
      %v1221 = vpop.f32.mrf.mxu0
      %v1222 = vadd.f32 %v511, %v1221
      %v1223 = vpop.f32.mrf.mxu0
      %v1224 = vadd.f32 %v511, %v1223
      %1225 = vmatmul.bf16.gmra.mxu0 %v351
      %v1226 = vpop.f32.mrf.mxu0
      %v1227 = vadd.f32 %v511, %v1226
      %v1228 = vpop.f32.mrf.mxu0
      %v1229 = vadd.f32 %v511, %v1228
      %1230 = vmatmul.bf16.gmra.mxu0 %v353
      %v1231 = vpop.f32.mrf.mxu0
      %v1232 = vadd.f32 %v511, %v1231
      %v1233 = vpop.f32.mrf.mxu0
      %v1234 = vadd.f32 %v511, %v1233
      %1235 = vmatmul.bf16.gmra.mxu0 %v355
      %v1236 = vpop.f32.mrf.mxu0
      %v1237 = vadd.f32 %v511, %v1236
      %v1238 = vpop.f32.mrf.mxu0
      %v1239 = vadd.f32 %v511, %v1238
      %1240 = vmatmul.bf16.gmra.mxu0 %v357
      %v1241 = vpop.f32.mrf.mxu0
      %v1242 = vadd.f32 %v511, %v1241
      %v1243 = vpop.f32.mrf.mxu0
      %v1244 = vadd.f32 %v511, %v1243
      %1245 = vmatmul.bf16.gmra.mxu0 %v359
      %v1246 = vpop.f32.mrf.mxu0
      %v1247 = vadd.f32 %v511, %v1246
      %v1248 = vpop.f32.mrf.mxu0
      %v1249 = vadd.f32 %v511, %v1248
      %1250 = vmatmul.bf16.gmra.mxu0 %v361
      %v1251 = vpop.f32.mrf.mxu0
      %v1252 = vadd.f32 %v511, %v1251
      %v1253 = vpop.f32.mrf.mxu0
      %v1254 = vadd.f32 %v511, %v1253
      %1255 = vmatmul.bf16.gmra.mxu0 %v363
      %v1256 = vpop.f32.mrf.mxu0
      %v1257 = vadd.f32 %v511, %v1256
      %v1258 = vpop.f32.mrf.mxu0
      %v1259 = vadd.f32 %v511, %v1258
      %1260 = vmatmul.bf16.gmra.mxu0 %v365
      %v1261 = vpop.f32.mrf.mxu0
      %v1262 = vadd.f32 %v511, %v1261
      %v1263 = vpop.f32.mrf.mxu0
      %v1264 = vadd.f32 %v511, %v1263
      %1265 = vmatmul.bf16.gmra.mxu0 %v367
      %v1266 = vpop.f32.mrf.mxu0
      %v1267 = vadd.f32 %v511, %v1266
      %v1268 = vpop.f32.mrf.mxu0
      %v1269 = vadd.f32 %v511, %v1268
      %1270 = vmatmul.bf16.gmra.mxu0 %v369
      %v1271 = vpop.f32.mrf.mxu0
      %v1272 = vadd.f32 %v511, %v1271
      %v1273 = vpop.f32.mrf.mxu0
      %v1274 = vadd.f32 %v511, %v1273
      %1275 = vmatmul.bf16.gmra.mxu0 %v371
      %v1276 = vpop.f32.mrf.mxu0
      %v1277 = vadd.f32 %v511, %v1276
      %v1278 = vpop.f32.mrf.mxu0
      %v1279 = vadd.f32 %v511, %v1278
      %1280 = vmatmul.bf16.gmra.mxu0 %v373
      %v1281 = vpop.f32.mrf.mxu0
      %v1282 = vadd.f32 %v511, %v1281
      %v1283 = vpop.f32.mrf.mxu0
      %v1284 = vadd.f32 %v511, %v1283
      %1285 = vmatmul.bf16.gmra.mxu0 %v375
      %v1286 = vpop.f32.mrf.mxu0
      %v1287 = vadd.f32 %v511, %v1286
      %v1288 = vpop.f32.mrf.mxu0
      %v1289 = vadd.f32 %v511, %v1288
      %1290 = vmatmul.bf16.gmra.mxu0 %v377
      %v1291 = vpop.f32.mrf.mxu0
      %v1292 = vadd.f32 %v511, %v1291
      %v1293 = vpop.f32.mrf.mxu0
      %v1294 = vadd.f32 %v511, %v1293
      %1295 = vmatmul.bf16.gmra.mxu0 %v379
      %v1296 = vpop.f32.mrf.mxu0
      %v1297 = vadd.f32 %v511, %v1296
      %v1298 = vpop.f32.mrf.mxu0
      %v1299 = vadd.f32 %v511, %v1298
      %1300 = vdwg.mxu0
      %1301 = vmatpush.bf16.msra.mxu0 %v1031
      %1302 = vmatpush.bf16.msra.mxu0 %v1023
      %1303 = vmatpush.bf16.msra.mxu0 %v1015
      %1304 = vmatpush.bf16.msra.mxu0 %v1007
      %1305 = vmatpush.bf16.msra.mxu0 %v999
      %1306 = vmatpush.bf16.msra.mxu0 %v991
      %1307 = vmatpush.bf16.msra.mxu0 %v983
      %1308 = vmatpush.bf16.msra.mxu0 %v975
      %1309 = vmatmul.bf16.gmra.mxu0 %v332
      %v1310 = vpop.f32.mrf.mxu0
      %v1311 = vadd.f32 %v1177, %v1310
      %v1312 = vpop.f32.mrf.mxu0
      %v1313 = vadd.f32 %v1179, %v1312
      %1314 = vmatmul.bf16.gmra.mxu0 %v334
      %v1315 = vpop.f32.mrf.mxu0
      %v1316 = vadd.f32 %v1182, %v1315
      %v1317 = vpop.f32.mrf.mxu0
      %v1318 = vadd.f32 %v1184, %v1317
      %1319 = vmatmul.bf16.gmra.mxu0 %v336
      %v1320 = vpop.f32.mrf.mxu0
      %v1321 = vadd.f32 %v1187, %v1320
      %v1322 = vpop.f32.mrf.mxu0
      %v1323 = vadd.f32 %v1189, %v1322
      %1324 = vmatmul.bf16.gmra.mxu0 %v338
      %v1325 = vpop.f32.mrf.mxu0
      %v1326 = vadd.f32 %v1192, %v1325
      %v1327 = vpop.f32.mrf.mxu0
      %v1328 = vadd.f32 %v1194, %v1327
      %1329 = vmatmul.bf16.gmra.mxu0 %v340
      %v1330 = vpop.f32.mrf.mxu0
      %v1331 = vadd.f32 %v1197, %v1330
      %v1332 = vpop.f32.mrf.mxu0
      %v1333 = vadd.f32 %v1199, %v1332
      %1334 = vmatmul.bf16.gmra.mxu0 %v342
      %v1335 = vpop.f32.mrf.mxu0
      %v1336 = vadd.f32 %v1202, %v1335
      %v1337 = vpop.f32.mrf.mxu0
      %v1338 = vadd.f32 %v1204, %v1337
      %1339 = vmatmul.bf16.gmra.mxu0 %v344
      %v1340 = vpop.f32.mrf.mxu0
      %v1341 = vadd.f32 %v1207, %v1340
      %v1342 = vpop.f32.mrf.mxu0
      %v1343 = vadd.f32 %v1209, %v1342
      %1344 = vmatmul.bf16.gmra.mxu0 %v346
      %v1345 = vpop.f32.mrf.mxu0
      %v1346 = vadd.f32 %v1212, %v1345
      %v1347 = vpop.f32.mrf.mxu0
      %v1348 = vadd.f32 %v1214, %v1347
      %1349 = vmatmul.bf16.gmra.mxu0 %v348
      %v1350 = vpop.f32.mrf.mxu0
      %v1351 = vadd.f32 %v1217, %v1350
      %v1352 = vpop.f32.mrf.mxu0
      %v1353 = vadd.f32 %v1219, %v1352
      %1354 = vmatmul.bf16.gmra.mxu0 %v350
      %v1355 = vpop.f32.mrf.mxu0
      %v1356 = vadd.f32 %v1222, %v1355
      %v1357 = vpop.f32.mrf.mxu0
      %v1358 = vadd.f32 %v1224, %v1357
      %1359 = vmatmul.bf16.gmra.mxu0 %v352
      %v1360 = vpop.f32.mrf.mxu0
      %v1361 = vadd.f32 %v1227, %v1360
      %v1362 = vpop.f32.mrf.mxu0
      %v1363 = vadd.f32 %v1229, %v1362
      %1364 = vmatmul.bf16.gmra.mxu0 %v354
      %v1365 = vpop.f32.mrf.mxu0
      %v1366 = vadd.f32 %v1232, %v1365
      %v1367 = vpop.f32.mrf.mxu0
      %v1368 = vadd.f32 %v1234, %v1367
      %1369 = vmatmul.bf16.gmra.mxu0 %v356
      %v1370 = vpop.f32.mrf.mxu0
      %v1371 = vadd.f32 %v1237, %v1370
      %v1372 = vpop.f32.mrf.mxu0
      %v1373 = vadd.f32 %v1239, %v1372
      %1374 = vmatmul.bf16.gmra.mxu0 %v358
      %v1375 = vpop.f32.mrf.mxu0
      %v1376 = vadd.f32 %v1242, %v1375
      %v1377 = vpop.f32.mrf.mxu0
      %v1378 = vadd.f32 %v1244, %v1377
      %1379 = vmatmul.bf16.gmra.mxu0 %v360
      %v1380 = vpop.f32.mrf.mxu0
      %v1381 = vadd.f32 %v1247, %v1380
      %v1382 = vpop.f32.mrf.mxu0
      %v1383 = vadd.f32 %v1249, %v1382
      %1384 = vmatmul.bf16.gmra.mxu0 %v362
      %v1385 = vpop.f32.mrf.mxu0
      %v1386 = vadd.f32 %v1252, %v1385
      %v1387 = vpop.f32.mrf.mxu0
      %v1388 = vadd.f32 %v1254, %v1387
      %1389 = vmatmul.bf16.gmra.mxu0 %v364
      %v1390 = vpop.f32.mrf.mxu0
      %v1391 = vadd.f32 %v1257, %v1390
      %v1392 = vpop.f32.mrf.mxu0
      %v1393 = vadd.f32 %v1259, %v1392
      %1394 = vmatmul.bf16.gmra.mxu0 %v366
      %v1395 = vpop.f32.mrf.mxu0
      %v1396 = vadd.f32 %v1262, %v1395
      %v1397 = vpop.f32.mrf.mxu0
      %v1398 = vadd.f32 %v1264, %v1397
      %1399 = vmatmul.bf16.gmra.mxu0 %v368
      %v1400 = vpop.f32.mrf.mxu0
      %v1401 = vadd.f32 %v1267, %v1400
      %v1402 = vpop.f32.mrf.mxu0
      %v1403 = vadd.f32 %v1269, %v1402
      %1404 = vmatmul.bf16.gmra.mxu0 %v370
      %v1405 = vpop.f32.mrf.mxu0
      %v1406 = vadd.f32 %v1272, %v1405
      %v1407 = vpop.f32.mrf.mxu0
      %v1408 = vadd.f32 %v1274, %v1407
      %1409 = vmatmul.bf16.gmra.mxu0 %v372
      %v1410 = vpop.f32.mrf.mxu0
      %v1411 = vadd.f32 %v1277, %v1410
      %v1412 = vpop.f32.mrf.mxu0
      %v1413 = vadd.f32 %v1279, %v1412
      %1414 = vmatmul.bf16.gmra.mxu0 %v374
      %v1415 = vpop.f32.mrf.mxu0
      %v1416 = vadd.f32 %v1282, %v1415
      %v1417 = vpop.f32.mrf.mxu0
      %v1418 = vadd.f32 %v1284, %v1417
      %1419 = vmatmul.bf16.gmra.mxu0 %v376
      %v1420 = vpop.f32.mrf.mxu0
      %v1421 = vadd.f32 %v1287, %v1420
      %v1422 = vpop.f32.mrf.mxu0
      %v1423 = vadd.f32 %v1289, %v1422
      %1424 = vmatmul.bf16.gmra.mxu0 %v378
      %v1425 = vpop.f32.mrf.mxu0
      %v1426 = vadd.f32 %v1292, %v1425
      %v1427 = vpop.f32.mrf.mxu0
      %v1428 = vadd.f32 %v1294, %v1427
      %1429 = vmatmul.bf16.gmra.mxu0 %v380
      %v1430 = vpop.f32.mrf.mxu0
      %v1431 = vadd.f32 %v1297, %v1430
      %v1432 = vpop.f32.mrf.mxu0
      %v1433 = vadd.f32 %v1299, %v1432
      %1434 = vdwg.mxu0
      %1435 = vmatpush.bf16.msra.mxu0 %v968
      %1436 = vmatpush.bf16.msra.mxu0 %v960
      %1437 = vmatpush.bf16.msra.mxu0 %v952
      %1438 = vmatpush.bf16.msra.mxu0 %v944
      %1439 = vmatpush.bf16.msra.mxu0 %v936
      %1440 = vmatpush.bf16.msra.mxu0 %v928
      %1441 = vmatpush.bf16.msra.mxu0 %v920
      %1442 = vmatpush.bf16.msra.mxu0 %v912
      %1443 = vmatmul.bf16.gmra.mxu0 %v331
      %v1444 = vpop.f32.mrf.mxu0
      %v1445 = vadd.f32 %v512, %v1444
      %v1446 = vpop.f32.mrf.mxu0
      %v1447 = vadd.f32 %v512, %v1446
      %1448 = vmatmul.bf16.gmra.mxu0 %v333
      %v1449 = vpop.f32.mrf.mxu0
      %v1450 = vadd.f32 %v512, %v1449
      %v1451 = vpop.f32.mrf.mxu0
      %v1452 = vadd.f32 %v512, %v1451
      %1453 = vmatmul.bf16.gmra.mxu0 %v335
      %v1454 = vpop.f32.mrf.mxu0
      %v1455 = vadd.f32 %v512, %v1454
      %v1456 = vpop.f32.mrf.mxu0
      %v1457 = vadd.f32 %v512, %v1456
      %1458 = vmatmul.bf16.gmra.mxu0 %v337
      %v1459 = vpop.f32.mrf.mxu0
      %v1460 = vadd.f32 %v512, %v1459
      %v1461 = vpop.f32.mrf.mxu0
      %v1462 = vadd.f32 %v512, %v1461
      %1463 = vmatmul.bf16.gmra.mxu0 %v339
      %v1464 = vpop.f32.mrf.mxu0
      %v1465 = vadd.f32 %v512, %v1464
      %v1466 = vpop.f32.mrf.mxu0
      %v1467 = vadd.f32 %v512, %v1466
      %1468 = vmatmul.bf16.gmra.mxu0 %v341
      %v1469 = vpop.f32.mrf.mxu0
      %v1470 = vadd.f32 %v512, %v1469
      %v1471 = vpop.f32.mrf.mxu0
      %v1472 = vadd.f32 %v512, %v1471
      %1473 = vmatmul.bf16.gmra.mxu0 %v343
      %v1474 = vpop.f32.mrf.mxu0
      %v1475 = vadd.f32 %v512, %v1474
      %v1476 = vpop.f32.mrf.mxu0
      %v1477 = vadd.f32 %v512, %v1476
      %1478 = vmatmul.bf16.gmra.mxu0 %v345
      %v1479 = vpop.f32.mrf.mxu0
      %v1480 = vadd.f32 %v512, %v1479
      %v1481 = vpop.f32.mrf.mxu0
      %v1482 = vadd.f32 %v512, %v1481
      %1483 = vmatmul.bf16.gmra.mxu0 %v347
      %v1484 = vpop.f32.mrf.mxu0
      %v1485 = vadd.f32 %v512, %v1484
      %v1486 = vpop.f32.mrf.mxu0
      %v1487 = vadd.f32 %v512, %v1486
      %1488 = vmatmul.bf16.gmra.mxu0 %v349
      %v1489 = vpop.f32.mrf.mxu0
      %v1490 = vadd.f32 %v512, %v1489
      %v1491 = vpop.f32.mrf.mxu0
      %v1492 = vadd.f32 %v512, %v1491
      %1493 = vmatmul.bf16.gmra.mxu0 %v351
      %v1494 = vpop.f32.mrf.mxu0
      %v1495 = vadd.f32 %v512, %v1494
      %v1496 = vpop.f32.mrf.mxu0
      %v1497 = vadd.f32 %v512, %v1496
      %1498 = vmatmul.bf16.gmra.mxu0 %v353
      %v1499 = vpop.f32.mrf.mxu0
      %v1500 = vadd.f32 %v512, %v1499
      %v1501 = vpop.f32.mrf.mxu0
      %v1502 = vadd.f32 %v512, %v1501
      %1503 = vmatmul.bf16.gmra.mxu0 %v355
      %v1504 = vpop.f32.mrf.mxu0
      %v1505 = vadd.f32 %v512, %v1504
      %v1506 = vpop.f32.mrf.mxu0
      %v1507 = vadd.f32 %v512, %v1506
      %1508 = vmatmul.bf16.gmra.mxu0 %v357
      %v1509 = vpop.f32.mrf.mxu0
      %v1510 = vadd.f32 %v512, %v1509
      %v1511 = vpop.f32.mrf.mxu0
      %v1512 = vadd.f32 %v512, %v1511
      %1513 = vmatmul.bf16.gmra.mxu0 %v359
      %v1514 = vpop.f32.mrf.mxu0
      %v1515 = vadd.f32 %v512, %v1514
      %v1516 = vpop.f32.mrf.mxu0
      %v1517 = vadd.f32 %v512, %v1516
      %1518 = vmatmul.bf16.gmra.mxu0 %v361
      %v1519 = vpop.f32.mrf.mxu0
      %v1520 = vadd.f32 %v512, %v1519
      %v1521 = vpop.f32.mrf.mxu0
      %v1522 = vadd.f32 %v512, %v1521
      %1523 = vmatmul.bf16.gmra.mxu0 %v363
      %v1524 = vpop.f32.mrf.mxu0
      %v1525 = vadd.f32 %v512, %v1524
      %v1526 = vpop.f32.mrf.mxu0
      %v1527 = vadd.f32 %v512, %v1526
      %1528 = vmatmul.bf16.gmra.mxu0 %v365
      %v1529 = vpop.f32.mrf.mxu0
      %v1530 = vadd.f32 %v512, %v1529
      %v1531 = vpop.f32.mrf.mxu0
      %v1532 = vadd.f32 %v512, %v1531
      %1533 = vmatmul.bf16.gmra.mxu0 %v367
      %v1534 = vpop.f32.mrf.mxu0
      %v1535 = vadd.f32 %v512, %v1534
      %v1536 = vpop.f32.mrf.mxu0
      %v1537 = vadd.f32 %v512, %v1536
      %1538 = vmatmul.bf16.gmra.mxu0 %v369
      %v1539 = vpop.f32.mrf.mxu0
      %v1540 = vadd.f32 %v512, %v1539
      %v1541 = vpop.f32.mrf.mxu0
      %v1542 = vadd.f32 %v512, %v1541
      %1543 = vmatmul.bf16.gmra.mxu0 %v371
      %v1544 = vpop.f32.mrf.mxu0
      %v1545 = vadd.f32 %v512, %v1544
      %v1546 = vpop.f32.mrf.mxu0
      %v1547 = vadd.f32 %v512, %v1546
      %1548 = vmatmul.bf16.gmra.mxu0 %v373
      %v1549 = vpop.f32.mrf.mxu0
      %v1550 = vadd.f32 %v512, %v1549
      %v1551 = vpop.f32.mrf.mxu0
      %v1552 = vadd.f32 %v512, %v1551
      %1553 = vmatmul.bf16.gmra.mxu0 %v375
      %v1554 = vpop.f32.mrf.mxu0
      %v1555 = vadd.f32 %v512, %v1554
      %v1556 = vpop.f32.mrf.mxu0
      %v1557 = vadd.f32 %v512, %v1556
      %1558 = vmatmul.bf16.gmra.mxu0 %v377
      %v1559 = vpop.f32.mrf.mxu0
      %v1560 = vadd.f32 %v512, %v1559
      %v1561 = vpop.f32.mrf.mxu0
      %v1562 = vadd.f32 %v512, %v1561
      %1563 = vmatmul.bf16.gmra.mxu0 %v379
      %v1564 = vpop.f32.mrf.mxu0
      %v1565 = vadd.f32 %v512, %v1564
      %v1566 = vpop.f32.mrf.mxu0
      %v1567 = vadd.f32 %v512, %v1566
      %1568 = vdwg.mxu0
      %1569 = vmatpush.bf16.msra.mxu0 %v1032
      %1570 = vmatpush.bf16.msra.mxu0 %v1024
      %1571 = vmatpush.bf16.msra.mxu0 %v1016
      %1572 = vmatpush.bf16.msra.mxu0 %v1008
      %1573 = vmatpush.bf16.msra.mxu0 %v1000
      %1574 = vmatpush.bf16.msra.mxu0 %v992
      %1575 = vmatpush.bf16.msra.mxu0 %v984
      %1576 = vmatpush.bf16.msra.mxu0 %v976
      %1577 = vmatmul.bf16.gmra.mxu0 %v332
      %v1578 = vpop.f32.mrf.mxu0
      %v1579 = vadd.f32 %v1445, %v1578
      %v1580 = vpop.f32.mrf.mxu0
      %v1581 = vadd.f32 %v1447, %v1580
      %1582 = vmatmul.bf16.gmra.mxu0 %v334
      %v1583 = vpop.f32.mrf.mxu0
      %v1584 = vadd.f32 %v1450, %v1583
      %v1585 = vpop.f32.mrf.mxu0
      %v1586 = vadd.f32 %v1452, %v1585
      %1587 = vmatmul.bf16.gmra.mxu0 %v336
      %v1588 = vpop.f32.mrf.mxu0
      %v1589 = vadd.f32 %v1455, %v1588
      %v1590 = vpop.f32.mrf.mxu0
      %v1591 = vadd.f32 %v1457, %v1590
      %1592 = vmatmul.bf16.gmra.mxu0 %v338
      %v1593 = vpop.f32.mrf.mxu0
      %v1594 = vadd.f32 %v1460, %v1593
      %v1595 = vpop.f32.mrf.mxu0
      %v1596 = vadd.f32 %v1462, %v1595
      %1597 = vmatmul.bf16.gmra.mxu0 %v340
      %v1598 = vpop.f32.mrf.mxu0
      %v1599 = vadd.f32 %v1465, %v1598
      %v1600 = vpop.f32.mrf.mxu0
      %v1601 = vadd.f32 %v1467, %v1600
      %1602 = vmatmul.bf16.gmra.mxu0 %v342
      %v1603 = vpop.f32.mrf.mxu0
      %v1604 = vadd.f32 %v1470, %v1603
      %v1605 = vpop.f32.mrf.mxu0
      %v1606 = vadd.f32 %v1472, %v1605
      %1607 = vmatmul.bf16.gmra.mxu0 %v344
      %v1608 = vpop.f32.mrf.mxu0
      %v1609 = vadd.f32 %v1475, %v1608
      %v1610 = vpop.f32.mrf.mxu0
      %v1611 = vadd.f32 %v1477, %v1610
      %1612 = vmatmul.bf16.gmra.mxu0 %v346
      %v1613 = vpop.f32.mrf.mxu0
      %v1614 = vadd.f32 %v1480, %v1613
      %v1615 = vpop.f32.mrf.mxu0
      %v1616 = vadd.f32 %v1482, %v1615
      %1617 = vmatmul.bf16.gmra.mxu0 %v348
      %v1618 = vpop.f32.mrf.mxu0
      %v1619 = vadd.f32 %v1485, %v1618
      %v1620 = vpop.f32.mrf.mxu0
      %v1621 = vadd.f32 %v1487, %v1620
      %1622 = vmatmul.bf16.gmra.mxu0 %v350
      %v1623 = vpop.f32.mrf.mxu0
      %v1624 = vadd.f32 %v1490, %v1623
      %v1625 = vpop.f32.mrf.mxu0
      %v1626 = vadd.f32 %v1492, %v1625
      %1627 = vmatmul.bf16.gmra.mxu0 %v352
      %v1628 = vpop.f32.mrf.mxu0
      %v1629 = vadd.f32 %v1495, %v1628
      %v1630 = vpop.f32.mrf.mxu0
      %v1631 = vadd.f32 %v1497, %v1630
      %1632 = vmatmul.bf16.gmra.mxu0 %v354
      %v1633 = vpop.f32.mrf.mxu0
      %v1634 = vadd.f32 %v1500, %v1633
      %v1635 = vpop.f32.mrf.mxu0
      %v1636 = vadd.f32 %v1502, %v1635
      %1637 = vmatmul.bf16.gmra.mxu0 %v356
      %v1638 = vpop.f32.mrf.mxu0
      %v1639 = vadd.f32 %v1505, %v1638
      %v1640 = vpop.f32.mrf.mxu0
      %v1641 = vadd.f32 %v1507, %v1640
      %1642 = vmatmul.bf16.gmra.mxu0 %v358
      %v1643 = vpop.f32.mrf.mxu0
      %v1644 = vadd.f32 %v1510, %v1643
      %v1645 = vpop.f32.mrf.mxu0
      %v1646 = vadd.f32 %v1512, %v1645
      %1647 = vmatmul.bf16.gmra.mxu0 %v360
      %v1648 = vpop.f32.mrf.mxu0
      %v1649 = vadd.f32 %v1515, %v1648
      %v1650 = vpop.f32.mrf.mxu0
      %v1651 = vadd.f32 %v1517, %v1650
      %1652 = vmatmul.bf16.gmra.mxu0 %v362
      %v1653 = vpop.f32.mrf.mxu0
      %v1654 = vadd.f32 %v1520, %v1653
      %v1655 = vpop.f32.mrf.mxu0
      %v1656 = vadd.f32 %v1522, %v1655
      %1657 = vmatmul.bf16.gmra.mxu0 %v364
      %v1658 = vpop.f32.mrf.mxu0
      %v1659 = vadd.f32 %v1525, %v1658
      %v1660 = vpop.f32.mrf.mxu0
      %v1661 = vadd.f32 %v1527, %v1660
      %1662 = vmatmul.bf16.gmra.mxu0 %v366
      %v1663 = vpop.f32.mrf.mxu0
      %v1664 = vadd.f32 %v1530, %v1663
      %v1665 = vpop.f32.mrf.mxu0
      %v1666 = vadd.f32 %v1532, %v1665
      %1667 = vmatmul.bf16.gmra.mxu0 %v368
      %v1668 = vpop.f32.mrf.mxu0
      %v1669 = vadd.f32 %v1535, %v1668
      %v1670 = vpop.f32.mrf.mxu0
      %v1671 = vadd.f32 %v1537, %v1670
      %1672 = vmatmul.bf16.gmra.mxu0 %v370
      %v1673 = vpop.f32.mrf.mxu0
      %v1674 = vadd.f32 %v1540, %v1673
      %v1675 = vpop.f32.mrf.mxu0
      %v1676 = vadd.f32 %v1542, %v1675
      %1677 = vmatmul.bf16.gmra.mxu0 %v372
      %v1678 = vpop.f32.mrf.mxu0
      %v1679 = vadd.f32 %v1545, %v1678
      %v1680 = vpop.f32.mrf.mxu0
      %v1681 = vadd.f32 %v1547, %v1680
      %1682 = vmatmul.bf16.gmra.mxu0 %v374
      %v1683 = vpop.f32.mrf.mxu0
      %v1684 = vadd.f32 %v1550, %v1683
      %v1685 = vpop.f32.mrf.mxu0
      %v1686 = vadd.f32 %v1552, %v1685
      %1687 = vmatmul.bf16.gmra.mxu0 %v376
      %v1688 = vpop.f32.mrf.mxu0
      %v1689 = vadd.f32 %v1555, %v1688
      %v1690 = vpop.f32.mrf.mxu0
      %v1691 = vadd.f32 %v1557, %v1690
      %1692 = vmatmul.bf16.gmra.mxu0 %v378
      %v1693 = vpop.f32.mrf.mxu0
      %v1694 = vadd.f32 %v1560, %v1693
      %v1695 = vpop.f32.mrf.mxu0
      %v1696 = vadd.f32 %v1562, %v1695
      %1697 = vmatmul.bf16.gmra.mxu0 %v380
      %v1698 = vpop.f32.mrf.mxu0
      %v1699 = vadd.f32 %v1565, %v1698
      %v1700 = vpop.f32.mrf.mxu0
      %v1701 = vadd.f32 %v1567, %v1700
      %1702 = vdwg.mxu0
      %1703 = vmatpush.bf16.msra.mxu0 %v969
      %1704 = vmatpush.bf16.msra.mxu0 %v961
      %1705 = vmatpush.bf16.msra.mxu0 %v953
      %1706 = vmatpush.bf16.msra.mxu0 %v945
      %1707 = vmatpush.bf16.msra.mxu0 %v937
      %1708 = vmatpush.bf16.msra.mxu0 %v929
      %1709 = vmatpush.bf16.msra.mxu0 %v921
      %1710 = vmatpush.bf16.msra.mxu0 %v913
      %1711 = vmatmul.bf16.gmra.mxu0 %v331
      %v1712 = vpop.f32.mrf.mxu0
      %v1713 = vadd.f32 %v513, %v1712
      %v1714 = vpop.f32.mrf.mxu0
      %v1715 = vadd.f32 %v513, %v1714
      %1716 = vmatmul.bf16.gmra.mxu0 %v333
      %v1717 = vpop.f32.mrf.mxu0
      %v1718 = vadd.f32 %v513, %v1717
      %v1719 = vpop.f32.mrf.mxu0
      %v1720 = vadd.f32 %v513, %v1719
      %1721 = vmatmul.bf16.gmra.mxu0 %v335
      %v1722 = vpop.f32.mrf.mxu0
      %v1723 = vadd.f32 %v513, %v1722
      %v1724 = vpop.f32.mrf.mxu0
      %v1725 = vadd.f32 %v513, %v1724
      %1726 = vmatmul.bf16.gmra.mxu0 %v337
      %v1727 = vpop.f32.mrf.mxu0
      %v1728 = vadd.f32 %v513, %v1727
      %v1729 = vpop.f32.mrf.mxu0
      %v1730 = vadd.f32 %v513, %v1729
      %1731 = vmatmul.bf16.gmra.mxu0 %v339
      %v1732 = vpop.f32.mrf.mxu0
      %v1733 = vadd.f32 %v513, %v1732
      %v1734 = vpop.f32.mrf.mxu0
      %v1735 = vadd.f32 %v513, %v1734
      %1736 = vmatmul.bf16.gmra.mxu0 %v341
      %v1737 = vpop.f32.mrf.mxu0
      %v1738 = vadd.f32 %v513, %v1737
      %v1739 = vpop.f32.mrf.mxu0
      %v1740 = vadd.f32 %v513, %v1739
      %1741 = vmatmul.bf16.gmra.mxu0 %v343
      %v1742 = vpop.f32.mrf.mxu0
      %v1743 = vadd.f32 %v513, %v1742
      %v1744 = vpop.f32.mrf.mxu0
      %v1745 = vadd.f32 %v513, %v1744
      %1746 = vmatmul.bf16.gmra.mxu0 %v345
      %v1747 = vpop.f32.mrf.mxu0
      %v1748 = vadd.f32 %v513, %v1747
      %v1749 = vpop.f32.mrf.mxu0
      %v1750 = vadd.f32 %v513, %v1749
      %1751 = vmatmul.bf16.gmra.mxu0 %v347
      %v1752 = vpop.f32.mrf.mxu0
      %v1753 = vadd.f32 %v513, %v1752
      %v1754 = vpop.f32.mrf.mxu0
      %v1755 = vadd.f32 %v513, %v1754
      %1756 = vmatmul.bf16.gmra.mxu0 %v349
      %v1757 = vpop.f32.mrf.mxu0
      %v1758 = vadd.f32 %v513, %v1757
      %v1759 = vpop.f32.mrf.mxu0
      %v1760 = vadd.f32 %v513, %v1759
      %1761 = vmatmul.bf16.gmra.mxu0 %v351
      %v1762 = vpop.f32.mrf.mxu0
      %v1763 = vadd.f32 %v513, %v1762
      %v1764 = vpop.f32.mrf.mxu0
      %v1765 = vadd.f32 %v513, %v1764
      %1766 = vmatmul.bf16.gmra.mxu0 %v353
      %v1767 = vpop.f32.mrf.mxu0
      %v1768 = vadd.f32 %v513, %v1767
      %v1769 = vpop.f32.mrf.mxu0
      %v1770 = vadd.f32 %v513, %v1769
      %1771 = vmatmul.bf16.gmra.mxu0 %v355
      %v1772 = vpop.f32.mrf.mxu0
      %v1773 = vadd.f32 %v513, %v1772
      %v1774 = vpop.f32.mrf.mxu0
      %v1775 = vadd.f32 %v513, %v1774
      %1776 = vmatmul.bf16.gmra.mxu0 %v357
      %v1777 = vpop.f32.mrf.mxu0
      %v1778 = vadd.f32 %v513, %v1777
      %v1779 = vpop.f32.mrf.mxu0
      %v1780 = vadd.f32 %v513, %v1779
      %1781 = vmatmul.bf16.gmra.mxu0 %v359
      %v1782 = vpop.f32.mrf.mxu0
      %v1783 = vadd.f32 %v513, %v1782
      %v1784 = vpop.f32.mrf.mxu0
      %v1785 = vadd.f32 %v513, %v1784
      %1786 = vmatmul.bf16.gmra.mxu0 %v361
      %v1787 = vpop.f32.mrf.mxu0
      %v1788 = vadd.f32 %v513, %v1787
      %v1789 = vpop.f32.mrf.mxu0
      %v1790 = vadd.f32 %v513, %v1789
      %1791 = vmatmul.bf16.gmra.mxu0 %v363
      %v1792 = vpop.f32.mrf.mxu0
      %v1793 = vadd.f32 %v513, %v1792
      %v1794 = vpop.f32.mrf.mxu0
      %v1795 = vadd.f32 %v513, %v1794
      %1796 = vmatmul.bf16.gmra.mxu0 %v365
      %v1797 = vpop.f32.mrf.mxu0
      %v1798 = vadd.f32 %v513, %v1797
      %v1799 = vpop.f32.mrf.mxu0
      %v1800 = vadd.f32 %v513, %v1799
      %1801 = vmatmul.bf16.gmra.mxu0 %v367
      %v1802 = vpop.f32.mrf.mxu0
      %v1803 = vadd.f32 %v513, %v1802
      %v1804 = vpop.f32.mrf.mxu0
      %v1805 = vadd.f32 %v513, %v1804
      %1806 = vmatmul.bf16.gmra.mxu0 %v369
      %v1807 = vpop.f32.mrf.mxu0
      %v1808 = vadd.f32 %v513, %v1807
      %v1809 = vpop.f32.mrf.mxu0
      %v1810 = vadd.f32 %v513, %v1809
      %1811 = vmatmul.bf16.gmra.mxu0 %v371
      %v1812 = vpop.f32.mrf.mxu0
      %v1813 = vadd.f32 %v513, %v1812
      %v1814 = vpop.f32.mrf.mxu0
      %v1815 = vadd.f32 %v513, %v1814
      %1816 = vmatmul.bf16.gmra.mxu0 %v373
      %v1817 = vpop.f32.mrf.mxu0
      %v1818 = vadd.f32 %v513, %v1817
      %v1819 = vpop.f32.mrf.mxu0
      %v1820 = vadd.f32 %v513, %v1819
      %1821 = vmatmul.bf16.gmra.mxu0 %v375
      %v1822 = vpop.f32.mrf.mxu0
      %v1823 = vadd.f32 %v513, %v1822
      %v1824 = vpop.f32.mrf.mxu0
      %v1825 = vadd.f32 %v513, %v1824
      %1826 = vmatmul.bf16.gmra.mxu0 %v377
      %v1827 = vpop.f32.mrf.mxu0
      %v1828 = vadd.f32 %v513, %v1827
      %v1829 = vpop.f32.mrf.mxu0
      %v1830 = vadd.f32 %v513, %v1829
      %1831 = vmatmul.bf16.gmra.mxu0 %v379
      %v1832 = vpop.f32.mrf.mxu0
      %v1833 = vadd.f32 %v513, %v1832
      %v1834 = vpop.f32.mrf.mxu0
      %v1835 = vadd.f32 %v513, %v1834
      %1836 = vdwg.mxu0
      %1837 = vmatpush.bf16.msra.mxu0 %v1033
      %1838 = vmatpush.bf16.msra.mxu0 %v1025
      %1839 = vmatpush.bf16.msra.mxu0 %v1017
      %1840 = vmatpush.bf16.msra.mxu0 %v1009
      %1841 = vmatpush.bf16.msra.mxu0 %v1001
      %1842 = vmatpush.bf16.msra.mxu0 %v993
      %1843 = vmatpush.bf16.msra.mxu0 %v985
      %1844 = vmatpush.bf16.msra.mxu0 %v977
      %1845 = vmatmul.bf16.gmra.mxu0 %v332
      %v1846 = vpop.f32.mrf.mxu0
      %v1847 = vadd.f32 %v1713, %v1846
      %v1848 = vpop.f32.mrf.mxu0
      %v1849 = vadd.f32 %v1715, %v1848
      %1850 = vmatmul.bf16.gmra.mxu0 %v334
      %v1851 = vpop.f32.mrf.mxu0
      %v1852 = vadd.f32 %v1718, %v1851
      %v1853 = vpop.f32.mrf.mxu0
      %v1854 = vadd.f32 %v1720, %v1853
      %1855 = vmatmul.bf16.gmra.mxu0 %v336
      %v1856 = vpop.f32.mrf.mxu0
      %v1857 = vadd.f32 %v1723, %v1856
      %v1858 = vpop.f32.mrf.mxu0
      %v1859 = vadd.f32 %v1725, %v1858
      %1860 = vmatmul.bf16.gmra.mxu0 %v338
      %v1861 = vpop.f32.mrf.mxu0
      %v1862 = vadd.f32 %v1728, %v1861
      %v1863 = vpop.f32.mrf.mxu0
      %v1864 = vadd.f32 %v1730, %v1863
      %1865 = vmatmul.bf16.gmra.mxu0 %v340
      %v1866 = vpop.f32.mrf.mxu0
      %v1867 = vadd.f32 %v1733, %v1866
      %v1868 = vpop.f32.mrf.mxu0
      %v1869 = vadd.f32 %v1735, %v1868
      %1870 = vmatmul.bf16.gmra.mxu0 %v342
      %v1871 = vpop.f32.mrf.mxu0
      %v1872 = vadd.f32 %v1738, %v1871
      %v1873 = vpop.f32.mrf.mxu0
      %v1874 = vadd.f32 %v1740, %v1873
      %1875 = vmatmul.bf16.gmra.mxu0 %v344
      %v1876 = vpop.f32.mrf.mxu0
      %v1877 = vadd.f32 %v1743, %v1876
      %v1878 = vpop.f32.mrf.mxu0
      %v1879 = vadd.f32 %v1745, %v1878
      %1880 = vmatmul.bf16.gmra.mxu0 %v346
      %v1881 = vpop.f32.mrf.mxu0
      %v1882 = vadd.f32 %v1748, %v1881
      %v1883 = vpop.f32.mrf.mxu0
      %v1884 = vadd.f32 %v1750, %v1883
      %1885 = vmatmul.bf16.gmra.mxu0 %v348
      %v1886 = vpop.f32.mrf.mxu0
      %v1887 = vadd.f32 %v1753, %v1886
      %v1888 = vpop.f32.mrf.mxu0
      %v1889 = vadd.f32 %v1755, %v1888
      %1890 = vmatmul.bf16.gmra.mxu0 %v350
      %v1891 = vpop.f32.mrf.mxu0
      %v1892 = vadd.f32 %v1758, %v1891
      %v1893 = vpop.f32.mrf.mxu0
      %v1894 = vadd.f32 %v1760, %v1893
      %1895 = vmatmul.bf16.gmra.mxu0 %v352
      %v1896 = vpop.f32.mrf.mxu0
      %v1897 = vadd.f32 %v1763, %v1896
      %v1898 = vpop.f32.mrf.mxu0
      %v1899 = vadd.f32 %v1765, %v1898
      %1900 = vmatmul.bf16.gmra.mxu0 %v354
      %v1901 = vpop.f32.mrf.mxu0
      %v1902 = vadd.f32 %v1768, %v1901
      %v1903 = vpop.f32.mrf.mxu0
      %v1904 = vadd.f32 %v1770, %v1903
      %1905 = vmatmul.bf16.gmra.mxu0 %v356
      %v1906 = vpop.f32.mrf.mxu0
      %v1907 = vadd.f32 %v1773, %v1906
      %v1908 = vpop.f32.mrf.mxu0
      %v1909 = vadd.f32 %v1775, %v1908
      %1910 = vmatmul.bf16.gmra.mxu0 %v358
      %v1911 = vpop.f32.mrf.mxu0
      %v1912 = vadd.f32 %v1778, %v1911
      %v1913 = vpop.f32.mrf.mxu0
      %v1914 = vadd.f32 %v1780, %v1913
      %1915 = vmatmul.bf16.gmra.mxu0 %v360
      %v1916 = vpop.f32.mrf.mxu0
      %v1917 = vadd.f32 %v1783, %v1916
      %v1918 = vpop.f32.mrf.mxu0
      %v1919 = vadd.f32 %v1785, %v1918
      %1920 = vmatmul.bf16.gmra.mxu0 %v362
      %v1921 = vpop.f32.mrf.mxu0
      %v1922 = vadd.f32 %v1788, %v1921
      %v1923 = vpop.f32.mrf.mxu0
      %v1924 = vadd.f32 %v1790, %v1923
      %1925 = vmatmul.bf16.gmra.mxu0 %v364
      %v1926 = vpop.f32.mrf.mxu0
      %v1927 = vadd.f32 %v1793, %v1926
      %v1928 = vpop.f32.mrf.mxu0
      %v1929 = vadd.f32 %v1795, %v1928
      %1930 = vmatmul.bf16.gmra.mxu0 %v366
      %v1931 = vpop.f32.mrf.mxu0
      %v1932 = vadd.f32 %v1798, %v1931
      %v1933 = vpop.f32.mrf.mxu0
      %v1934 = vadd.f32 %v1800, %v1933
      %1935 = vmatmul.bf16.gmra.mxu0 %v368
      %v1936 = vpop.f32.mrf.mxu0
      %v1937 = vadd.f32 %v1803, %v1936
      %v1938 = vpop.f32.mrf.mxu0
      %v1939 = vadd.f32 %v1805, %v1938
      %1940 = vmatmul.bf16.gmra.mxu0 %v370
      %v1941 = vpop.f32.mrf.mxu0
      %v1942 = vadd.f32 %v1808, %v1941
      %v1943 = vpop.f32.mrf.mxu0
      %v1944 = vadd.f32 %v1810, %v1943
      %1945 = vmatmul.bf16.gmra.mxu0 %v372
      %v1946 = vpop.f32.mrf.mxu0
      %v1947 = vadd.f32 %v1813, %v1946
      %v1948 = vpop.f32.mrf.mxu0
      %v1949 = vadd.f32 %v1815, %v1948
      %1950 = vmatmul.bf16.gmra.mxu0 %v374
      %v1951 = vpop.f32.mrf.mxu0
      %v1952 = vadd.f32 %v1818, %v1951
      %v1953 = vpop.f32.mrf.mxu0
      %v1954 = vadd.f32 %v1820, %v1953
      %1955 = vmatmul.bf16.gmra.mxu0 %v376
      %v1956 = vpop.f32.mrf.mxu0
      %v1957 = vadd.f32 %v1823, %v1956
      %v1958 = vpop.f32.mrf.mxu0
      %v1959 = vadd.f32 %v1825, %v1958
      %1960 = vmatmul.bf16.gmra.mxu0 %v378
      %v1961 = vpop.f32.mrf.mxu0
      %v1962 = vadd.f32 %v1828, %v1961
      %v1963 = vpop.f32.mrf.mxu0
      %v1964 = vadd.f32 %v1830, %v1963
      %1965 = vmatmul.bf16.gmra.mxu0 %v380
      %v1966 = vpop.f32.mrf.mxu0
      %v1967 = vadd.f32 %v1833, %v1966
      %v1968 = vpop.f32.mrf.mxu0
      %v1969 = vadd.f32 %v1835, %v1968
      %1970 = vdwg.mxu0
      %1971 = vmatpush.bf16.msra.mxu0 %v970
      %1972 = vmatpush.bf16.msra.mxu0 %v962
      %1973 = vmatpush.bf16.msra.mxu0 %v954
      %1974 = vmatpush.bf16.msra.mxu0 %v946
      %1975 = vmatpush.bf16.msra.mxu0 %v938
      %1976 = vmatpush.bf16.msra.mxu0 %v930
      %1977 = vmatpush.bf16.msra.mxu0 %v922
      %1978 = vmatpush.bf16.msra.mxu0 %v914
      %1979 = vmatmul.bf16.gmra.mxu0 %v331
      %v1980 = vpop.f32.mrf.mxu0
      %v1981 = vadd.f32 %v514, %v1980
      %v1982 = vpop.f32.mrf.mxu0
      %v1983 = vadd.f32 %v514, %v1982
      %1984 = vmatmul.bf16.gmra.mxu0 %v333
      %v1985 = vpop.f32.mrf.mxu0
      %v1986 = vadd.f32 %v514, %v1985
      %v1987 = vpop.f32.mrf.mxu0
      %v1988 = vadd.f32 %v514, %v1987
      %1989 = vmatmul.bf16.gmra.mxu0 %v335
      %v1990 = vpop.f32.mrf.mxu0
      %v1991 = vadd.f32 %v514, %v1990
      %v1992 = vpop.f32.mrf.mxu0
      %v1993 = vadd.f32 %v514, %v1992
      %1994 = vmatmul.bf16.gmra.mxu0 %v337
      %v1995 = vpop.f32.mrf.mxu0
      %v1996 = vadd.f32 %v514, %v1995
      %v1997 = vpop.f32.mrf.mxu0
      %v1998 = vadd.f32 %v514, %v1997
      %1999 = vmatmul.bf16.gmra.mxu0 %v339
      %v2000 = vpop.f32.mrf.mxu0
      %v2001 = vadd.f32 %v514, %v2000
      %v2002 = vpop.f32.mrf.mxu0
      %v2003 = vadd.f32 %v514, %v2002
      %2004 = vmatmul.bf16.gmra.mxu0 %v341
      %v2005 = vpop.f32.mrf.mxu0
      %v2006 = vadd.f32 %v514, %v2005
      %v2007 = vpop.f32.mrf.mxu0
      %v2008 = vadd.f32 %v514, %v2007
      %2009 = vmatmul.bf16.gmra.mxu0 %v343
      %v2010 = vpop.f32.mrf.mxu0
      %v2011 = vadd.f32 %v514, %v2010
      %v2012 = vpop.f32.mrf.mxu0
      %v2013 = vadd.f32 %v514, %v2012
      %2014 = vmatmul.bf16.gmra.mxu0 %v345
      %v2015 = vpop.f32.mrf.mxu0
      %v2016 = vadd.f32 %v514, %v2015
      %v2017 = vpop.f32.mrf.mxu0
      %v2018 = vadd.f32 %v514, %v2017
      %2019 = vmatmul.bf16.gmra.mxu0 %v347
      %v2020 = vpop.f32.mrf.mxu0
      %v2021 = vadd.f32 %v514, %v2020
      %v2022 = vpop.f32.mrf.mxu0
      %v2023 = vadd.f32 %v514, %v2022
      %2024 = vmatmul.bf16.gmra.mxu0 %v349
      %v2025 = vpop.f32.mrf.mxu0
      %v2026 = vadd.f32 %v514, %v2025
      %v2027 = vpop.f32.mrf.mxu0
      %v2028 = vadd.f32 %v514, %v2027
      %2029 = vmatmul.bf16.gmra.mxu0 %v351
      %v2030 = vpop.f32.mrf.mxu0
      %v2031 = vadd.f32 %v514, %v2030
      %v2032 = vpop.f32.mrf.mxu0
      %v2033 = vadd.f32 %v514, %v2032
      %2034 = vmatmul.bf16.gmra.mxu0 %v353
      %v2035 = vpop.f32.mrf.mxu0
      %v2036 = vadd.f32 %v514, %v2035
      %v2037 = vpop.f32.mrf.mxu0
      %v2038 = vadd.f32 %v514, %v2037
      %2039 = vmatmul.bf16.gmra.mxu0 %v355
      %v2040 = vpop.f32.mrf.mxu0
      %v2041 = vadd.f32 %v514, %v2040
      %v2042 = vpop.f32.mrf.mxu0
      %v2043 = vadd.f32 %v514, %v2042
      %2044 = vmatmul.bf16.gmra.mxu0 %v357
      %v2045 = vpop.f32.mrf.mxu0
      %v2046 = vadd.f32 %v514, %v2045
      %v2047 = vpop.f32.mrf.mxu0
      %v2048 = vadd.f32 %v514, %v2047
      %2049 = vmatmul.bf16.gmra.mxu0 %v359
      %v2050 = vpop.f32.mrf.mxu0
      %v2051 = vadd.f32 %v514, %v2050
      %v2052 = vpop.f32.mrf.mxu0
      %v2053 = vadd.f32 %v514, %v2052
      %2054 = vmatmul.bf16.gmra.mxu0 %v361
      %v2055 = vpop.f32.mrf.mxu0
      %v2056 = vadd.f32 %v514, %v2055
      %v2057 = vpop.f32.mrf.mxu0
      %v2058 = vadd.f32 %v514, %v2057
      %2059 = vmatmul.bf16.gmra.mxu0 %v363
      %v2060 = vpop.f32.mrf.mxu0
      %v2061 = vadd.f32 %v514, %v2060
      %v2062 = vpop.f32.mrf.mxu0
      %v2063 = vadd.f32 %v514, %v2062
      %2064 = vmatmul.bf16.gmra.mxu0 %v365
      %v2065 = vpop.f32.mrf.mxu0
      %v2066 = vadd.f32 %v514, %v2065
      %v2067 = vpop.f32.mrf.mxu0
      %v2068 = vadd.f32 %v514, %v2067
      %2069 = vmatmul.bf16.gmra.mxu0 %v367
      %v2070 = vpop.f32.mrf.mxu0
      %v2071 = vadd.f32 %v514, %v2070
      %v2072 = vpop.f32.mrf.mxu0
      %v2073 = vadd.f32 %v514, %v2072
      %2074 = vmatmul.bf16.gmra.mxu0 %v369
      %v2075 = vpop.f32.mrf.mxu0
      %v2076 = vadd.f32 %v514, %v2075
      %v2077 = vpop.f32.mrf.mxu0
      %v2078 = vadd.f32 %v514, %v2077
      %2079 = vmatmul.bf16.gmra.mxu0 %v371
      %v2080 = vpop.f32.mrf.mxu0
      %v2081 = vadd.f32 %v514, %v2080
      %v2082 = vpop.f32.mrf.mxu0
      %v2083 = vadd.f32 %v514, %v2082
      %2084 = vmatmul.bf16.gmra.mxu0 %v373
      %v2085 = vpop.f32.mrf.mxu0
      %v2086 = vadd.f32 %v514, %v2085
      %v2087 = vpop.f32.mrf.mxu0
      %v2088 = vadd.f32 %v514, %v2087
      %2089 = vmatmul.bf16.gmra.mxu0 %v375
      %v2090 = vpop.f32.mrf.mxu0
      %v2091 = vadd.f32 %v514, %v2090
      %v2092 = vpop.f32.mrf.mxu0
      %v2093 = vadd.f32 %v514, %v2092
      %2094 = vmatmul.bf16.gmra.mxu0 %v377
      %v2095 = vpop.f32.mrf.mxu0
      %v2096 = vadd.f32 %v514, %v2095
      %v2097 = vpop.f32.mrf.mxu0
      %v2098 = vadd.f32 %v514, %v2097
      %2099 = vmatmul.bf16.gmra.mxu0 %v379
      %v2100 = vpop.f32.mrf.mxu0
      %v2101 = vadd.f32 %v514, %v2100
      %v2102 = vpop.f32.mrf.mxu0
      %v2103 = vadd.f32 %v514, %v2102
      %2104 = vdwg.mxu0
      %2105 = vmatpush.bf16.msra.mxu0 %v1034
      %2106 = vmatpush.bf16.msra.mxu0 %v1026
      %2107 = vmatpush.bf16.msra.mxu0 %v1018
      %2108 = vmatpush.bf16.msra.mxu0 %v1010
      %2109 = vmatpush.bf16.msra.mxu0 %v1002
      %2110 = vmatpush.bf16.msra.mxu0 %v994
      %2111 = vmatpush.bf16.msra.mxu0 %v986
      %2112 = vmatpush.bf16.msra.mxu0 %v978
      %2113 = vmatmul.bf16.gmra.mxu0 %v332
      %v2114 = vpop.f32.mrf.mxu0
      %v2115 = vadd.f32 %v1981, %v2114
      %v2116 = vpop.f32.mrf.mxu0
      %v2117 = vadd.f32 %v1983, %v2116
      %2118 = vmatmul.bf16.gmra.mxu0 %v334
      %v2119 = vpop.f32.mrf.mxu0
      %v2120 = vadd.f32 %v1986, %v2119
      %v2121 = vpop.f32.mrf.mxu0
      %v2122 = vadd.f32 %v1988, %v2121
      %2123 = vmatmul.bf16.gmra.mxu0 %v336
      %v2124 = vpop.f32.mrf.mxu0
      %v2125 = vadd.f32 %v1991, %v2124
      %v2126 = vpop.f32.mrf.mxu0
      %v2127 = vadd.f32 %v1993, %v2126
      %2128 = vmatmul.bf16.gmra.mxu0 %v338
      %v2129 = vpop.f32.mrf.mxu0
      %v2130 = vadd.f32 %v1996, %v2129
      %v2131 = vpop.f32.mrf.mxu0
      %v2132 = vadd.f32 %v1998, %v2131
      %2133 = vmatmul.bf16.gmra.mxu0 %v340
      %v2134 = vpop.f32.mrf.mxu0
      %v2135 = vadd.f32 %v2001, %v2134
      %v2136 = vpop.f32.mrf.mxu0
      %v2137 = vadd.f32 %v2003, %v2136
      %2138 = vmatmul.bf16.gmra.mxu0 %v342
      %v2139 = vpop.f32.mrf.mxu0
      %v2140 = vadd.f32 %v2006, %v2139
      %v2141 = vpop.f32.mrf.mxu0
      %v2142 = vadd.f32 %v2008, %v2141
      %2143 = vmatmul.bf16.gmra.mxu0 %v344
      %v2144 = vpop.f32.mrf.mxu0
      %v2145 = vadd.f32 %v2011, %v2144
      %v2146 = vpop.f32.mrf.mxu0
      %v2147 = vadd.f32 %v2013, %v2146
      %2148 = vmatmul.bf16.gmra.mxu0 %v346
      %v2149 = vpop.f32.mrf.mxu0
      %v2150 = vadd.f32 %v2016, %v2149
      %v2151 = vpop.f32.mrf.mxu0
      %v2152 = vadd.f32 %v2018, %v2151
      %2153 = vmatmul.bf16.gmra.mxu0 %v348
      %v2154 = vpop.f32.mrf.mxu0
      %v2155 = vadd.f32 %v2021, %v2154
      %v2156 = vpop.f32.mrf.mxu0
      %v2157 = vadd.f32 %v2023, %v2156
      %2158 = vmatmul.bf16.gmra.mxu0 %v350
      %v2159 = vpop.f32.mrf.mxu0
      %v2160 = vadd.f32 %v2026, %v2159
      %v2161 = vpop.f32.mrf.mxu0
      %v2162 = vadd.f32 %v2028, %v2161
      %2163 = vmatmul.bf16.gmra.mxu0 %v352
      %v2164 = vpop.f32.mrf.mxu0
      %v2165 = vadd.f32 %v2031, %v2164
      %v2166 = vpop.f32.mrf.mxu0
      %v2167 = vadd.f32 %v2033, %v2166
      %2168 = vmatmul.bf16.gmra.mxu0 %v354
      %v2169 = vpop.f32.mrf.mxu0
      %v2170 = vadd.f32 %v2036, %v2169
      %v2171 = vpop.f32.mrf.mxu0
      %v2172 = vadd.f32 %v2038, %v2171
      %2173 = vmatmul.bf16.gmra.mxu0 %v356
      %v2174 = vpop.f32.mrf.mxu0
      %v2175 = vadd.f32 %v2041, %v2174
      %v2176 = vpop.f32.mrf.mxu0
      %v2177 = vadd.f32 %v2043, %v2176
      %2178 = vmatmul.bf16.gmra.mxu0 %v358
      %v2179 = vpop.f32.mrf.mxu0
      %v2180 = vadd.f32 %v2046, %v2179
      %v2181 = vpop.f32.mrf.mxu0
      %v2182 = vadd.f32 %v2048, %v2181
      %2183 = vmatmul.bf16.gmra.mxu0 %v360
      %v2184 = vpop.f32.mrf.mxu0
      %v2185 = vadd.f32 %v2051, %v2184
      %v2186 = vpop.f32.mrf.mxu0
      %v2187 = vadd.f32 %v2053, %v2186
      %2188 = vmatmul.bf16.gmra.mxu0 %v362
      %v2189 = vpop.f32.mrf.mxu0
      %v2190 = vadd.f32 %v2056, %v2189
      %v2191 = vpop.f32.mrf.mxu0
      %v2192 = vadd.f32 %v2058, %v2191
      %2193 = vmatmul.bf16.gmra.mxu0 %v364
      %v2194 = vpop.f32.mrf.mxu0
      %v2195 = vadd.f32 %v2061, %v2194
      %v2196 = vpop.f32.mrf.mxu0
      %v2197 = vadd.f32 %v2063, %v2196
      %2198 = vmatmul.bf16.gmra.mxu0 %v366
      %v2199 = vpop.f32.mrf.mxu0
      %v2200 = vadd.f32 %v2066, %v2199
      %v2201 = vpop.f32.mrf.mxu0
      %v2202 = vadd.f32 %v2068, %v2201
      %2203 = vmatmul.bf16.gmra.mxu0 %v368
      %v2204 = vpop.f32.mrf.mxu0
      %v2205 = vadd.f32 %v2071, %v2204
      %v2206 = vpop.f32.mrf.mxu0
      %v2207 = vadd.f32 %v2073, %v2206
      %2208 = vmatmul.bf16.gmra.mxu0 %v370
      %v2209 = vpop.f32.mrf.mxu0
      %v2210 = vadd.f32 %v2076, %v2209
      %v2211 = vpop.f32.mrf.mxu0
      %v2212 = vadd.f32 %v2078, %v2211
      %2213 = vmatmul.bf16.gmra.mxu0 %v372
      %v2214 = vpop.f32.mrf.mxu0
      %v2215 = vadd.f32 %v2081, %v2214
      %v2216 = vpop.f32.mrf.mxu0
      %v2217 = vadd.f32 %v2083, %v2216
      %2218 = vmatmul.bf16.gmra.mxu0 %v374
      %v2219 = vpop.f32.mrf.mxu0
      %v2220 = vadd.f32 %v2086, %v2219
      %v2221 = vpop.f32.mrf.mxu0
      %v2222 = vadd.f32 %v2088, %v2221
      %2223 = vmatmul.bf16.gmra.mxu0 %v376
      %v2224 = vpop.f32.mrf.mxu0
      %v2225 = vadd.f32 %v2091, %v2224
      %v2226 = vpop.f32.mrf.mxu0
      %v2227 = vadd.f32 %v2093, %v2226
      %2228 = vmatmul.bf16.gmra.mxu0 %v378
      %v2229 = vpop.f32.mrf.mxu0
      %v2230 = vadd.f32 %v2096, %v2229
      %v2231 = vpop.f32.mrf.mxu0
      %v2232 = vadd.f32 %v2098, %v2231
      %2233 = vmatmul.bf16.gmra.mxu0 %v380
      %v2234 = vpop.f32.mrf.mxu0
      %v2235 = vadd.f32 %v2101, %v2234
      %v2236 = vpop.f32.mrf.mxu0
      %v2237 = vadd.f32 %v2103, %v2236
      %2238 = vdwg.mxu0
      %2239 = vmatpush.bf16.msra.mxu0 %v971
      %2240 = vmatpush.bf16.msra.mxu0 %v963
      %2241 = vmatpush.bf16.msra.mxu0 %v955
      %2242 = vmatpush.bf16.msra.mxu0 %v947
      %2243 = vmatpush.bf16.msra.mxu0 %v939
      %2244 = vmatpush.bf16.msra.mxu0 %v931
      %2245 = vmatpush.bf16.msra.mxu0 %v923
      %2246 = vmatpush.bf16.msra.mxu0 %v915
      %2247 = vmatmul.bf16.gmra.mxu0 %v331
      %v2248 = vpop.f32.mrf.mxu0
      %v2249 = vadd.f32 %v515, %v2248
      %v2250 = vpop.f32.mrf.mxu0
      %v2251 = vadd.f32 %v515, %v2250
      %2252 = vmatmul.bf16.gmra.mxu0 %v333
      %v2253 = vpop.f32.mrf.mxu0
      %v2254 = vadd.f32 %v515, %v2253
      %v2255 = vpop.f32.mrf.mxu0
      %v2256 = vadd.f32 %v515, %v2255
      %2257 = vmatmul.bf16.gmra.mxu0 %v335
      %v2258 = vpop.f32.mrf.mxu0
      %v2259 = vadd.f32 %v515, %v2258
      %v2260 = vpop.f32.mrf.mxu0
      %v2261 = vadd.f32 %v515, %v2260
      %2262 = vmatmul.bf16.gmra.mxu0 %v337
      %v2263 = vpop.f32.mrf.mxu0
      %v2264 = vadd.f32 %v515, %v2263
      %v2265 = vpop.f32.mrf.mxu0
      %v2266 = vadd.f32 %v515, %v2265
      %2267 = vmatmul.bf16.gmra.mxu0 %v339
      %v2268 = vpop.f32.mrf.mxu0
      %v2269 = vadd.f32 %v515, %v2268
      %v2270 = vpop.f32.mrf.mxu0
      %v2271 = vadd.f32 %v515, %v2270
      %2272 = vmatmul.bf16.gmra.mxu0 %v341
      %v2273 = vpop.f32.mrf.mxu0
      %v2274 = vadd.f32 %v515, %v2273
      %v2275 = vpop.f32.mrf.mxu0
      %v2276 = vadd.f32 %v515, %v2275
      %2277 = vmatmul.bf16.gmra.mxu0 %v343
      %v2278 = vpop.f32.mrf.mxu0
      %v2279 = vadd.f32 %v515, %v2278
      %v2280 = vpop.f32.mrf.mxu0
      %v2281 = vadd.f32 %v515, %v2280
      %2282 = vmatmul.bf16.gmra.mxu0 %v345
      %v2283 = vpop.f32.mrf.mxu0
      %v2284 = vadd.f32 %v515, %v2283
      %v2285 = vpop.f32.mrf.mxu0
      %v2286 = vadd.f32 %v515, %v2285
      %2287 = vmatmul.bf16.gmra.mxu0 %v347
      %v2288 = vpop.f32.mrf.mxu0
      %v2289 = vadd.f32 %v515, %v2288
      %v2290 = vpop.f32.mrf.mxu0
      %v2291 = vadd.f32 %v515, %v2290
      %2292 = vmatmul.bf16.gmra.mxu0 %v349
      %v2293 = vpop.f32.mrf.mxu0
      %v2294 = vadd.f32 %v515, %v2293
      %v2295 = vpop.f32.mrf.mxu0
      %v2296 = vadd.f32 %v515, %v2295
      %2297 = vmatmul.bf16.gmra.mxu0 %v351
      %v2298 = vpop.f32.mrf.mxu0
      %v2299 = vadd.f32 %v515, %v2298
      %v2300 = vpop.f32.mrf.mxu0
      %v2301 = vadd.f32 %v515, %v2300
      %2302 = vmatmul.bf16.gmra.mxu0 %v353
      %v2303 = vpop.f32.mrf.mxu0
      %v2304 = vadd.f32 %v515, %v2303
      %v2305 = vpop.f32.mrf.mxu0
      %v2306 = vadd.f32 %v515, %v2305
      %2307 = vmatmul.bf16.gmra.mxu0 %v355
      %v2308 = vpop.f32.mrf.mxu0
      %v2309 = vadd.f32 %v515, %v2308
      %v2310 = vpop.f32.mrf.mxu0
      %v2311 = vadd.f32 %v515, %v2310
      %2312 = vmatmul.bf16.gmra.mxu0 %v357
      %v2313 = vpop.f32.mrf.mxu0
      %v2314 = vadd.f32 %v515, %v2313
      %v2315 = vpop.f32.mrf.mxu0
      %v2316 = vadd.f32 %v515, %v2315
      %2317 = vmatmul.bf16.gmra.mxu0 %v359
      %v2318 = vpop.f32.mrf.mxu0
      %v2319 = vadd.f32 %v515, %v2318
      %v2320 = vpop.f32.mrf.mxu0
      %v2321 = vadd.f32 %v515, %v2320
      %2322 = vmatmul.bf16.gmra.mxu0 %v361
      %v2323 = vpop.f32.mrf.mxu0
      %v2324 = vadd.f32 %v515, %v2323
      %v2325 = vpop.f32.mrf.mxu0
      %v2326 = vadd.f32 %v515, %v2325
      %2327 = vmatmul.bf16.gmra.mxu0 %v363
      %v2328 = vpop.f32.mrf.mxu0
      %v2329 = vadd.f32 %v515, %v2328
      %v2330 = vpop.f32.mrf.mxu0
      %v2331 = vadd.f32 %v515, %v2330
      %2332 = vmatmul.bf16.gmra.mxu0 %v365
      %v2333 = vpop.f32.mrf.mxu0
      %v2334 = vadd.f32 %v515, %v2333
      %v2335 = vpop.f32.mrf.mxu0
      %v2336 = vadd.f32 %v515, %v2335
      %2337 = vmatmul.bf16.gmra.mxu0 %v367
      %v2338 = vpop.f32.mrf.mxu0
      %v2339 = vadd.f32 %v515, %v2338
      %v2340 = vpop.f32.mrf.mxu0
      %v2341 = vadd.f32 %v515, %v2340
      %2342 = vmatmul.bf16.gmra.mxu0 %v369
      %v2343 = vpop.f32.mrf.mxu0
      %v2344 = vadd.f32 %v515, %v2343
      %v2345 = vpop.f32.mrf.mxu0
      %v2346 = vadd.f32 %v515, %v2345
      %2347 = vmatmul.bf16.gmra.mxu0 %v371
      %v2348 = vpop.f32.mrf.mxu0
      %v2349 = vadd.f32 %v515, %v2348
      %v2350 = vpop.f32.mrf.mxu0
      %v2351 = vadd.f32 %v515, %v2350
      %2352 = vmatmul.bf16.gmra.mxu0 %v373
      %v2353 = vpop.f32.mrf.mxu0
      %v2354 = vadd.f32 %v515, %v2353
      %v2355 = vpop.f32.mrf.mxu0
      %v2356 = vadd.f32 %v515, %v2355
      %2357 = vmatmul.bf16.gmra.mxu0 %v375
      %v2358 = vpop.f32.mrf.mxu0
      %v2359 = vadd.f32 %v515, %v2358
      %v2360 = vpop.f32.mrf.mxu0
      %v2361 = vadd.f32 %v515, %v2360
      %2362 = vmatmul.bf16.gmra.mxu0 %v377
      %v2363 = vpop.f32.mrf.mxu0
      %v2364 = vadd.f32 %v515, %v2363
      %v2365 = vpop.f32.mrf.mxu0
      %v2366 = vadd.f32 %v515, %v2365
      %2367 = vmatmul.bf16.gmra.mxu0 %v379
      %v2368 = vpop.f32.mrf.mxu0
      %v2369 = vadd.f32 %v515, %v2368
      %v2370 = vpop.f32.mrf.mxu0
      %v2371 = vadd.f32 %v515, %v2370
      %2372 = vdwg.mxu0
      %2373 = vmatpush.bf16.msra.mxu0 %v1035
      %2374 = vmatpush.bf16.msra.mxu0 %v1027
      %2375 = vmatpush.bf16.msra.mxu0 %v1019
      %2376 = vmatpush.bf16.msra.mxu0 %v1011
      %2377 = vmatpush.bf16.msra.mxu0 %v1003
      %2378 = vmatpush.bf16.msra.mxu0 %v995
      %2379 = vmatpush.bf16.msra.mxu0 %v987
      %2380 = vmatpush.bf16.msra.mxu0 %v979
      %2381 = vmatmul.bf16.gmra.mxu0 %v332
      %v2382 = vpop.f32.mrf.mxu0
      %v2383 = vadd.f32 %v2249, %v2382
      %v2384 = vpop.f32.mrf.mxu0
      %v2385 = vadd.f32 %v2251, %v2384
      %2386 = vmatmul.bf16.gmra.mxu0 %v334
      %v2387 = vpop.f32.mrf.mxu0
      %v2388 = vadd.f32 %v2254, %v2387
      %v2389 = vpop.f32.mrf.mxu0
      %v2390 = vadd.f32 %v2256, %v2389
      %2391 = vmatmul.bf16.gmra.mxu0 %v336
      %v2392 = vpop.f32.mrf.mxu0
      %v2393 = vadd.f32 %v2259, %v2392
      %v2394 = vpop.f32.mrf.mxu0
      %v2395 = vadd.f32 %v2261, %v2394
      %2396 = vmatmul.bf16.gmra.mxu0 %v338
      %v2397 = vpop.f32.mrf.mxu0
      %v2398 = vadd.f32 %v2264, %v2397
      %v2399 = vpop.f32.mrf.mxu0
      %v2400 = vadd.f32 %v2266, %v2399
      %2401 = vmatmul.bf16.gmra.mxu0 %v340
      %v2402 = vpop.f32.mrf.mxu0
      %v2403 = vadd.f32 %v2269, %v2402
      %v2404 = vpop.f32.mrf.mxu0
      %v2405 = vadd.f32 %v2271, %v2404
      %2406 = vmatmul.bf16.gmra.mxu0 %v342
      %v2407 = vpop.f32.mrf.mxu0
      %v2408 = vadd.f32 %v2274, %v2407
      %v2409 = vpop.f32.mrf.mxu0
      %v2410 = vadd.f32 %v2276, %v2409
      %2411 = vmatmul.bf16.gmra.mxu0 %v344
      %v2412 = vpop.f32.mrf.mxu0
      %v2413 = vadd.f32 %v2279, %v2412
      %v2414 = vpop.f32.mrf.mxu0
      %v2415 = vadd.f32 %v2281, %v2414
      %2416 = vmatmul.bf16.gmra.mxu0 %v346
      %v2417 = vpop.f32.mrf.mxu0
      %v2418 = vadd.f32 %v2284, %v2417
      %v2419 = vpop.f32.mrf.mxu0
      %v2420 = vadd.f32 %v2286, %v2419
      %2421 = vmatmul.bf16.gmra.mxu0 %v348
      %v2422 = vpop.f32.mrf.mxu0
      %v2423 = vadd.f32 %v2289, %v2422
      %v2424 = vpop.f32.mrf.mxu0
      %v2425 = vadd.f32 %v2291, %v2424
      %2426 = vmatmul.bf16.gmra.mxu0 %v350
      %v2427 = vpop.f32.mrf.mxu0
      %v2428 = vadd.f32 %v2294, %v2427
      %v2429 = vpop.f32.mrf.mxu0
      %v2430 = vadd.f32 %v2296, %v2429
      %2431 = vmatmul.bf16.gmra.mxu0 %v352
      %v2432 = vpop.f32.mrf.mxu0
      %v2433 = vadd.f32 %v2299, %v2432
      %v2434 = vpop.f32.mrf.mxu0
      %v2435 = vadd.f32 %v2301, %v2434
      %2436 = vmatmul.bf16.gmra.mxu0 %v354
      %v2437 = vpop.f32.mrf.mxu0
      %v2438 = vadd.f32 %v2304, %v2437
      %v2439 = vpop.f32.mrf.mxu0
      %v2440 = vadd.f32 %v2306, %v2439
      %2441 = vmatmul.bf16.gmra.mxu0 %v356
      %v2442 = vpop.f32.mrf.mxu0
      %v2443 = vadd.f32 %v2309, %v2442
      %v2444 = vpop.f32.mrf.mxu0
      %v2445 = vadd.f32 %v2311, %v2444
      %2446 = vmatmul.bf16.gmra.mxu0 %v358
      %v2447 = vpop.f32.mrf.mxu0
      %v2448 = vadd.f32 %v2314, %v2447
      %v2449 = vpop.f32.mrf.mxu0
      %v2450 = vadd.f32 %v2316, %v2449
      %2451 = vmatmul.bf16.gmra.mxu0 %v360
      %v2452 = vpop.f32.mrf.mxu0
      %v2453 = vadd.f32 %v2319, %v2452
      %v2454 = vpop.f32.mrf.mxu0
      %v2455 = vadd.f32 %v2321, %v2454
      %2456 = vmatmul.bf16.gmra.mxu0 %v362
      %v2457 = vpop.f32.mrf.mxu0
      %v2458 = vadd.f32 %v2324, %v2457
      %v2459 = vpop.f32.mrf.mxu0
      %v2460 = vadd.f32 %v2326, %v2459
      %2461 = vmatmul.bf16.gmra.mxu0 %v364
      %v2462 = vpop.f32.mrf.mxu0
      %v2463 = vadd.f32 %v2329, %v2462
      %v2464 = vpop.f32.mrf.mxu0
      %v2465 = vadd.f32 %v2331, %v2464
      %2466 = vmatmul.bf16.gmra.mxu0 %v366
      %v2467 = vpop.f32.mrf.mxu0
      %v2468 = vadd.f32 %v2334, %v2467
      %v2469 = vpop.f32.mrf.mxu0
      %v2470 = vadd.f32 %v2336, %v2469
      %2471 = vmatmul.bf16.gmra.mxu0 %v368
      %v2472 = vpop.f32.mrf.mxu0
      %v2473 = vadd.f32 %v2339, %v2472
      %v2474 = vpop.f32.mrf.mxu0
      %v2475 = vadd.f32 %v2341, %v2474
      %2476 = vmatmul.bf16.gmra.mxu0 %v370
      %v2477 = vpop.f32.mrf.mxu0
      %v2478 = vadd.f32 %v2344, %v2477
      %v2479 = vpop.f32.mrf.mxu0
      %v2480 = vadd.f32 %v2346, %v2479
      %2481 = vmatmul.bf16.gmra.mxu0 %v372
      %v2482 = vpop.f32.mrf.mxu0
      %v2483 = vadd.f32 %v2349, %v2482
      %v2484 = vpop.f32.mrf.mxu0
      %v2485 = vadd.f32 %v2351, %v2484
      %2486 = vmatmul.bf16.gmra.mxu0 %v374
      %v2487 = vpop.f32.mrf.mxu0
      %v2488 = vadd.f32 %v2354, %v2487
      %v2489 = vpop.f32.mrf.mxu0
      %v2490 = vadd.f32 %v2356, %v2489
      %2491 = vmatmul.bf16.gmra.mxu0 %v376
      %v2492 = vpop.f32.mrf.mxu0
      %v2493 = vadd.f32 %v2359, %v2492
      %v2494 = vpop.f32.mrf.mxu0
      %v2495 = vadd.f32 %v2361, %v2494
      %2496 = vmatmul.bf16.gmra.mxu0 %v378
      %v2497 = vpop.f32.mrf.mxu0
      %v2498 = vadd.f32 %v2364, %v2497
      %v2499 = vpop.f32.mrf.mxu0
      %v2500 = vadd.f32 %v2366, %v2499
      %2501 = vmatmul.bf16.gmra.mxu0 %v380
      %v2502 = vpop.f32.mrf.mxu0
      %v2503 = vadd.f32 %v2369, %v2502
      %v2504 = vpop.f32.mrf.mxu0
      %v2505 = vadd.f32 %v2371, %v2504
      %2506 = vdwg.mxu0
      %2507 = vmatpush.bf16.msra.mxu0 %v972
      %2508 = vmatpush.bf16.msra.mxu0 %v964
      %2509 = vmatpush.bf16.msra.mxu0 %v956
      %2510 = vmatpush.bf16.msra.mxu0 %v948
      %2511 = vmatpush.bf16.msra.mxu0 %v940
      %2512 = vmatpush.bf16.msra.mxu0 %v932
      %2513 = vmatpush.bf16.msra.mxu0 %v924
      %2514 = vmatpush.bf16.msra.mxu0 %v916
      %2515 = vmatmul.bf16.gmra.mxu0 %v331
      %v2516 = vpop.f32.mrf.mxu0
      %v2517 = vadd.f32 %v516, %v2516
      %v2518 = vpop.f32.mrf.mxu0
      %v2519 = vadd.f32 %v516, %v2518
      %2520 = vmatmul.bf16.gmra.mxu0 %v333
      %v2521 = vpop.f32.mrf.mxu0
      %v2522 = vadd.f32 %v516, %v2521
      %v2523 = vpop.f32.mrf.mxu0
      %v2524 = vadd.f32 %v516, %v2523
      %2525 = vmatmul.bf16.gmra.mxu0 %v335
      %v2526 = vpop.f32.mrf.mxu0
      %v2527 = vadd.f32 %v516, %v2526
      %v2528 = vpop.f32.mrf.mxu0
      %v2529 = vadd.f32 %v516, %v2528
      %2530 = vmatmul.bf16.gmra.mxu0 %v337
      %v2531 = vpop.f32.mrf.mxu0
      %v2532 = vadd.f32 %v516, %v2531
      %v2533 = vpop.f32.mrf.mxu0
      %v2534 = vadd.f32 %v516, %v2533
      %2535 = vmatmul.bf16.gmra.mxu0 %v339
      %v2536 = vpop.f32.mrf.mxu0
      %v2537 = vadd.f32 %v516, %v2536
      %v2538 = vpop.f32.mrf.mxu0
      %v2539 = vadd.f32 %v516, %v2538
      %2540 = vmatmul.bf16.gmra.mxu0 %v341
      %v2541 = vpop.f32.mrf.mxu0
      %v2542 = vadd.f32 %v516, %v2541
      %v2543 = vpop.f32.mrf.mxu0
      %v2544 = vadd.f32 %v516, %v2543
      %2545 = vmatmul.bf16.gmra.mxu0 %v343
      %v2546 = vpop.f32.mrf.mxu0
      %v2547 = vadd.f32 %v516, %v2546
      %v2548 = vpop.f32.mrf.mxu0
      %v2549 = vadd.f32 %v516, %v2548
      %2550 = vmatmul.bf16.gmra.mxu0 %v345
      %v2551 = vpop.f32.mrf.mxu0
      %v2552 = vadd.f32 %v516, %v2551
      %v2553 = vpop.f32.mrf.mxu0
      %v2554 = vadd.f32 %v516, %v2553
      %2555 = vmatmul.bf16.gmra.mxu0 %v347
      %v2556 = vpop.f32.mrf.mxu0
      %v2557 = vadd.f32 %v516, %v2556
      %v2558 = vpop.f32.mrf.mxu0
      %v2559 = vadd.f32 %v516, %v2558
      %2560 = vmatmul.bf16.gmra.mxu0 %v349
      %v2561 = vpop.f32.mrf.mxu0
      %v2562 = vadd.f32 %v516, %v2561
      %v2563 = vpop.f32.mrf.mxu0
      %v2564 = vadd.f32 %v516, %v2563
      %2565 = vmatmul.bf16.gmra.mxu0 %v351
      %v2566 = vpop.f32.mrf.mxu0
      %v2567 = vadd.f32 %v516, %v2566
      %v2568 = vpop.f32.mrf.mxu0
      %v2569 = vadd.f32 %v516, %v2568
      %2570 = vmatmul.bf16.gmra.mxu0 %v353
      %v2571 = vpop.f32.mrf.mxu0
      %v2572 = vadd.f32 %v516, %v2571
      %v2573 = vpop.f32.mrf.mxu0
      %v2574 = vadd.f32 %v516, %v2573
      %2575 = vmatmul.bf16.gmra.mxu0 %v355
      %v2576 = vpop.f32.mrf.mxu0
      %v2577 = vadd.f32 %v516, %v2576
      %v2578 = vpop.f32.mrf.mxu0
      %v2579 = vadd.f32 %v516, %v2578
      %2580 = vmatmul.bf16.gmra.mxu0 %v357
      %v2581 = vpop.f32.mrf.mxu0
      %v2582 = vadd.f32 %v516, %v2581
      %v2583 = vpop.f32.mrf.mxu0
      %v2584 = vadd.f32 %v516, %v2583
      %2585 = vmatmul.bf16.gmra.mxu0 %v359
      %v2586 = vpop.f32.mrf.mxu0
      %v2587 = vadd.f32 %v516, %v2586
      %v2588 = vpop.f32.mrf.mxu0
      %v2589 = vadd.f32 %v516, %v2588
      %2590 = vmatmul.bf16.gmra.mxu0 %v361
      %v2591 = vpop.f32.mrf.mxu0
      %v2592 = vadd.f32 %v516, %v2591
      %v2593 = vpop.f32.mrf.mxu0
      %v2594 = vadd.f32 %v516, %v2593
      %2595 = vmatmul.bf16.gmra.mxu0 %v363
      %v2596 = vpop.f32.mrf.mxu0
      %v2597 = vadd.f32 %v516, %v2596
      %v2598 = vpop.f32.mrf.mxu0
      %v2599 = vadd.f32 %v516, %v2598
      %2600 = vmatmul.bf16.gmra.mxu0 %v365
      %v2601 = vpop.f32.mrf.mxu0
      %v2602 = vadd.f32 %v516, %v2601
      %v2603 = vpop.f32.mrf.mxu0
      %v2604 = vadd.f32 %v516, %v2603
      %2605 = vmatmul.bf16.gmra.mxu0 %v367
      %v2606 = vpop.f32.mrf.mxu0
      %v2607 = vadd.f32 %v516, %v2606
      %v2608 = vpop.f32.mrf.mxu0
      %v2609 = vadd.f32 %v516, %v2608
      %2610 = vmatmul.bf16.gmra.mxu0 %v369
      %v2611 = vpop.f32.mrf.mxu0
      %v2612 = vadd.f32 %v516, %v2611
      %v2613 = vpop.f32.mrf.mxu0
      %v2614 = vadd.f32 %v516, %v2613
      %2615 = vmatmul.bf16.gmra.mxu0 %v371
      %v2616 = vpop.f32.mrf.mxu0
      %v2617 = vadd.f32 %v516, %v2616
      %v2618 = vpop.f32.mrf.mxu0
      %v2619 = vadd.f32 %v516, %v2618
      %2620 = vmatmul.bf16.gmra.mxu0 %v373
      %v2621 = vpop.f32.mrf.mxu0
      %v2622 = vadd.f32 %v516, %v2621
      %v2623 = vpop.f32.mrf.mxu0
      %v2624 = vadd.f32 %v516, %v2623
      %2625 = vmatmul.bf16.gmra.mxu0 %v375
      %v2626 = vpop.f32.mrf.mxu0
      %v2627 = vadd.f32 %v516, %v2626
      %v2628 = vpop.f32.mrf.mxu0
      %v2629 = vadd.f32 %v516, %v2628
      %2630 = vmatmul.bf16.gmra.mxu0 %v377
      %v2631 = vpop.f32.mrf.mxu0
      %v2632 = vadd.f32 %v516, %v2631
      %v2633 = vpop.f32.mrf.mxu0
      %v2634 = vadd.f32 %v516, %v2633
      %2635 = vmatmul.bf16.gmra.mxu0 %v379
      %v2636 = vpop.f32.mrf.mxu0
      %v2637 = vadd.f32 %v516, %v2636
      %v2638 = vpop.f32.mrf.mxu0
      %v2639 = vadd.f32 %v516, %v2638
      %2640 = vdwg.mxu0
      %2641 = vmatpush.bf16.msra.mxu0 %v1036
      %2642 = vmatpush.bf16.msra.mxu0 %v1028
      %2643 = vmatpush.bf16.msra.mxu0 %v1020
      %2644 = vmatpush.bf16.msra.mxu0 %v1012
      %2645 = vmatpush.bf16.msra.mxu0 %v1004
      %2646 = vmatpush.bf16.msra.mxu0 %v996
      %2647 = vmatpush.bf16.msra.mxu0 %v988
      %2648 = vmatpush.bf16.msra.mxu0 %v980
      %2649 = vmatmul.bf16.gmra.mxu0 %v332
      %v2650 = vpop.f32.mrf.mxu0
      %v2651 = vadd.f32 %v2517, %v2650
      %v2652 = vpop.f32.mrf.mxu0
      %v2653 = vadd.f32 %v2519, %v2652
      %2654 = vmatmul.bf16.gmra.mxu0 %v334
      %v2655 = vpop.f32.mrf.mxu0
      %v2656 = vadd.f32 %v2522, %v2655
      %v2657 = vpop.f32.mrf.mxu0
      %v2658 = vadd.f32 %v2524, %v2657
      %2659 = vmatmul.bf16.gmra.mxu0 %v336
      %v2660 = vpop.f32.mrf.mxu0
      %v2661 = vadd.f32 %v2527, %v2660
      %v2662 = vpop.f32.mrf.mxu0
      %v2663 = vadd.f32 %v2529, %v2662
      %2664 = vmatmul.bf16.gmra.mxu0 %v338
      %v2665 = vpop.f32.mrf.mxu0
      %v2666 = vadd.f32 %v2532, %v2665
      %v2667 = vpop.f32.mrf.mxu0
      %v2668 = vadd.f32 %v2534, %v2667
      %2669 = vmatmul.bf16.gmra.mxu0 %v340
      %v2670 = vpop.f32.mrf.mxu0
      %v2671 = vadd.f32 %v2537, %v2670
      %v2672 = vpop.f32.mrf.mxu0
      %v2673 = vadd.f32 %v2539, %v2672
      %2674 = vmatmul.bf16.gmra.mxu0 %v342
      %v2675 = vpop.f32.mrf.mxu0
      %v2676 = vadd.f32 %v2542, %v2675
      %v2677 = vpop.f32.mrf.mxu0
      %v2678 = vadd.f32 %v2544, %v2677
      %2679 = vmatmul.bf16.gmra.mxu0 %v344
      %v2680 = vpop.f32.mrf.mxu0
      %v2681 = vadd.f32 %v2547, %v2680
      %v2682 = vpop.f32.mrf.mxu0
      %v2683 = vadd.f32 %v2549, %v2682
      %2684 = vmatmul.bf16.gmra.mxu0 %v346
      %v2685 = vpop.f32.mrf.mxu0
      %v2686 = vadd.f32 %v2552, %v2685
      %v2687 = vpop.f32.mrf.mxu0
      %v2688 = vadd.f32 %v2554, %v2687
      %2689 = vmatmul.bf16.gmra.mxu0 %v348
      %v2690 = vpop.f32.mrf.mxu0
      %v2691 = vadd.f32 %v2557, %v2690
      %v2692 = vpop.f32.mrf.mxu0
      %v2693 = vadd.f32 %v2559, %v2692
      %2694 = vmatmul.bf16.gmra.mxu0 %v350
      %v2695 = vpop.f32.mrf.mxu0
      %v2696 = vadd.f32 %v2562, %v2695
      %v2697 = vpop.f32.mrf.mxu0
      %v2698 = vadd.f32 %v2564, %v2697
      %2699 = vmatmul.bf16.gmra.mxu0 %v352
      %v2700 = vpop.f32.mrf.mxu0
      %v2701 = vadd.f32 %v2567, %v2700
      %v2702 = vpop.f32.mrf.mxu0
      %v2703 = vadd.f32 %v2569, %v2702
      %2704 = vmatmul.bf16.gmra.mxu0 %v354
      %v2705 = vpop.f32.mrf.mxu0
      %v2706 = vadd.f32 %v2572, %v2705
      %v2707 = vpop.f32.mrf.mxu0
      %v2708 = vadd.f32 %v2574, %v2707
      %2709 = vmatmul.bf16.gmra.mxu0 %v356
      %v2710 = vpop.f32.mrf.mxu0
      %v2711 = vadd.f32 %v2577, %v2710
      %v2712 = vpop.f32.mrf.mxu0
      %v2713 = vadd.f32 %v2579, %v2712
      %2714 = vmatmul.bf16.gmra.mxu0 %v358
      %v2715 = vpop.f32.mrf.mxu0
      %v2716 = vadd.f32 %v2582, %v2715
      %v2717 = vpop.f32.mrf.mxu0
      %v2718 = vadd.f32 %v2584, %v2717
      %2719 = vmatmul.bf16.gmra.mxu0 %v360
      %v2720 = vpop.f32.mrf.mxu0
      %v2721 = vadd.f32 %v2587, %v2720
      %v2722 = vpop.f32.mrf.mxu0
      %v2723 = vadd.f32 %v2589, %v2722
      %2724 = vmatmul.bf16.gmra.mxu0 %v362
      %v2725 = vpop.f32.mrf.mxu0
      %v2726 = vadd.f32 %v2592, %v2725
      %v2727 = vpop.f32.mrf.mxu0
      %v2728 = vadd.f32 %v2594, %v2727
      %2729 = vmatmul.bf16.gmra.mxu0 %v364
      %v2730 = vpop.f32.mrf.mxu0
      %v2731 = vadd.f32 %v2597, %v2730
      %v2732 = vpop.f32.mrf.mxu0
      %v2733 = vadd.f32 %v2599, %v2732
      %2734 = vmatmul.bf16.gmra.mxu0 %v366
      %v2735 = vpop.f32.mrf.mxu0
      %v2736 = vadd.f32 %v2602, %v2735
      %v2737 = vpop.f32.mrf.mxu0
      %v2738 = vadd.f32 %v2604, %v2737
      %2739 = vmatmul.bf16.gmra.mxu0 %v368
      %v2740 = vpop.f32.mrf.mxu0
      %v2741 = vadd.f32 %v2607, %v2740
      %v2742 = vpop.f32.mrf.mxu0
      %v2743 = vadd.f32 %v2609, %v2742
      %2744 = vmatmul.bf16.gmra.mxu0 %v370
      %v2745 = vpop.f32.mrf.mxu0
      %v2746 = vadd.f32 %v2612, %v2745
      %v2747 = vpop.f32.mrf.mxu0
      %v2748 = vadd.f32 %v2614, %v2747
      %2749 = vmatmul.bf16.gmra.mxu0 %v372
      %v2750 = vpop.f32.mrf.mxu0
      %v2751 = vadd.f32 %v2617, %v2750
      %v2752 = vpop.f32.mrf.mxu0
      %v2753 = vadd.f32 %v2619, %v2752
      %2754 = vmatmul.bf16.gmra.mxu0 %v374
      %v2755 = vpop.f32.mrf.mxu0
      %v2756 = vadd.f32 %v2622, %v2755
      %v2757 = vpop.f32.mrf.mxu0
      %v2758 = vadd.f32 %v2624, %v2757
      %2759 = vmatmul.bf16.gmra.mxu0 %v376
      %v2760 = vpop.f32.mrf.mxu0
      %v2761 = vadd.f32 %v2627, %v2760
      %v2762 = vpop.f32.mrf.mxu0
      %v2763 = vadd.f32 %v2629, %v2762
      %2764 = vmatmul.bf16.gmra.mxu0 %v378
      %v2765 = vpop.f32.mrf.mxu0
      %v2766 = vadd.f32 %v2632, %v2765
      %v2767 = vpop.f32.mrf.mxu0
      %v2768 = vadd.f32 %v2634, %v2767
      %2769 = vmatmul.bf16.gmra.mxu0 %v380
      %v2770 = vpop.f32.mrf.mxu0
      %v2771 = vadd.f32 %v2637, %v2770
      %v2772 = vpop.f32.mrf.mxu0
      %v2773 = vadd.f32 %v2639, %v2772
      %2774 = vdwg.mxu0
      %2775 = vmatpush.bf16.msra.mxu0 %v973
      %2776 = vmatpush.bf16.msra.mxu0 %v965
      %2777 = vmatpush.bf16.msra.mxu0 %v957
      %2778 = vmatpush.bf16.msra.mxu0 %v949
      %2779 = vmatpush.bf16.msra.mxu0 %v941
      %2780 = vmatpush.bf16.msra.mxu0 %v933
      %2781 = vmatpush.bf16.msra.mxu0 %v925
      %2782 = vmatpush.bf16.msra.mxu0 %v917
      %2783 = vmatmul.bf16.gmra.mxu0 %v331
      %v2784 = vpop.f32.mrf.mxu0
      %v2785 = vadd.f32 %v517, %v2784
      %v2786 = vpop.f32.mrf.mxu0
      %v2787 = vadd.f32 %v517, %v2786
      %2788 = vmatmul.bf16.gmra.mxu0 %v333
      %v2789 = vpop.f32.mrf.mxu0
      %v2790 = vadd.f32 %v517, %v2789
      %v2791 = vpop.f32.mrf.mxu0
      %v2792 = vadd.f32 %v517, %v2791
      %2793 = vmatmul.bf16.gmra.mxu0 %v335
      %v2794 = vpop.f32.mrf.mxu0
      %v2795 = vadd.f32 %v517, %v2794
      %v2796 = vpop.f32.mrf.mxu0
      %v2797 = vadd.f32 %v517, %v2796
      %2798 = vmatmul.bf16.gmra.mxu0 %v337
      %v2799 = vpop.f32.mrf.mxu0
      %v2800 = vadd.f32 %v517, %v2799
      %v2801 = vpop.f32.mrf.mxu0
      %v2802 = vadd.f32 %v517, %v2801
      %2803 = vmatmul.bf16.gmra.mxu0 %v339
      %v2804 = vpop.f32.mrf.mxu0
      %v2805 = vadd.f32 %v517, %v2804
      %v2806 = vpop.f32.mrf.mxu0
      %v2807 = vadd.f32 %v517, %v2806
      %2808 = vmatmul.bf16.gmra.mxu0 %v341
      %v2809 = vpop.f32.mrf.mxu0
      %v2810 = vadd.f32 %v517, %v2809
      %v2811 = vpop.f32.mrf.mxu0
      %v2812 = vadd.f32 %v517, %v2811
      %2813 = vmatmul.bf16.gmra.mxu0 %v343
      %v2814 = vpop.f32.mrf.mxu0
      %v2815 = vadd.f32 %v517, %v2814
      %v2816 = vpop.f32.mrf.mxu0
      %v2817 = vadd.f32 %v517, %v2816
      %2818 = vmatmul.bf16.gmra.mxu0 %v345
      %v2819 = vpop.f32.mrf.mxu0
      %v2820 = vadd.f32 %v517, %v2819
      %v2821 = vpop.f32.mrf.mxu0
      %v2822 = vadd.f32 %v517, %v2821
      %2823 = vmatmul.bf16.gmra.mxu0 %v347
      %v2824 = vpop.f32.mrf.mxu0
      %v2825 = vadd.f32 %v517, %v2824
      %v2826 = vpop.f32.mrf.mxu0
      %v2827 = vadd.f32 %v517, %v2826
      %2828 = vmatmul.bf16.gmra.mxu0 %v349
      %v2829 = vpop.f32.mrf.mxu0
      %v2830 = vadd.f32 %v517, %v2829
      %v2831 = vpop.f32.mrf.mxu0
      %v2832 = vadd.f32 %v517, %v2831
      %2833 = vmatmul.bf16.gmra.mxu0 %v351
      %v2834 = vpop.f32.mrf.mxu0
      %v2835 = vadd.f32 %v517, %v2834
      %v2836 = vpop.f32.mrf.mxu0
      %v2837 = vadd.f32 %v517, %v2836
      %2838 = vmatmul.bf16.gmra.mxu0 %v353
      %v2839 = vpop.f32.mrf.mxu0
      %v2840 = vadd.f32 %v517, %v2839
      %v2841 = vpop.f32.mrf.mxu0
      %v2842 = vadd.f32 %v517, %v2841
      %2843 = vmatmul.bf16.gmra.mxu0 %v355
      %v2844 = vpop.f32.mrf.mxu0
      %v2845 = vadd.f32 %v517, %v2844
      %v2846 = vpop.f32.mrf.mxu0
      %v2847 = vadd.f32 %v517, %v2846
      %2848 = vmatmul.bf16.gmra.mxu0 %v357
      %v2849 = vpop.f32.mrf.mxu0
      %v2850 = vadd.f32 %v517, %v2849
      %v2851 = vpop.f32.mrf.mxu0
      %v2852 = vadd.f32 %v517, %v2851
      %2853 = vmatmul.bf16.gmra.mxu0 %v359
      %v2854 = vpop.f32.mrf.mxu0
      %v2855 = vadd.f32 %v517, %v2854
      %v2856 = vpop.f32.mrf.mxu0
      %v2857 = vadd.f32 %v517, %v2856
      %2858 = vmatmul.bf16.gmra.mxu0 %v361
      %v2859 = vpop.f32.mrf.mxu0
      %v2860 = vadd.f32 %v517, %v2859
      %v2861 = vpop.f32.mrf.mxu0
      %v2862 = vadd.f32 %v517, %v2861
      %2863 = vmatmul.bf16.gmra.mxu0 %v363
      %v2864 = vpop.f32.mrf.mxu0
      %v2865 = vadd.f32 %v517, %v2864
      %v2866 = vpop.f32.mrf.mxu0
      %v2867 = vadd.f32 %v517, %v2866
      %2868 = vmatmul.bf16.gmra.mxu0 %v365
      %v2869 = vpop.f32.mrf.mxu0
      %v2870 = vadd.f32 %v517, %v2869
      %v2871 = vpop.f32.mrf.mxu0
      %v2872 = vadd.f32 %v517, %v2871
      %2873 = vmatmul.bf16.gmra.mxu0 %v367
      %v2874 = vpop.f32.mrf.mxu0
      %v2875 = vadd.f32 %v517, %v2874
      %v2876 = vpop.f32.mrf.mxu0
      %v2877 = vadd.f32 %v517, %v2876
      %2878 = vmatmul.bf16.gmra.mxu0 %v369
      %v2879 = vpop.f32.mrf.mxu0
      %v2880 = vadd.f32 %v517, %v2879
      %v2881 = vpop.f32.mrf.mxu0
      %v2882 = vadd.f32 %v517, %v2881
      %2883 = vmatmul.bf16.gmra.mxu0 %v371
      %v2884 = vpop.f32.mrf.mxu0
      %v2885 = vadd.f32 %v517, %v2884
      %v2886 = vpop.f32.mrf.mxu0
      %v2887 = vadd.f32 %v517, %v2886
      %2888 = vmatmul.bf16.gmra.mxu0 %v373
      %v2889 = vpop.f32.mrf.mxu0
      %v2890 = vadd.f32 %v517, %v2889
      %v2891 = vpop.f32.mrf.mxu0
      %v2892 = vadd.f32 %v517, %v2891
      %2893 = vmatmul.bf16.gmra.mxu0 %v375
      %v2894 = vpop.f32.mrf.mxu0
      %v2895 = vadd.f32 %v517, %v2894
      %v2896 = vpop.f32.mrf.mxu0
      %v2897 = vadd.f32 %v517, %v2896
      %2898 = vmatmul.bf16.gmra.mxu0 %v377
      %v2899 = vpop.f32.mrf.mxu0
      %v2900 = vadd.f32 %v517, %v2899
      %v2901 = vpop.f32.mrf.mxu0
      %v2902 = vadd.f32 %v517, %v2901
      %2903 = vmatmul.bf16.gmra.mxu0 %v379
      %v2904 = vpop.f32.mrf.mxu0
      %v2905 = vadd.f32 %v517, %v2904
      %v2906 = vpop.f32.mrf.mxu0
      %v2907 = vadd.f32 %v517, %v2906
      %2908 = vdwg.mxu0
      %2909 = vmatpush.bf16.msra.mxu0 %v1037
      %2910 = vmatpush.bf16.msra.mxu0 %v1029
      %2911 = vmatpush.bf16.msra.mxu0 %v1021
      %2912 = vmatpush.bf16.msra.mxu0 %v1013
      %2913 = vmatpush.bf16.msra.mxu0 %v1005
      %2914 = vmatpush.bf16.msra.mxu0 %v997
      %2915 = vmatpush.bf16.msra.mxu0 %v989
      %2916 = vmatpush.bf16.msra.mxu0 %v981
      %2917 = vmatmul.bf16.gmra.mxu0 %v332
      %v2918 = vpop.f32.mrf.mxu0
      %v2919 = vadd.f32 %v2785, %v2918
      %v2920 = vpop.f32.mrf.mxu0
      %v2921 = vadd.f32 %v2787, %v2920
      %2922 = vmatmul.bf16.gmra.mxu0 %v334
      %v2923 = vpop.f32.mrf.mxu0
      %v2924 = vadd.f32 %v2790, %v2923
      %v2925 = vpop.f32.mrf.mxu0
      %v2926 = vadd.f32 %v2792, %v2925
      %2927 = vmatmul.bf16.gmra.mxu0 %v336
      %v2928 = vpop.f32.mrf.mxu0
      %v2929 = vadd.f32 %v2795, %v2928
      %v2930 = vpop.f32.mrf.mxu0
      %v2931 = vadd.f32 %v2797, %v2930
      %2932 = vmatmul.bf16.gmra.mxu0 %v338
      %v2933 = vpop.f32.mrf.mxu0
      %v2934 = vadd.f32 %v2800, %v2933
      %v2935 = vpop.f32.mrf.mxu0
      %v2936 = vadd.f32 %v2802, %v2935
      %2937 = vmatmul.bf16.gmra.mxu0 %v340
      %v2938 = vpop.f32.mrf.mxu0
      %v2939 = vadd.f32 %v2805, %v2938
      %v2940 = vpop.f32.mrf.mxu0
      %v2941 = vadd.f32 %v2807, %v2940
      %2942 = vmatmul.bf16.gmra.mxu0 %v342
      %v2943 = vpop.f32.mrf.mxu0
      %v2944 = vadd.f32 %v2810, %v2943
      %v2945 = vpop.f32.mrf.mxu0
      %v2946 = vadd.f32 %v2812, %v2945
      %2947 = vmatmul.bf16.gmra.mxu0 %v344
      %v2948 = vpop.f32.mrf.mxu0
      %v2949 = vadd.f32 %v2815, %v2948
      %v2950 = vpop.f32.mrf.mxu0
      %v2951 = vadd.f32 %v2817, %v2950
      %2952 = vmatmul.bf16.gmra.mxu0 %v346
      %v2953 = vpop.f32.mrf.mxu0
      %v2954 = vadd.f32 %v2820, %v2953
      %v2955 = vpop.f32.mrf.mxu0
      %v2956 = vadd.f32 %v2822, %v2955
      %2957 = vmatmul.bf16.gmra.mxu0 %v348
      %v2958 = vpop.f32.mrf.mxu0
      %v2959 = vadd.f32 %v2825, %v2958
      %v2960 = vpop.f32.mrf.mxu0
      %v2961 = vadd.f32 %v2827, %v2960
      %2962 = vmatmul.bf16.gmra.mxu0 %v350
      %v2963 = vpop.f32.mrf.mxu0
      %v2964 = vadd.f32 %v2830, %v2963
      %v2965 = vpop.f32.mrf.mxu0
      %v2966 = vadd.f32 %v2832, %v2965
      %2967 = vmatmul.bf16.gmra.mxu0 %v352
      %v2968 = vpop.f32.mrf.mxu0
      %v2969 = vadd.f32 %v2835, %v2968
      %v2970 = vpop.f32.mrf.mxu0
      %v2971 = vadd.f32 %v2837, %v2970
      %2972 = vmatmul.bf16.gmra.mxu0 %v354
      %v2973 = vpop.f32.mrf.mxu0
      %v2974 = vadd.f32 %v2840, %v2973
      %v2975 = vpop.f32.mrf.mxu0
      %v2976 = vadd.f32 %v2842, %v2975
      %2977 = vmatmul.bf16.gmra.mxu0 %v356
      %v2978 = vpop.f32.mrf.mxu0
      %v2979 = vadd.f32 %v2845, %v2978
      %v2980 = vpop.f32.mrf.mxu0
      %v2981 = vadd.f32 %v2847, %v2980
      %2982 = vmatmul.bf16.gmra.mxu0 %v358
      %v2983 = vpop.f32.mrf.mxu0
      %v2984 = vadd.f32 %v2850, %v2983
      %v2985 = vpop.f32.mrf.mxu0
      %v2986 = vadd.f32 %v2852, %v2985
      %2987 = vmatmul.bf16.gmra.mxu0 %v360
      %v2988 = vpop.f32.mrf.mxu0
      %v2989 = vadd.f32 %v2855, %v2988
      %v2990 = vpop.f32.mrf.mxu0
      %v2991 = vadd.f32 %v2857, %v2990
      %2992 = vmatmul.bf16.gmra.mxu0 %v362
      %v2993 = vpop.f32.mrf.mxu0
      %v2994 = vadd.f32 %v2860, %v2993
      %v2995 = vpop.f32.mrf.mxu0
      %v2996 = vadd.f32 %v2862, %v2995
      %2997 = vmatmul.bf16.gmra.mxu0 %v364
      %v2998 = vpop.f32.mrf.mxu0
      %v2999 = vadd.f32 %v2865, %v2998
      %v3000 = vpop.f32.mrf.mxu0
      %v3001 = vadd.f32 %v2867, %v3000
      %3002 = vmatmul.bf16.gmra.mxu0 %v366
      %v3003 = vpop.f32.mrf.mxu0
      %v3004 = vadd.f32 %v2870, %v3003
      %v3005 = vpop.f32.mrf.mxu0
      %v3006 = vadd.f32 %v2872, %v3005
      %3007 = vmatmul.bf16.gmra.mxu0 %v368
      %v3008 = vpop.f32.mrf.mxu0
      %v3009 = vadd.f32 %v2875, %v3008
      %v3010 = vpop.f32.mrf.mxu0
      %v3011 = vadd.f32 %v2877, %v3010
      %3012 = vmatmul.bf16.gmra.mxu0 %v370
      %v3013 = vpop.f32.mrf.mxu0
      %v3014 = vadd.f32 %v2880, %v3013
      %v3015 = vpop.f32.mrf.mxu0
      %v3016 = vadd.f32 %v2882, %v3015
      %3017 = vmatmul.bf16.gmra.mxu0 %v372
      %v3018 = vpop.f32.mrf.mxu0
      %v3019 = vadd.f32 %v2885, %v3018
      %v3020 = vpop.f32.mrf.mxu0
      %v3021 = vadd.f32 %v2887, %v3020
      %3022 = vmatmul.bf16.gmra.mxu0 %v374
      %v3023 = vpop.f32.mrf.mxu0
      %v3024 = vadd.f32 %v2890, %v3023
      %v3025 = vpop.f32.mrf.mxu0
      %v3026 = vadd.f32 %v2892, %v3025
      %3027 = vmatmul.bf16.gmra.mxu0 %v376
      %v3028 = vpop.f32.mrf.mxu0
      %v3029 = vadd.f32 %v2895, %v3028
      %v3030 = vpop.f32.mrf.mxu0
      %v3031 = vadd.f32 %v2897, %v3030
      %3032 = vmatmul.bf16.gmra.mxu0 %v378
      %v3033 = vpop.f32.mrf.mxu0
      %v3034 = vadd.f32 %v2900, %v3033
      %v3035 = vpop.f32.mrf.mxu0
      %v3036 = vadd.f32 %v2902, %v3035
      %3037 = vmatmul.bf16.gmra.mxu0 %v380
      %v3038 = vpop.f32.mrf.mxu0
      %v3039 = vadd.f32 %v2905, %v3038
      %v3040 = vpop.f32.mrf.mxu0
      %v3041 = vadd.f32 %v2907, %v3040
      %3042 = vdwg.mxu0
      %3043 = vmatpush.bf16.msra.mxu0 %v974
      %3044 = vmatpush.bf16.msra.mxu0 %v966
      %3045 = vmatpush.bf16.msra.mxu0 %v958
      %3046 = vmatpush.bf16.msra.mxu0 %v950
      %3047 = vmatpush.bf16.msra.mxu0 %v942
      %3048 = vmatpush.bf16.msra.mxu0 %v934
      %3049 = vmatpush.bf16.msra.mxu0 %v926
      %3050 = vmatpush.bf16.msra.mxu0 %v918
      %3051 = vmatmul.bf16.gmra.mxu0 %v331
      %v3052 = vpop.f32.mrf.mxu0
      %v3053 = vadd.f32 %v518, %v3052
      %v3054 = vpop.f32.mrf.mxu0
      %v3055 = vadd.f32 %v518, %v3054
      %3056 = vmatmul.bf16.gmra.mxu0 %v333
      %v3057 = vpop.f32.mrf.mxu0
      %v3058 = vadd.f32 %v518, %v3057
      %v3059 = vpop.f32.mrf.mxu0
      %v3060 = vadd.f32 %v518, %v3059
      %3061 = vmatmul.bf16.gmra.mxu0 %v335
      %v3062 = vpop.f32.mrf.mxu0
      %v3063 = vadd.f32 %v518, %v3062
      %v3064 = vpop.f32.mrf.mxu0
      %v3065 = vadd.f32 %v518, %v3064
      %3066 = vmatmul.bf16.gmra.mxu0 %v337
      %v3067 = vpop.f32.mrf.mxu0
      %v3068 = vadd.f32 %v518, %v3067
      %v3069 = vpop.f32.mrf.mxu0
      %v3070 = vadd.f32 %v518, %v3069
      %3071 = vmatmul.bf16.gmra.mxu0 %v339
      %v3072 = vpop.f32.mrf.mxu0
      %v3073 = vadd.f32 %v518, %v3072
      %v3074 = vpop.f32.mrf.mxu0
      %v3075 = vadd.f32 %v518, %v3074
      %3076 = vmatmul.bf16.gmra.mxu0 %v341
      %v3077 = vpop.f32.mrf.mxu0
      %v3078 = vadd.f32 %v518, %v3077
      %v3079 = vpop.f32.mrf.mxu0
      %v3080 = vadd.f32 %v518, %v3079
      %3081 = vmatmul.bf16.gmra.mxu0 %v343
      %v3082 = vpop.f32.mrf.mxu0
      %v3083 = vadd.f32 %v518, %v3082
      %v3084 = vpop.f32.mrf.mxu0
      %v3085 = vadd.f32 %v518, %v3084
      %3086 = vmatmul.bf16.gmra.mxu0 %v345
      %v3087 = vpop.f32.mrf.mxu0
      %v3088 = vadd.f32 %v518, %v3087
      %v3089 = vpop.f32.mrf.mxu0
      %v3090 = vadd.f32 %v518, %v3089
      %3091 = vmatmul.bf16.gmra.mxu0 %v347
      %v3092 = vpop.f32.mrf.mxu0
      %v3093 = vadd.f32 %v518, %v3092
      %v3094 = vpop.f32.mrf.mxu0
      %v3095 = vadd.f32 %v518, %v3094
      %3096 = vmatmul.bf16.gmra.mxu0 %v349
      %v3097 = vpop.f32.mrf.mxu0
      %v3098 = vadd.f32 %v518, %v3097
      %v3099 = vpop.f32.mrf.mxu0
      %v3100 = vadd.f32 %v518, %v3099
      %3101 = vmatmul.bf16.gmra.mxu0 %v351
      %v3102 = vpop.f32.mrf.mxu0
      %v3103 = vadd.f32 %v518, %v3102
      %v3104 = vpop.f32.mrf.mxu0
      %v3105 = vadd.f32 %v518, %v3104
      %3106 = vmatmul.bf16.gmra.mxu0 %v353
      %v3107 = vpop.f32.mrf.mxu0
      %v3108 = vadd.f32 %v518, %v3107
      %v3109 = vpop.f32.mrf.mxu0
      %v3110 = vadd.f32 %v518, %v3109
      %3111 = vmatmul.bf16.gmra.mxu0 %v355
      %v3112 = vpop.f32.mrf.mxu0
      %v3113 = vadd.f32 %v518, %v3112
      %v3114 = vpop.f32.mrf.mxu0
      %v3115 = vadd.f32 %v518, %v3114
      %3116 = vmatmul.bf16.gmra.mxu0 %v357
      %v3117 = vpop.f32.mrf.mxu0
      %v3118 = vadd.f32 %v518, %v3117
      %v3119 = vpop.f32.mrf.mxu0
      %v3120 = vadd.f32 %v518, %v3119
      %3121 = vmatmul.bf16.gmra.mxu0 %v359
      %v3122 = vpop.f32.mrf.mxu0
      %v3123 = vadd.f32 %v518, %v3122
      %v3124 = vpop.f32.mrf.mxu0
      %v3125 = vadd.f32 %v518, %v3124
      %3126 = vmatmul.bf16.gmra.mxu0 %v361
      %v3127 = vpop.f32.mrf.mxu0
      %v3128 = vadd.f32 %v518, %v3127
      %v3129 = vpop.f32.mrf.mxu0
      %v3130 = vadd.f32 %v518, %v3129
      %3131 = vmatmul.bf16.gmra.mxu0 %v363
      %v3132 = vpop.f32.mrf.mxu0
      %v3133 = vadd.f32 %v518, %v3132
      %v3134 = vpop.f32.mrf.mxu0
      %v3135 = vadd.f32 %v518, %v3134
      %3136 = vmatmul.bf16.gmra.mxu0 %v365
      %v3137 = vpop.f32.mrf.mxu0
      %v3138 = vadd.f32 %v518, %v3137
      %v3139 = vpop.f32.mrf.mxu0
      %v3140 = vadd.f32 %v518, %v3139
      %3141 = vmatmul.bf16.gmra.mxu0 %v367
      %v3142 = vpop.f32.mrf.mxu0
      %v3143 = vadd.f32 %v518, %v3142
      %v3144 = vpop.f32.mrf.mxu0
      %v3145 = vadd.f32 %v518, %v3144
      %3146 = vmatmul.bf16.gmra.mxu0 %v369
      %v3147 = vpop.f32.mrf.mxu0
      %v3148 = vadd.f32 %v518, %v3147
      %v3149 = vpop.f32.mrf.mxu0
      %v3150 = vadd.f32 %v518, %v3149
      %3151 = vmatmul.bf16.gmra.mxu0 %v371
      %v3152 = vpop.f32.mrf.mxu0
      %v3153 = vadd.f32 %v518, %v3152
      %v3154 = vpop.f32.mrf.mxu0
      %v3155 = vadd.f32 %v518, %v3154
      %3156 = vmatmul.bf16.gmra.mxu0 %v373
      %v3157 = vpop.f32.mrf.mxu0
      %v3158 = vadd.f32 %v518, %v3157
      %v3159 = vpop.f32.mrf.mxu0
      %v3160 = vadd.f32 %v518, %v3159
      %3161 = vmatmul.bf16.gmra.mxu0 %v375
      %v3162 = vpop.f32.mrf.mxu0
      %v3163 = vadd.f32 %v518, %v3162
      %v3164 = vpop.f32.mrf.mxu0
      %v3165 = vadd.f32 %v518, %v3164
      %3166 = vmatmul.bf16.gmra.mxu0 %v377
      %v3167 = vpop.f32.mrf.mxu0
      %v3168 = vadd.f32 %v518, %v3167
      %v3169 = vpop.f32.mrf.mxu0
      %v3170 = vadd.f32 %v518, %v3169
      %3171 = vmatmul.bf16.gmra.mxu0 %v379
      %v3172 = vpop.f32.mrf.mxu0
      %v3173 = vadd.f32 %v518, %v3172
      %v3174 = vpop.f32.mrf.mxu0
      %v3175 = vadd.f32 %v518, %v3174
      %3176 = vdwg.mxu0
      %3177 = vmatpush.bf16.msra.mxu0 %v1038
      %3178 = vmatpush.bf16.msra.mxu0 %v1030
      %3179 = vmatpush.bf16.msra.mxu0 %v1022
      %3180 = vmatpush.bf16.msra.mxu0 %v1014
      %3181 = vmatpush.bf16.msra.mxu0 %v1006
      %3182 = vmatpush.bf16.msra.mxu0 %v998
      %3183 = vmatpush.bf16.msra.mxu0 %v990
      %3184 = vmatpush.bf16.msra.mxu0 %v982
      %3185 = vmatmul.bf16.gmra.mxu0 %v332
      %v3186 = vpop.f32.mrf.mxu0
      %v3187 = vadd.f32 %v3053, %v3186
      %v3188 = vpop.f32.mrf.mxu0
      %v3189 = vadd.f32 %v3055, %v3188
      %3190 = vmatmul.bf16.gmra.mxu0 %v334
      %v3191 = vpop.f32.mrf.mxu0
      %v3192 = vadd.f32 %v3058, %v3191
      %v3193 = vpop.f32.mrf.mxu0
      %v3194 = vadd.f32 %v3060, %v3193
      %3195 = vmatmul.bf16.gmra.mxu0 %v336
      %v3196 = vpop.f32.mrf.mxu0
      %v3197 = vadd.f32 %v3063, %v3196
      %v3198 = vpop.f32.mrf.mxu0
      %v3199 = vadd.f32 %v3065, %v3198
      %3200 = vmatmul.bf16.gmra.mxu0 %v338
      %v3201 = vpop.f32.mrf.mxu0
      %v3202 = vadd.f32 %v3068, %v3201
      %v3203 = vpop.f32.mrf.mxu0
      %v3204 = vadd.f32 %v3070, %v3203
      %3205 = vmatmul.bf16.gmra.mxu0 %v340
      %v3206 = vpop.f32.mrf.mxu0
      %v3207 = vadd.f32 %v3073, %v3206
      %v3208 = vpop.f32.mrf.mxu0
      %v3209 = vadd.f32 %v3075, %v3208
      %3210 = vmatmul.bf16.gmra.mxu0 %v342
      %v3211 = vpop.f32.mrf.mxu0
      %v3212 = vadd.f32 %v3078, %v3211
      %v3213 = vpop.f32.mrf.mxu0
      %v3214 = vadd.f32 %v3080, %v3213
      %3215 = vmatmul.bf16.gmra.mxu0 %v344
      %v3216 = vpop.f32.mrf.mxu0
      %v3217 = vadd.f32 %v3083, %v3216
      %v3218 = vpop.f32.mrf.mxu0
      %v3219 = vadd.f32 %v3085, %v3218
      %3220 = vmatmul.bf16.gmra.mxu0 %v346
      %v3221 = vpop.f32.mrf.mxu0
      %v3222 = vadd.f32 %v3088, %v3221
      %v3223 = vpop.f32.mrf.mxu0
      %v3224 = vadd.f32 %v3090, %v3223
      %3225 = vmatmul.bf16.gmra.mxu0 %v348
      %v3226 = vpop.f32.mrf.mxu0
      %v3227 = vadd.f32 %v3093, %v3226
      %v3228 = vpop.f32.mrf.mxu0
      %v3229 = vadd.f32 %v3095, %v3228
      %3230 = vmatmul.bf16.gmra.mxu0 %v350
      %v3231 = vpop.f32.mrf.mxu0
      %v3232 = vadd.f32 %v3098, %v3231
      %v3233 = vpop.f32.mrf.mxu0
      %v3234 = vadd.f32 %v3100, %v3233
      %3235 = vmatmul.bf16.gmra.mxu0 %v352
      %v3236 = vpop.f32.mrf.mxu0
      %v3237 = vadd.f32 %v3103, %v3236
      %v3238 = vpop.f32.mrf.mxu0
      %v3239 = vadd.f32 %v3105, %v3238
      %3240 = vmatmul.bf16.gmra.mxu0 %v354
      %v3241 = vpop.f32.mrf.mxu0
      %v3242 = vadd.f32 %v3108, %v3241
      %v3243 = vpop.f32.mrf.mxu0
      %v3244 = vadd.f32 %v3110, %v3243
      %3245 = vmatmul.bf16.gmra.mxu0 %v356
      %v3246 = vpop.f32.mrf.mxu0
      %v3247 = vadd.f32 %v3113, %v3246
      %v3248 = vpop.f32.mrf.mxu0
      %v3249 = vadd.f32 %v3115, %v3248
      %3250 = vmatmul.bf16.gmra.mxu0 %v358
      %v3251 = vpop.f32.mrf.mxu0
      %v3252 = vadd.f32 %v3118, %v3251
      %v3253 = vpop.f32.mrf.mxu0
      %v3254 = vadd.f32 %v3120, %v3253
      %3255 = vmatmul.bf16.gmra.mxu0 %v360
      %v3256 = vpop.f32.mrf.mxu0
      %v3257 = vadd.f32 %v3123, %v3256
      %v3258 = vpop.f32.mrf.mxu0
      %v3259 = vadd.f32 %v3125, %v3258
      %3260 = vmatmul.bf16.gmra.mxu0 %v362
      %v3261 = vpop.f32.mrf.mxu0
      %v3262 = vadd.f32 %v3128, %v3261
      %v3263 = vpop.f32.mrf.mxu0
      %v3264 = vadd.f32 %v3130, %v3263
      %3265 = vmatmul.bf16.gmra.mxu0 %v364
      %v3266 = vpop.f32.mrf.mxu0
      %v3267 = vadd.f32 %v3133, %v3266
      %v3268 = vpop.f32.mrf.mxu0
      %v3269 = vadd.f32 %v3135, %v3268
      %3270 = vmatmul.bf16.gmra.mxu0 %v366
      %v3271 = vpop.f32.mrf.mxu0
      %v3272 = vadd.f32 %v3138, %v3271
      %v3273 = vpop.f32.mrf.mxu0
      %v3274 = vadd.f32 %v3140, %v3273
      %3275 = vmatmul.bf16.gmra.mxu0 %v368
      %v3276 = vpop.f32.mrf.mxu0
      %v3277 = vadd.f32 %v3143, %v3276
      %v3278 = vpop.f32.mrf.mxu0
      %v3279 = vadd.f32 %v3145, %v3278
      %3280 = vmatmul.bf16.gmra.mxu0 %v370
      %v3281 = vpop.f32.mrf.mxu0
      %v3282 = vadd.f32 %v3148, %v3281
      %v3283 = vpop.f32.mrf.mxu0
      %v3284 = vadd.f32 %v3150, %v3283
      %3285 = vmatmul.bf16.gmra.mxu0 %v372
      %v3286 = vpop.f32.mrf.mxu0
      %v3287 = vadd.f32 %v3153, %v3286
      %v3288 = vpop.f32.mrf.mxu0
      %v3289 = vadd.f32 %v3155, %v3288
      %3290 = vmatmul.bf16.gmra.mxu0 %v374
      %v3291 = vpop.f32.mrf.mxu0
      %v3292 = vadd.f32 %v3158, %v3291
      %v3293 = vpop.f32.mrf.mxu0
      %v3294 = vadd.f32 %v3160, %v3293
      %3295 = vmatmul.bf16.gmra.mxu0 %v376
      %v3296 = vpop.f32.mrf.mxu0
      %v3297 = vadd.f32 %v3163, %v3296
      %v3298 = vpop.f32.mrf.mxu0
      %v3299 = vadd.f32 %v3165, %v3298
      %3300 = vmatmul.bf16.gmra.mxu0 %v378
      %v3301 = vpop.f32.mrf.mxu0
      %v3302 = vadd.f32 %v3168, %v3301
      %v3303 = vpop.f32.mrf.mxu0
      %v3304 = vadd.f32 %v3170, %v3303
      %3305 = vmatmul.bf16.gmra.mxu0 %v380
      %v3306 = vpop.f32.mrf.mxu0
      %v3307 = vadd.f32 %v3173, %v3306
      %v3308 = vpop.f32.mrf.mxu0
      %v3309 = vadd.f32 %v3175, %v3308
      %3310 = vdwg.mxu0
      %v3311 = vmax.f32 %v1311, 0.0
      %v3312 = vmax.f32 %v1579, 0.0
      %v3313 = vmax.f32 %v1847, 0.0
      %v3314 = vmax.f32 %v2115, 0.0
      %v3315 = vmax.f32 %v2383, 0.0
      %v3316 = vmax.f32 %v2651, 0.0
      %v3317 = vmax.f32 %v2919, 0.0
      %v3318 = vmax.f32 %v3187, 0.0
      %v3319 = vmax.f32 %v1313, 0.0
      %v3320 = vmax.f32 %v1581, 0.0
      %v3321 = vmax.f32 %v1849, 0.0
      %v3322 = vmax.f32 %v2117, 0.0
      %v3323 = vmax.f32 %v2385, 0.0
      %v3324 = vmax.f32 %v2653, 0.0
      %v3325 = vmax.f32 %v2921, 0.0
      %v3326 = vmax.f32 %v3189, 0.0
      %v3327 = vmax.f32 %v1316, 0.0
      %v3328 = vmax.f32 %v1584, 0.0
      %v3329 = vmax.f32 %v1852, 0.0
      %v3330 = vmax.f32 %v2120, 0.0
      %v3331 = vmax.f32 %v2388, 0.0
      %v3332 = vmax.f32 %v2656, 0.0
      %v3333 = vmax.f32 %v2924, 0.0
      %v3334 = vmax.f32 %v3192, 0.0
      %v3335 = vmax.f32 %v1318, 0.0
      %v3336 = vmax.f32 %v1586, 0.0
      %v3337 = vmax.f32 %v1854, 0.0
      %v3338 = vmax.f32 %v2122, 0.0
      %v3339 = vmax.f32 %v2390, 0.0
      %v3340 = vmax.f32 %v2658, 0.0
      %v3341 = vmax.f32 %v2926, 0.0
      %v3342 = vmax.f32 %v3194, 0.0
      %v3343 = vmax.f32 %v1321, 0.0
      %v3344 = vmax.f32 %v1589, 0.0
      %v3345 = vmax.f32 %v1857, 0.0
      %v3346 = vmax.f32 %v2125, 0.0
      %v3347 = vmax.f32 %v2393, 0.0
      %v3348 = vmax.f32 %v2661, 0.0
      %v3349 = vmax.f32 %v2929, 0.0
      %v3350 = vmax.f32 %v3197, 0.0
      %v3351 = vmax.f32 %v1323, 0.0
      %v3352 = vmax.f32 %v1591, 0.0
      %v3353 = vmax.f32 %v1859, 0.0
      %v3354 = vmax.f32 %v2127, 0.0
      %v3355 = vmax.f32 %v2395, 0.0
      %v3356 = vmax.f32 %v2663, 0.0
      %v3357 = vmax.f32 %v2931, 0.0
      %v3358 = vmax.f32 %v3199, 0.0
      %v3359 = vmax.f32 %v1326, 0.0
      %v3360 = vmax.f32 %v1594, 0.0
      %v3361 = vmax.f32 %v1862, 0.0
      %v3362 = vmax.f32 %v2130, 0.0
      %v3363 = vmax.f32 %v2398, 0.0
      %v3364 = vmax.f32 %v2666, 0.0
      %v3365 = vmax.f32 %v2934, 0.0
      %v3366 = vmax.f32 %v3202, 0.0
      %v3367 = vmax.f32 %v1328, 0.0
      %v3368 = vmax.f32 %v1596, 0.0
      %v3369 = vmax.f32 %v1864, 0.0
      %v3370 = vmax.f32 %v2132, 0.0
      %v3371 = vmax.f32 %v2400, 0.0
      %v3372 = vmax.f32 %v2668, 0.0
      %v3373 = vmax.f32 %v2936, 0.0
      %v3374 = vmax.f32 %v3204, 0.0
      %v3375 = vmax.f32 %v1331, 0.0
      %v3376 = vmax.f32 %v1599, 0.0
      %v3377 = vmax.f32 %v1867, 0.0
      %v3378 = vmax.f32 %v2135, 0.0
      %v3379 = vmax.f32 %v2403, 0.0
      %v3380 = vmax.f32 %v2671, 0.0
      %v3381 = vmax.f32 %v2939, 0.0
      %v3382 = vmax.f32 %v3207, 0.0
      %v3383 = vmax.f32 %v1333, 0.0
      %v3384 = vmax.f32 %v1601, 0.0
      %v3385 = vmax.f32 %v1869, 0.0
      %v3386 = vmax.f32 %v2137, 0.0
      %v3387 = vmax.f32 %v2405, 0.0
      %v3388 = vmax.f32 %v2673, 0.0
      %v3389 = vmax.f32 %v2941, 0.0
      %v3390 = vmax.f32 %v3209, 0.0
      %v3391 = vmax.f32 %v1336, 0.0
      %v3392 = vmax.f32 %v1604, 0.0
      %v3393 = vmax.f32 %v1872, 0.0
      %v3394 = vmax.f32 %v2140, 0.0
      %v3395 = vmax.f32 %v2408, 0.0
      %v3396 = vmax.f32 %v2676, 0.0
      %v3397 = vmax.f32 %v2944, 0.0
      %v3398 = vmax.f32 %v3212, 0.0
      %v3399 = vmax.f32 %v1338, 0.0
      %v3400 = vmax.f32 %v1606, 0.0
      %v3401 = vmax.f32 %v1874, 0.0
      %v3402 = vmax.f32 %v2142, 0.0
      %v3403 = vmax.f32 %v2410, 0.0
      %v3404 = vmax.f32 %v2678, 0.0
      %v3405 = vmax.f32 %v2946, 0.0
      %v3406 = vmax.f32 %v3214, 0.0
      %v3407 = vmax.f32 %v1341, 0.0
      %v3408 = vmax.f32 %v1609, 0.0
      %v3409 = vmax.f32 %v1877, 0.0
      %v3410 = vmax.f32 %v2145, 0.0
      %v3411 = vmax.f32 %v2413, 0.0
      %v3412 = vmax.f32 %v2681, 0.0
      %v3413 = vmax.f32 %v2949, 0.0
      %v3414 = vmax.f32 %v3217, 0.0
      %v3415 = vmax.f32 %v1343, 0.0
      %v3416 = vmax.f32 %v1611, 0.0
      %v3417 = vmax.f32 %v1879, 0.0
      %v3418 = vmax.f32 %v2147, 0.0
      %v3419 = vmax.f32 %v2415, 0.0
      %v3420 = vmax.f32 %v2683, 0.0
      %v3421 = vmax.f32 %v2951, 0.0
      %v3422 = vmax.f32 %v3219, 0.0
      %v3423 = vmax.f32 %v1346, 0.0
      %v3424 = vmax.f32 %v1614, 0.0
      %v3425 = vmax.f32 %v1882, 0.0
      %v3426 = vmax.f32 %v2150, 0.0
      %v3427 = vmax.f32 %v2418, 0.0
      %v3428 = vmax.f32 %v2686, 0.0
      %v3429 = vmax.f32 %v2954, 0.0
      %v3430 = vmax.f32 %v3222, 0.0
      %v3431 = vmax.f32 %v1348, 0.0
      %v3432 = vmax.f32 %v1616, 0.0
      %v3433 = vmax.f32 %v1884, 0.0
      %v3434 = vmax.f32 %v2152, 0.0
      %v3435 = vmax.f32 %v2420, 0.0
      %v3436 = vmax.f32 %v2688, 0.0
      %v3437 = vmax.f32 %v2956, 0.0
      %v3438 = vmax.f32 %v3224, 0.0
      %v3439 = vmax.f32 %v1351, 0.0
      %v3440 = vmax.f32 %v1619, 0.0
      %v3441 = vmax.f32 %v1887, 0.0
      %v3442 = vmax.f32 %v2155, 0.0
      %v3443 = vmax.f32 %v2423, 0.0
      %v3444 = vmax.f32 %v2691, 0.0
      %v3445 = vmax.f32 %v2959, 0.0
      %v3446 = vmax.f32 %v3227, 0.0
      %v3447 = vmax.f32 %v1353, 0.0
      %v3448 = vmax.f32 %v1621, 0.0
      %v3449 = vmax.f32 %v1889, 0.0
      %v3450 = vmax.f32 %v2157, 0.0
      %v3451 = vmax.f32 %v2425, 0.0
      %v3452 = vmax.f32 %v2693, 0.0
      %v3453 = vmax.f32 %v2961, 0.0
      %v3454 = vmax.f32 %v3229, 0.0
      %v3455 = vmax.f32 %v1356, 0.0
      %v3456 = vmax.f32 %v1624, 0.0
      %v3457 = vmax.f32 %v1892, 0.0
      %v3458 = vmax.f32 %v2160, 0.0
      %v3459 = vmax.f32 %v2428, 0.0
      %v3460 = vmax.f32 %v2696, 0.0
      %v3461 = vmax.f32 %v2964, 0.0
      %v3462 = vmax.f32 %v3232, 0.0
      %v3463 = vmax.f32 %v1358, 0.0
      %v3464 = vmax.f32 %v1626, 0.0
      %v3465 = vmax.f32 %v1894, 0.0
      %v3466 = vmax.f32 %v2162, 0.0
      %v3467 = vmax.f32 %v2430, 0.0
      %v3468 = vmax.f32 %v2698, 0.0
      %v3469 = vmax.f32 %v2966, 0.0
      %v3470 = vmax.f32 %v3234, 0.0
      %v3471 = vmax.f32 %v1361, 0.0
      %v3472 = vmax.f32 %v1629, 0.0
      %v3473 = vmax.f32 %v1897, 0.0
      %v3474 = vmax.f32 %v2165, 0.0
      %v3475 = vmax.f32 %v2433, 0.0
      %v3476 = vmax.f32 %v2701, 0.0
      %v3477 = vmax.f32 %v2969, 0.0
      %v3478 = vmax.f32 %v3237, 0.0
      %v3479 = vmax.f32 %v1363, 0.0
      %v3480 = vmax.f32 %v1631, 0.0
      %v3481 = vmax.f32 %v1899, 0.0
      %v3482 = vmax.f32 %v2167, 0.0
      %v3483 = vmax.f32 %v2435, 0.0
      %v3484 = vmax.f32 %v2703, 0.0
      %v3485 = vmax.f32 %v2971, 0.0
      %v3486 = vmax.f32 %v3239, 0.0
      %v3487 = vmax.f32 %v1366, 0.0
      %v3488 = vmax.f32 %v1634, 0.0
      %v3489 = vmax.f32 %v1902, 0.0
      %v3490 = vmax.f32 %v2170, 0.0
      %v3491 = vmax.f32 %v2438, 0.0
      %v3492 = vmax.f32 %v2706, 0.0
      %v3493 = vmax.f32 %v2974, 0.0
      %v3494 = vmax.f32 %v3242, 0.0
      %v3495 = vmax.f32 %v1368, 0.0
      %v3496 = vmax.f32 %v1636, 0.0
      %v3497 = vmax.f32 %v1904, 0.0
      %v3498 = vmax.f32 %v2172, 0.0
      %v3499 = vmax.f32 %v2440, 0.0
      %v3500 = vmax.f32 %v2708, 0.0
      %v3501 = vmax.f32 %v2976, 0.0
      %v3502 = vmax.f32 %v3244, 0.0
      %v3503 = vmax.f32 %v1371, 0.0
      %v3504 = vmax.f32 %v1639, 0.0
      %v3505 = vmax.f32 %v1907, 0.0
      %v3506 = vmax.f32 %v2175, 0.0
      %v3507 = vmax.f32 %v2443, 0.0
      %v3508 = vmax.f32 %v2711, 0.0
      %v3509 = vmax.f32 %v2979, 0.0
      %v3510 = vmax.f32 %v3247, 0.0
      %v3511 = vmax.f32 %v1373, 0.0
      %v3512 = vmax.f32 %v1641, 0.0
      %v3513 = vmax.f32 %v1909, 0.0
      %v3514 = vmax.f32 %v2177, 0.0
      %v3515 = vmax.f32 %v2445, 0.0
      %v3516 = vmax.f32 %v2713, 0.0
      %v3517 = vmax.f32 %v2981, 0.0
      %v3518 = vmax.f32 %v3249, 0.0
      %v3519 = vmax.f32 %v1376, 0.0
      %v3520 = vmax.f32 %v1644, 0.0
      %v3521 = vmax.f32 %v1912, 0.0
      %v3522 = vmax.f32 %v2180, 0.0
      %v3523 = vmax.f32 %v2448, 0.0
      %v3524 = vmax.f32 %v2716, 0.0
      %v3525 = vmax.f32 %v2984, 0.0
      %v3526 = vmax.f32 %v3252, 0.0
      %v3527 = vmax.f32 %v1378, 0.0
      %v3528 = vmax.f32 %v1646, 0.0
      %v3529 = vmax.f32 %v1914, 0.0
      %v3530 = vmax.f32 %v2182, 0.0
      %v3531 = vmax.f32 %v2450, 0.0
      %v3532 = vmax.f32 %v2718, 0.0
      %v3533 = vmax.f32 %v2986, 0.0
      %v3534 = vmax.f32 %v3254, 0.0
      %v3535 = vmax.f32 %v1381, 0.0
      %v3536 = vmax.f32 %v1649, 0.0
      %v3537 = vmax.f32 %v1917, 0.0
      %v3538 = vmax.f32 %v2185, 0.0
      %v3539 = vmax.f32 %v2453, 0.0
      %v3540 = vmax.f32 %v2721, 0.0
      %v3541 = vmax.f32 %v2989, 0.0
      %v3542 = vmax.f32 %v3257, 0.0
      %v3543 = vmax.f32 %v1383, 0.0
      %v3544 = vmax.f32 %v1651, 0.0
      %v3545 = vmax.f32 %v1919, 0.0
      %v3546 = vmax.f32 %v2187, 0.0
      %v3547 = vmax.f32 %v2455, 0.0
      %v3548 = vmax.f32 %v2723, 0.0
      %v3549 = vmax.f32 %v2991, 0.0
      %v3550 = vmax.f32 %v3259, 0.0
      %v3551 = vmax.f32 %v1386, 0.0
      %v3552 = vmax.f32 %v1654, 0.0
      %v3553 = vmax.f32 %v1922, 0.0
      %v3554 = vmax.f32 %v2190, 0.0
      %v3555 = vmax.f32 %v2458, 0.0
      %v3556 = vmax.f32 %v2726, 0.0
      %v3557 = vmax.f32 %v2994, 0.0
      %v3558 = vmax.f32 %v3262, 0.0
      %v3559 = vmax.f32 %v1388, 0.0
      %v3560 = vmax.f32 %v1656, 0.0
      %v3561 = vmax.f32 %v1924, 0.0
      %v3562 = vmax.f32 %v2192, 0.0
      %v3563 = vmax.f32 %v2460, 0.0
      %v3564 = vmax.f32 %v2728, 0.0
      %v3565 = vmax.f32 %v2996, 0.0
      %v3566 = vmax.f32 %v3264, 0.0
      %v3567 = vmax.f32 %v1391, 0.0
      %v3568 = vmax.f32 %v1659, 0.0
      %v3569 = vmax.f32 %v1927, 0.0
      %v3570 = vmax.f32 %v2195, 0.0
      %v3571 = vmax.f32 %v2463, 0.0
      %v3572 = vmax.f32 %v2731, 0.0
      %v3573 = vmax.f32 %v2999, 0.0
      %v3574 = vmax.f32 %v3267, 0.0
      %v3575 = vmax.f32 %v1393, 0.0
      %v3576 = vmax.f32 %v1661, 0.0
      %v3577 = vmax.f32 %v1929, 0.0
      %v3578 = vmax.f32 %v2197, 0.0
      %v3579 = vmax.f32 %v2465, 0.0
      %v3580 = vmax.f32 %v2733, 0.0
      %v3581 = vmax.f32 %v3001, 0.0
      %v3582 = vmax.f32 %v3269, 0.0
      %v3583 = vmax.f32 %v1396, 0.0
      %v3584 = vmax.f32 %v1664, 0.0
      %v3585 = vmax.f32 %v1932, 0.0
      %v3586 = vmax.f32 %v2200, 0.0
      %v3587 = vmax.f32 %v2468, 0.0
      %v3588 = vmax.f32 %v2736, 0.0
      %v3589 = vmax.f32 %v3004, 0.0
      %v3590 = vmax.f32 %v3272, 0.0
      %v3591 = vmax.f32 %v1398, 0.0
      %v3592 = vmax.f32 %v1666, 0.0
      %v3593 = vmax.f32 %v1934, 0.0
      %v3594 = vmax.f32 %v2202, 0.0
      %v3595 = vmax.f32 %v2470, 0.0
      %v3596 = vmax.f32 %v2738, 0.0
      %v3597 = vmax.f32 %v3006, 0.0
      %v3598 = vmax.f32 %v3274, 0.0
      %v3599 = vmax.f32 %v1401, 0.0
      %v3600 = vmax.f32 %v1669, 0.0
      %v3601 = vmax.f32 %v1937, 0.0
      %v3602 = vmax.f32 %v2205, 0.0
      %v3603 = vmax.f32 %v2473, 0.0
      %v3604 = vmax.f32 %v2741, 0.0
      %v3605 = vmax.f32 %v3009, 0.0
      %v3606 = vmax.f32 %v3277, 0.0
      %v3607 = vmax.f32 %v1403, 0.0
      %v3608 = vmax.f32 %v1671, 0.0
      %v3609 = vmax.f32 %v1939, 0.0
      %v3610 = vmax.f32 %v2207, 0.0
      %v3611 = vmax.f32 %v2475, 0.0
      %v3612 = vmax.f32 %v2743, 0.0
      %v3613 = vmax.f32 %v3011, 0.0
      %v3614 = vmax.f32 %v3279, 0.0
      %v3615 = vmax.f32 %v1406, 0.0
      %v3616 = vmax.f32 %v1674, 0.0
      %v3617 = vmax.f32 %v1942, 0.0
      %v3618 = vmax.f32 %v2210, 0.0
      %v3619 = vmax.f32 %v2478, 0.0
      %v3620 = vmax.f32 %v2746, 0.0
      %v3621 = vmax.f32 %v3014, 0.0
      %v3622 = vmax.f32 %v3282, 0.0
      %v3623 = vmax.f32 %v1408, 0.0
      %v3624 = vmax.f32 %v1676, 0.0
      %v3625 = vmax.f32 %v1944, 0.0
      %v3626 = vmax.f32 %v2212, 0.0
      %v3627 = vmax.f32 %v2480, 0.0
      %v3628 = vmax.f32 %v2748, 0.0
      %v3629 = vmax.f32 %v3016, 0.0
      %v3630 = vmax.f32 %v3284, 0.0
      %v3631 = vmax.f32 %v1411, 0.0
      %v3632 = vmax.f32 %v1679, 0.0
      %v3633 = vmax.f32 %v1947, 0.0
      %v3634 = vmax.f32 %v2215, 0.0
      %v3635 = vmax.f32 %v2483, 0.0
      %v3636 = vmax.f32 %v2751, 0.0
      %v3637 = vmax.f32 %v3019, 0.0
      %v3638 = vmax.f32 %v3287, 0.0
      %v3639 = vmax.f32 %v1413, 0.0
      %v3640 = vmax.f32 %v1681, 0.0
      %v3641 = vmax.f32 %v1949, 0.0
      %v3642 = vmax.f32 %v2217, 0.0
      %v3643 = vmax.f32 %v2485, 0.0
      %v3644 = vmax.f32 %v2753, 0.0
      %v3645 = vmax.f32 %v3021, 0.0
      %v3646 = vmax.f32 %v3289, 0.0
      %v3647 = vmax.f32 %v1416, 0.0
      %v3648 = vmax.f32 %v1684, 0.0
      %v3649 = vmax.f32 %v1952, 0.0
      %v3650 = vmax.f32 %v2220, 0.0
      %v3651 = vmax.f32 %v2488, 0.0
      %v3652 = vmax.f32 %v2756, 0.0
      %v3653 = vmax.f32 %v3024, 0.0
      %v3654 = vmax.f32 %v3292, 0.0
      %v3655 = vmax.f32 %v1418, 0.0
      %v3656 = vmax.f32 %v1686, 0.0
      %v3657 = vmax.f32 %v1954, 0.0
      %v3658 = vmax.f32 %v2222, 0.0
      %v3659 = vmax.f32 %v2490, 0.0
      %v3660 = vmax.f32 %v2758, 0.0
      %v3661 = vmax.f32 %v3026, 0.0
      %v3662 = vmax.f32 %v3294, 0.0
      %v3663 = vmax.f32 %v1421, 0.0
      %v3664 = vmax.f32 %v1689, 0.0
      %v3665 = vmax.f32 %v1957, 0.0
      %v3666 = vmax.f32 %v2225, 0.0
      %v3667 = vmax.f32 %v2493, 0.0
      %v3668 = vmax.f32 %v2761, 0.0
      %v3669 = vmax.f32 %v3029, 0.0
      %v3670 = vmax.f32 %v3297, 0.0
      %v3671 = vmax.f32 %v1423, 0.0
      %v3672 = vmax.f32 %v1691, 0.0
      %v3673 = vmax.f32 %v1959, 0.0
      %v3674 = vmax.f32 %v2227, 0.0
      %v3675 = vmax.f32 %v2495, 0.0
      %v3676 = vmax.f32 %v2763, 0.0
      %v3677 = vmax.f32 %v3031, 0.0
      %v3678 = vmax.f32 %v3299, 0.0
      %v3679 = vmax.f32 %v1426, 0.0
      %v3680 = vmax.f32 %v1694, 0.0
      %v3681 = vmax.f32 %v1962, 0.0
      %v3682 = vmax.f32 %v2230, 0.0
      %v3683 = vmax.f32 %v2498, 0.0
      %v3684 = vmax.f32 %v2766, 0.0
      %v3685 = vmax.f32 %v3034, 0.0
      %v3686 = vmax.f32 %v3302, 0.0
      %v3687 = vmax.f32 %v1428, 0.0
      %v3688 = vmax.f32 %v1696, 0.0
      %v3689 = vmax.f32 %v1964, 0.0
      %v3690 = vmax.f32 %v2232, 0.0
      %v3691 = vmax.f32 %v2500, 0.0
      %v3692 = vmax.f32 %v2768, 0.0
      %v3693 = vmax.f32 %v3036, 0.0
      %v3694 = vmax.f32 %v3304, 0.0
      %v3695 = vmax.f32 %v1431, 0.0
      %v3696 = vmax.f32 %v1699, 0.0
      %v3697 = vmax.f32 %v1967, 0.0
      %v3698 = vmax.f32 %v2235, 0.0
      %v3699 = vmax.f32 %v2503, 0.0
      %v3700 = vmax.f32 %v2771, 0.0
      %v3701 = vmax.f32 %v3039, 0.0
      %v3702 = vmax.f32 %v3307, 0.0
      %v3703 = vmax.f32 %v1433, 0.0
      %v3704 = vmax.f32 %v1701, 0.0
      %v3705 = vmax.f32 %v1969, 0.0
      %v3706 = vmax.f32 %v2237, 0.0
      %v3707 = vmax.f32 %v2505, 0.0
      %v3708 = vmax.f32 %v2773, 0.0
      %v3709 = vmax.f32 %v3041, 0.0
      %v3710 = vmax.f32 %v3309, 0.0
      %v3711 = vpack.c.bf16 %v3319, %v3311
      %v3712 = vpack.c.bf16 %v3320, %v3312
      %v3713 = vpack.c.bf16 %v3321, %v3313
      %v3714 = vpack.c.bf16 %v3322, %v3314
      %v3715 = vpack.c.bf16 %v3323, %v3315
      %v3716 = vpack.c.bf16 %v3324, %v3316
      %v3717 = vpack.c.bf16 %v3325, %v3317
      %v3718 = vpack.c.bf16 %v3326, %v3318
      %v3719 = vpack.c.bf16 %v3335, %v3327
      %v3720 = vpack.c.bf16 %v3336, %v3328
      %v3721 = vpack.c.bf16 %v3337, %v3329
      %v3722 = vpack.c.bf16 %v3338, %v3330
      %v3723 = vpack.c.bf16 %v3339, %v3331
      %v3724 = vpack.c.bf16 %v3340, %v3332
      %v3725 = vpack.c.bf16 %v3341, %v3333
      %v3726 = vpack.c.bf16 %v3342, %v3334
      %v3727 = vpack.c.bf16 %v3351, %v3343
      %v3728 = vpack.c.bf16 %v3352, %v3344
      %v3729 = vpack.c.bf16 %v3353, %v3345
      %v3730 = vpack.c.bf16 %v3354, %v3346
      %v3731 = vpack.c.bf16 %v3355, %v3347
      %v3732 = vpack.c.bf16 %v3356, %v3348
      %v3733 = vpack.c.bf16 %v3357, %v3349
      %v3734 = vpack.c.bf16 %v3358, %v3350
      %v3735 = vpack.c.bf16 %v3367, %v3359
      %v3736 = vpack.c.bf16 %v3368, %v3360
      %v3737 = vpack.c.bf16 %v3369, %v3361
      %v3738 = vpack.c.bf16 %v3370, %v3362
      %v3739 = vpack.c.bf16 %v3371, %v3363
      %v3740 = vpack.c.bf16 %v3372, %v3364
      %v3741 = vpack.c.bf16 %v3373, %v3365
      %v3742 = vpack.c.bf16 %v3374, %v3366
      %v3743 = vpack.c.bf16 %v3383, %v3375
      %v3744 = vpack.c.bf16 %v3384, %v3376
      %v3745 = vpack.c.bf16 %v3385, %v3377
      %v3746 = vpack.c.bf16 %v3386, %v3378
      %v3747 = vpack.c.bf16 %v3387, %v3379
      %v3748 = vpack.c.bf16 %v3388, %v3380
      %v3749 = vpack.c.bf16 %v3389, %v3381
      %v3750 = vpack.c.bf16 %v3390, %v3382
      %v3751 = vpack.c.bf16 %v3399, %v3391
      %v3752 = vpack.c.bf16 %v3400, %v3392
      %v3753 = vpack.c.bf16 %v3401, %v3393
      %v3754 = vpack.c.bf16 %v3402, %v3394
      %v3755 = vpack.c.bf16 %v3403, %v3395
      %v3756 = vpack.c.bf16 %v3404, %v3396
      %v3757 = vpack.c.bf16 %v3405, %v3397
      %v3758 = vpack.c.bf16 %v3406, %v3398
      %v3759 = vpack.c.bf16 %v3415, %v3407
      %v3760 = vpack.c.bf16 %v3416, %v3408
      %v3761 = vpack.c.bf16 %v3417, %v3409
      %v3762 = vpack.c.bf16 %v3418, %v3410
      %v3763 = vpack.c.bf16 %v3419, %v3411
      %v3764 = vpack.c.bf16 %v3420, %v3412
      %v3765 = vpack.c.bf16 %v3421, %v3413
      %v3766 = vpack.c.bf16 %v3422, %v3414
      %v3767 = vpack.c.bf16 %v3431, %v3423
      %v3768 = vpack.c.bf16 %v3432, %v3424
      %v3769 = vpack.c.bf16 %v3433, %v3425
      %v3770 = vpack.c.bf16 %v3434, %v3426
      %v3771 = vpack.c.bf16 %v3435, %v3427
      %v3772 = vpack.c.bf16 %v3436, %v3428
      %v3773 = vpack.c.bf16 %v3437, %v3429
      %v3774 = vpack.c.bf16 %v3438, %v3430
      %v3775 = vpack.c.bf16 %v3447, %v3439
      %v3776 = vpack.c.bf16 %v3448, %v3440
      %v3777 = vpack.c.bf16 %v3449, %v3441
      %v3778 = vpack.c.bf16 %v3450, %v3442
      %v3779 = vpack.c.bf16 %v3451, %v3443
      %v3780 = vpack.c.bf16 %v3452, %v3444
      %v3781 = vpack.c.bf16 %v3453, %v3445
      %v3782 = vpack.c.bf16 %v3454, %v3446
      %v3783 = vpack.c.bf16 %v3463, %v3455
      %v3784 = vpack.c.bf16 %v3464, %v3456
      %v3785 = vpack.c.bf16 %v3465, %v3457
      %v3786 = vpack.c.bf16 %v3466, %v3458
      %v3787 = vpack.c.bf16 %v3467, %v3459
      %v3788 = vpack.c.bf16 %v3468, %v3460
      %v3789 = vpack.c.bf16 %v3469, %v3461
      %v3790 = vpack.c.bf16 %v3470, %v3462
      %v3791 = vpack.c.bf16 %v3479, %v3471
      %v3792 = vpack.c.bf16 %v3480, %v3472
      %v3793 = vpack.c.bf16 %v3481, %v3473
      %v3794 = vpack.c.bf16 %v3482, %v3474
      %v3795 = vpack.c.bf16 %v3483, %v3475
      %v3796 = vpack.c.bf16 %v3484, %v3476
      %v3797 = vpack.c.bf16 %v3485, %v3477
      %v3798 = vpack.c.bf16 %v3486, %v3478
      %v3799 = vpack.c.bf16 %v3495, %v3487
      %v3800 = vpack.c.bf16 %v3496, %v3488
      %v3801 = vpack.c.bf16 %v3497, %v3489
      %v3802 = vpack.c.bf16 %v3498, %v3490
      %v3803 = vpack.c.bf16 %v3499, %v3491
      %v3804 = vpack.c.bf16 %v3500, %v3492
      %v3805 = vpack.c.bf16 %v3501, %v3493
      %v3806 = vpack.c.bf16 %v3502, %v3494
      %v3807 = vpack.c.bf16 %v3511, %v3503
      %v3808 = vpack.c.bf16 %v3512, %v3504
      %v3809 = vpack.c.bf16 %v3513, %v3505
      %v3810 = vpack.c.bf16 %v3514, %v3506
      %v3811 = vpack.c.bf16 %v3515, %v3507
      %v3812 = vpack.c.bf16 %v3516, %v3508
      %v3813 = vpack.c.bf16 %v3517, %v3509
      %v3814 = vpack.c.bf16 %v3518, %v3510
      %v3815 = vpack.c.bf16 %v3527, %v3519
      %v3816 = vpack.c.bf16 %v3528, %v3520
      %v3817 = vpack.c.bf16 %v3529, %v3521
      %v3818 = vpack.c.bf16 %v3530, %v3522
      %v3819 = vpack.c.bf16 %v3531, %v3523
      %v3820 = vpack.c.bf16 %v3532, %v3524
      %v3821 = vpack.c.bf16 %v3533, %v3525
      %v3822 = vpack.c.bf16 %v3534, %v3526
      %v3823 = vpack.c.bf16 %v3543, %v3535
      %v3824 = vpack.c.bf16 %v3544, %v3536
      %v3825 = vpack.c.bf16 %v3545, %v3537
      %v3826 = vpack.c.bf16 %v3546, %v3538
      %v3827 = vpack.c.bf16 %v3547, %v3539
      %v3828 = vpack.c.bf16 %v3548, %v3540
      %v3829 = vpack.c.bf16 %v3549, %v3541
      %v3830 = vpack.c.bf16 %v3550, %v3542
      %v3831 = vpack.c.bf16 %v3559, %v3551
      %v3832 = vpack.c.bf16 %v3560, %v3552
      %v3833 = vpack.c.bf16 %v3561, %v3553
      %v3834 = vpack.c.bf16 %v3562, %v3554
      %v3835 = vpack.c.bf16 %v3563, %v3555
      %v3836 = vpack.c.bf16 %v3564, %v3556
      %v3837 = vpack.c.bf16 %v3565, %v3557
      %v3838 = vpack.c.bf16 %v3566, %v3558
      %v3839 = vpack.c.bf16 %v3575, %v3567
      %v3840 = vpack.c.bf16 %v3576, %v3568
      %v3841 = vpack.c.bf16 %v3577, %v3569
      %v3842 = vpack.c.bf16 %v3578, %v3570
      %v3843 = vpack.c.bf16 %v3579, %v3571
      %v3844 = vpack.c.bf16 %v3580, %v3572
      %v3845 = vpack.c.bf16 %v3581, %v3573
      %v3846 = vpack.c.bf16 %v3582, %v3574
      %v3847 = vpack.c.bf16 %v3591, %v3583
      %v3848 = vpack.c.bf16 %v3592, %v3584
      %v3849 = vpack.c.bf16 %v3593, %v3585
      %v3850 = vpack.c.bf16 %v3594, %v3586
      %v3851 = vpack.c.bf16 %v3595, %v3587
      %v3852 = vpack.c.bf16 %v3596, %v3588
      %v3853 = vpack.c.bf16 %v3597, %v3589
      %v3854 = vpack.c.bf16 %v3598, %v3590
      %v3855 = vpack.c.bf16 %v3607, %v3599
      %v3856 = vpack.c.bf16 %v3608, %v3600
      %v3857 = vpack.c.bf16 %v3609, %v3601
      %v3858 = vpack.c.bf16 %v3610, %v3602
      %v3859 = vpack.c.bf16 %v3611, %v3603
      %v3860 = vpack.c.bf16 %v3612, %v3604
      %v3861 = vpack.c.bf16 %v3613, %v3605
      %v3862 = vpack.c.bf16 %v3614, %v3606
      %v3863 = vpack.c.bf16 %v3623, %v3615
      %v3864 = vpack.c.bf16 %v3624, %v3616
      %v3865 = vpack.c.bf16 %v3625, %v3617
      %v3866 = vpack.c.bf16 %v3626, %v3618
      %v3867 = vpack.c.bf16 %v3627, %v3619
      %v3868 = vpack.c.bf16 %v3628, %v3620
      %v3869 = vpack.c.bf16 %v3629, %v3621
      %v3870 = vpack.c.bf16 %v3630, %v3622
      %v3871 = vpack.c.bf16 %v3639, %v3631
      %v3872 = vpack.c.bf16 %v3640, %v3632
      %v3873 = vpack.c.bf16 %v3641, %v3633
      %v3874 = vpack.c.bf16 %v3642, %v3634
      %v3875 = vpack.c.bf16 %v3643, %v3635
      %v3876 = vpack.c.bf16 %v3644, %v3636
      %v3877 = vpack.c.bf16 %v3645, %v3637
      %v3878 = vpack.c.bf16 %v3646, %v3638
      %v3879 = vpack.c.bf16 %v3655, %v3647
      %v3880 = vpack.c.bf16 %v3656, %v3648
      %v3881 = vpack.c.bf16 %v3657, %v3649
      %v3882 = vpack.c.bf16 %v3658, %v3650
      %v3883 = vpack.c.bf16 %v3659, %v3651
      %v3884 = vpack.c.bf16 %v3660, %v3652
      %v3885 = vpack.c.bf16 %v3661, %v3653
      %v3886 = vpack.c.bf16 %v3662, %v3654
      %v3887 = vpack.c.bf16 %v3671, %v3663
      %v3888 = vpack.c.bf16 %v3672, %v3664
      %v3889 = vpack.c.bf16 %v3673, %v3665
      %v3890 = vpack.c.bf16 %v3674, %v3666
      %v3891 = vpack.c.bf16 %v3675, %v3667
      %v3892 = vpack.c.bf16 %v3676, %v3668
      %v3893 = vpack.c.bf16 %v3677, %v3669
      %v3894 = vpack.c.bf16 %v3678, %v3670
      %v3895 = vpack.c.bf16 %v3687, %v3679
      %v3896 = vpack.c.bf16 %v3688, %v3680
      %v3897 = vpack.c.bf16 %v3689, %v3681
      %v3898 = vpack.c.bf16 %v3690, %v3682
      %v3899 = vpack.c.bf16 %v3691, %v3683
      %v3900 = vpack.c.bf16 %v3692, %v3684
      %v3901 = vpack.c.bf16 %v3693, %v3685
      %v3902 = vpack.c.bf16 %v3694, %v3686
      %v3903 = vpack.c.bf16 %v3703, %v3695
      %v3904 = vpack.c.bf16 %v3704, %v3696
      %v3905 = vpack.c.bf16 %v3705, %v3697
      %v3906 = vpack.c.bf16 %v3706, %v3698
      %v3907 = vpack.c.bf16 %v3707, %v3699
      %v3908 = vpack.c.bf16 %v3708, %v3700
      %v3909 = vpack.c.bf16 %v3709, %v3701
      %v3910 = vpack.c.bf16 %v3710, %v3702
      %v3911 = vld [vmem:[%s3] sm:$0xf]
      %v3912 = vld [vmem:[%s3 + $0x4] sm:$0xf]
      %v3913 = vld [vmem:[%s3 + $0x8] sm:$0xf]
      %v3914 = vld [vmem:[%s3 + $0xc] sm:$0xf]
      %v3915 = vld [vmem:[%s3 + $0x10] sm:$0xf]
      %v3916 = vld [vmem:[%s3 + $0x14] sm:$0xf]
      %v3917 = vld [vmem:[%s3 + $0x18] sm:$0xf]
      %v3918 = vld [vmem:[%s3 + $0x1c] sm:$0xf]
      %v3919 = vld [vmem:[%s3 + $0x20] sm:$0xf]
      %v3920 = vld [vmem:[%s3 + $0x24] sm:$0xf]
      %v3921 = vld [vmem:[%s3 + $0x28] sm:$0xf]
      %v3922 = vld [vmem:[%s3 + $0x2c] sm:$0xf]
      %v3923 = vld [vmem:[%s3 + $0x30] sm:$0xf]
      %v3924 = vld [vmem:[%s3 + $0x34] sm:$0xf]
      %v3925 = vld [vmem:[%s3 + $0x38] sm:$0xf]
      %v3926 = vld [vmem:[%s3 + $0x3c] sm:$0xf]
      %v3927 = vld [vmem:[%s3 + $0x40] sm:$0xf]
      %v3928 = vld [vmem:[%s3 + $0x44] sm:$0xf]
      %v3929 = vld [vmem:[%s3 + $0x48] sm:$0xf]
      %v3930 = vld [vmem:[%s3 + $0x4c] sm:$0xf]
      %v3931 = vld [vmem:[%s3 + $0x50] sm:$0xf]
      %v3932 = vld [vmem:[%s3 + $0x54] sm:$0xf]
      %v3933 = vld [vmem:[%s3 + $0x58] sm:$0xf]
      %v3934 = vld [vmem:[%s3 + $0x5c] sm:$0xf]
      %v3935 = vld [vmem:[%s3 + $0x60] sm:$0xf]
      %v3936 = vld [vmem:[%s3 + $0x64] sm:$0xf]
      %v3937 = vld [vmem:[%s3 + $0x68] sm:$0xf]
      %v3938 = vld [vmem:[%s3 + $0x6c] sm:$0xf]
      %v3939 = vld [vmem:[%s3 + $0x70] sm:$0xf]
      %v3940 = vld [vmem:[%s3 + $0x74] sm:$0xf]
      %v3941 = vld [vmem:[%s3 + $0x78] sm:$0xf]
      %v3942 = vld [vmem:[%s3 + $0x7c] sm:$0xf]
      %v3943 = vld [vmem:[%s3 + $0x80] sm:$0xf]
      %v3944 = vld [vmem:[%s3 + $0x84] sm:$0xf]
      %v3945 = vld [vmem:[%s3 + $0x88] sm:$0xf]
      %v3946 = vld [vmem:[%s3 + $0x8c] sm:$0xf]
      %v3947 = vld [vmem:[%s3 + $0x90] sm:$0xf]
      %v3948 = vld [vmem:[%s3 + $0x94] sm:$0xf]
      %v3949 = vld [vmem:[%s3 + $0x98] sm:$0xf]
      %v3950 = vld [vmem:[%s3 + $0x9c] sm:$0xf]
      %v3951 = vld [vmem:[%s3 + $0xa0] sm:$0xf]
      %v3952 = vld [vmem:[%s3 + $0xa4] sm:$0xf]
      %v3953 = vld [vmem:[%s3 + $0xa8] sm:$0xf]
      %v3954 = vld [vmem:[%s3 + $0xac] sm:$0xf]
      %v3955 = vld [vmem:[%s3 + $0xb0] sm:$0xf]
      %v3956 = vld [vmem:[%s3 + $0xb4] sm:$0xf]
      %v3957 = vld [vmem:[%s3 + $0xb8] sm:$0xf]
      %v3958 = vld [vmem:[%s3 + $0xbc] sm:$0xf]
      %v3959 = vld [vmem:[%s3 + $0xc0] sm:$0xf]
      %v3960 = vld [vmem:[%s3 + $0xc4] sm:$0xf]
      %v3961 = vld [vmem:[%s3 + $0xc8] sm:$0xf]
      %v3962 = vld [vmem:[%s3 + $0xcc] sm:$0xf]
      %v3963 = vld [vmem:[%s3 + $0xd0] sm:$0xf]
      %v3964 = vld [vmem:[%s3 + $0xd4] sm:$0xf]
      %v3965 = vld [vmem:[%s3 + $0xd8] sm:$0xf]
      %v3966 = vld [vmem:[%s3 + $0xdc] sm:$0xf]
      %v3967 = vld [vmem:[%s3 + $0xe0] sm:$0xf]
      %v3968 = vld [vmem:[%s3 + $0xe4] sm:$0xf]
      %v3969 = vld [vmem:[%s3 + $0xe8] sm:$0xf]
      %v3970 = vld [vmem:[%s3 + $0xec] sm:$0xf]
      %v3971 = vld [vmem:[%s3 + $0xf0] sm:$0xf]
      %v3972 = vld [vmem:[%s3 + $0xf4] sm:$0xf]
      %v3973 = vld [vmem:[%s3 + $0xf8] sm:$0xf]
      %v3974 = vld [vmem:[%s3 + $0xfc] sm:$0xf]
      %v3975 = vld [vmem:[%s3 + $0x100] sm:$0xf]
      %v3976 = vld [vmem:[%s3 + $0x104] sm:$0xf]
      %v3977 = vld [vmem:[%s3 + $0x108] sm:$0xf]
      %v3978 = vld [vmem:[%s3 + $0x10c] sm:$0xf]
      %v3979 = vld [vmem:[%s3 + $0x110] sm:$0xf]
      %v3980 = vld [vmem:[%s3 + $0x114] sm:$0xf]
      %v3981 = vld [vmem:[%s3 + $0x118] sm:$0xf]
      %v3982 = vld [vmem:[%s3 + $0x11c] sm:$0xf]
      %v3983 = vld [vmem:[%s3 + $0x120] sm:$0xf]
      %v3984 = vld [vmem:[%s3 + $0x124] sm:$0xf]
      %v3985 = vld [vmem:[%s3 + $0x128] sm:$0xf]
      %v3986 = vld [vmem:[%s3 + $0x12c] sm:$0xf]
      %v3987 = vld [vmem:[%s3 + $0x130] sm:$0xf]
      %v3988 = vld [vmem:[%s3 + $0x134] sm:$0xf]
      %v3989 = vld [vmem:[%s3 + $0x138] sm:$0xf]
      %v3990 = vld [vmem:[%s3 + $0x13c] sm:$0xf]
      %v3991 = vld [vmem:[%s3 + $0x140] sm:$0xf]
      %v3992 = vld [vmem:[%s3 + $0x144] sm:$0xf]
      %v3993 = vld [vmem:[%s3 + $0x148] sm:$0xf]
      %v3994 = vld [vmem:[%s3 + $0x14c] sm:$0xf]
      %v3995 = vld [vmem:[%s3 + $0x150] sm:$0xf]
      %v3996 = vld [vmem:[%s3 + $0x154] sm:$0xf]
      %v3997 = vld [vmem:[%s3 + $0x158] sm:$0xf]
      %v3998 = vld [vmem:[%s3 + $0x15c] sm:$0xf]
      %v3999 = vld [vmem:[%s3 + $0x160] sm:$0xf]
      %v4000 = vld [vmem:[%s3 + $0x164] sm:$0xf]
      %v4001 = vld [vmem:[%s3 + $0x168] sm:$0xf]
      %v4002 = vld [vmem:[%s3 + $0x16c] sm:$0xf]
      %v4003 = vld [vmem:[%s3 + $0x170] sm:$0xf]
      %v4004 = vld [vmem:[%s3 + $0x174] sm:$0xf]
      %v4005 = vld [vmem:[%s3 + $0x178] sm:$0xf]
      %v4006 = vld [vmem:[%s3 + $0x17c] sm:$0xf]
      %v4007 = vld [vmem:[%s3 + $0x180] sm:$0xf]
      %v4008 = vld [vmem:[%s3 + $0x184] sm:$0xf]
      %v4009 = vld [vmem:[%s3 + $0x188] sm:$0xf]
      %v4010 = vld [vmem:[%s3 + $0x18c] sm:$0xf]
      %v4011 = vld [vmem:[%s3 + $0x190] sm:$0xf]
      %v4012 = vld [vmem:[%s3 + $0x194] sm:$0xf]
      %v4013 = vld [vmem:[%s3 + $0x198] sm:$0xf]
      %v4014 = vld [vmem:[%s3 + $0x19c] sm:$0xf]
      %v4015 = vld [vmem:[%s3 + $0x1a0] sm:$0xf]
      %v4016 = vld [vmem:[%s3 + $0x1a4] sm:$0xf]
      %v4017 = vld [vmem:[%s3 + $0x1a8] sm:$0xf]
      %v4018 = vld [vmem:[%s3 + $0x1ac] sm:$0xf]
      %v4019 = vld [vmem:[%s3 + $0x1b0] sm:$0xf]
      %v4020 = vld [vmem:[%s3 + $0x1b4] sm:$0xf]
      %v4021 = vld [vmem:[%s3 + $0x1b8] sm:$0xf]
      %v4022 = vld [vmem:[%s3 + $0x1bc] sm:$0xf]
      %v4023 = vld [vmem:[%s3 + $0x1c0] sm:$0xf]
      %v4024 = vld [vmem:[%s3 + $0x1c4] sm:$0xf]
      %v4025 = vld [vmem:[%s3 + $0x1c8] sm:$0xf]
      %v4026 = vld [vmem:[%s3 + $0x1cc] sm:$0xf]
      %v4027 = vld [vmem:[%s3 + $0x1d0] sm:$0xf]
      %v4028 = vld [vmem:[%s3 + $0x1d4] sm:$0xf]
      %v4029 = vld [vmem:[%s3 + $0x1d8] sm:$0xf]
      %v4030 = vld [vmem:[%s3 + $0x1dc] sm:$0xf]
      %v4031 = vld [vmem:[%s3 + $0x1e0] sm:$0xf]
      %v4032 = vld [vmem:[%s3 + $0x1e4] sm:$0xf]
      %v4033 = vld [vmem:[%s3 + $0x1e8] sm:$0xf]
      %v4034 = vld [vmem:[%s3 + $0x1ec] sm:$0xf]
      %v4035 = vld [vmem:[%s3 + $0x1f0] sm:$0xf]
      %v4036 = vld [vmem:[%s3 + $0x1f4] sm:$0xf]
      %v4037 = vld [vmem:[%s3 + $0x1f8] sm:$0xf]
      %v4038 = vld [vmem:[%s3 + $0x1fc] sm:$0xf]
      %v4039 = vld [vmem:[%s4] sm:$0x1]
      %v4041 = vperm.slane %v4039, 0
      %v4171 = vunpack.c.l.b16 %v3911
      %v4172 = vunpack.c.l.b16 %v3912
      %v4173 = vunpack.c.l.b16 %v3913
      %v4174 = vunpack.c.l.b16 %v3914
      %v4175 = vunpack.c.l.b16 %v3915
      %v4176 = vunpack.c.l.b16 %v3916
      %v4177 = vunpack.c.l.b16 %v3917
      %v4178 = vunpack.c.l.b16 %v3918
      %v4179 = vunpack.c.l.b16 %v3919
      %v4180 = vunpack.c.l.b16 %v3920
      %v4181 = vunpack.c.l.b16 %v3921
      %v4182 = vunpack.c.l.b16 %v3922
      %v4183 = vunpack.c.l.b16 %v3923
      %v4184 = vunpack.c.l.b16 %v3924
      %v4185 = vunpack.c.l.b16 %v3925
      %v4186 = vunpack.c.l.b16 %v3926
      %v4187 = vunpack.c.l.b16 %v3927
      %v4188 = vunpack.c.l.b16 %v3928
      %v4189 = vunpack.c.l.b16 %v3929
      %v4190 = vunpack.c.l.b16 %v3930
      %v4191 = vunpack.c.l.b16 %v3931
      %v4192 = vunpack.c.l.b16 %v3932
      %v4193 = vunpack.c.l.b16 %v3933
      %v4194 = vunpack.c.l.b16 %v3934
      %v4195 = vunpack.c.l.b16 %v3935
      %v4196 = vunpack.c.l.b16 %v3936
      %v4197 = vunpack.c.l.b16 %v3937
      %v4198 = vunpack.c.l.b16 %v3938
      %v4199 = vunpack.c.l.b16 %v3939
      %v4200 = vunpack.c.l.b16 %v3940
      %v4201 = vunpack.c.l.b16 %v3941
      %v4202 = vunpack.c.l.b16 %v3942
      %v4203 = vunpack.c.l.b16 %v3943
      %v4204 = vunpack.c.l.b16 %v3944
      %v4205 = vunpack.c.l.b16 %v3945
      %v4206 = vunpack.c.l.b16 %v3946
      %v4207 = vunpack.c.l.b16 %v3947
      %v4208 = vunpack.c.l.b16 %v3948
      %v4209 = vunpack.c.l.b16 %v3949
      %v4210 = vunpack.c.l.b16 %v3950
      %v4211 = vunpack.c.l.b16 %v3951
      %v4212 = vunpack.c.l.b16 %v3952
      %v4213 = vunpack.c.l.b16 %v3953
      %v4214 = vunpack.c.l.b16 %v3954
      %v4215 = vunpack.c.l.b16 %v3955
      %v4216 = vunpack.c.l.b16 %v3956
      %v4217 = vunpack.c.l.b16 %v3957
      %v4218 = vunpack.c.l.b16 %v3958
      %v4219 = vunpack.c.l.b16 %v3959
      %v4220 = vunpack.c.l.b16 %v3960
      %v4221 = vunpack.c.l.b16 %v3961
      %v4222 = vunpack.c.l.b16 %v3962
      %v4223 = vunpack.c.l.b16 %v3963
      %v4224 = vunpack.c.l.b16 %v3964
      %v4225 = vunpack.c.l.b16 %v3965
      %v4226 = vunpack.c.l.b16 %v3966
      %v4227 = vunpack.c.l.b16 %v3967
      %v4228 = vunpack.c.l.b16 %v3968
      %v4229 = vunpack.c.l.b16 %v3969
      %v4230 = vunpack.c.l.b16 %v3970
      %v4231 = vunpack.c.l.b16 %v3971
      %v4232 = vunpack.c.l.b16 %v3972
      %v4233 = vunpack.c.l.b16 %v3973
      %v4234 = vunpack.c.l.b16 %v3974
      %v4235 = vunpack.c.l.b16 %v3975
      %v4236 = vunpack.c.l.b16 %v3976
      %v4237 = vunpack.c.l.b16 %v3977
      %v4238 = vunpack.c.l.b16 %v3978
      %v4239 = vunpack.c.l.b16 %v3979
      %v4240 = vunpack.c.l.b16 %v3980
      %v4241 = vunpack.c.l.b16 %v3981
      %v4242 = vunpack.c.l.b16 %v3982
      %v4243 = vunpack.c.l.b16 %v3983
      %v4244 = vunpack.c.l.b16 %v3984
      %v4245 = vunpack.c.l.b16 %v3985
      %v4246 = vunpack.c.l.b16 %v3986
      %v4247 = vunpack.c.l.b16 %v3987
      %v4248 = vunpack.c.l.b16 %v3988
      %v4249 = vunpack.c.l.b16 %v3989
      %v4250 = vunpack.c.l.b16 %v3990
      %v4251 = vunpack.c.l.b16 %v3991
      %v4252 = vunpack.c.l.b16 %v3992
      %v4253 = vunpack.c.l.b16 %v3993
      %v4254 = vunpack.c.l.b16 %v3994
      %v4255 = vunpack.c.l.b16 %v3995
      %v4256 = vunpack.c.l.b16 %v3996
      %v4257 = vunpack.c.l.b16 %v3997
      %v4258 = vunpack.c.l.b16 %v3998
      %v4259 = vunpack.c.l.b16 %v3999
      %v4260 = vunpack.c.l.b16 %v4000
      %v4261 = vunpack.c.l.b16 %v4001
      %v4262 = vunpack.c.l.b16 %v4002
      %v4263 = vunpack.c.l.b16 %v4003
      %v4264 = vunpack.c.l.b16 %v4004
      %v4265 = vunpack.c.l.b16 %v4005
      %v4266 = vunpack.c.l.b16 %v4006
      %v4267 = vunpack.c.l.b16 %v4007
      %v4268 = vunpack.c.l.b16 %v4008
      %v4269 = vunpack.c.l.b16 %v4009
      %v4270 = vunpack.c.l.b16 %v4010
      %v4271 = vunpack.c.l.b16 %v4011
      %v4272 = vunpack.c.l.b16 %v4012
      %v4273 = vunpack.c.l.b16 %v4013
      %v4274 = vunpack.c.l.b16 %v4014
      %v4275 = vunpack.c.l.b16 %v4015
      %v4276 = vunpack.c.l.b16 %v4016
      %v4277 = vunpack.c.l.b16 %v4017
      %v4278 = vunpack.c.l.b16 %v4018
      %v4279 = vunpack.c.l.b16 %v4019
      %v4280 = vunpack.c.l.b16 %v4020
      %v4281 = vunpack.c.l.b16 %v4021
      %v4282 = vunpack.c.l.b16 %v4022
      %v4283 = vunpack.c.l.b16 %v4023
      %v4284 = vunpack.c.l.b16 %v4024
      %v4285 = vunpack.c.l.b16 %v4025
      %v4286 = vunpack.c.l.b16 %v4026
      %v4287 = vunpack.c.l.b16 %v4027
      %v4288 = vunpack.c.l.b16 %v4028
      %v4289 = vunpack.c.l.b16 %v4029
      %v4290 = vunpack.c.l.b16 %v4030
      %v4291 = vunpack.c.l.b16 %v4031
      %v4292 = vunpack.c.l.b16 %v4032
      %v4293 = vunpack.c.l.b16 %v4033
      %v4294 = vunpack.c.l.b16 %v4034
      %v4295 = vunpack.c.l.b16 %v4035
      %v4296 = vunpack.c.l.b16 %v4036
      %v4297 = vunpack.c.l.b16 %v4037
      %v4298 = vunpack.c.l.b16 %v4038
      %v4299 = vpack.c.b16 %v4172, %v4171
      %v4300 = vpack.c.b16 %v4174, %v4173
      %v4301 = vpack.c.b16 %v4176, %v4175
      %v4302 = vpack.c.b16 %v4178, %v4177
      %v4303 = vpack.c.b16 %v4180, %v4179
      %v4304 = vpack.c.b16 %v4182, %v4181
      %v4305 = vpack.c.b16 %v4184, %v4183
      %v4306 = vpack.c.b16 %v4186, %v4185
      %v4307 = vpack.c.b16 %v4188, %v4187
      %v4308 = vpack.c.b16 %v4190, %v4189
      %v4309 = vpack.c.b16 %v4192, %v4191
      %v4310 = vpack.c.b16 %v4194, %v4193
      %v4311 = vpack.c.b16 %v4196, %v4195
      %v4312 = vpack.c.b16 %v4198, %v4197
      %v4313 = vpack.c.b16 %v4200, %v4199
      %v4314 = vpack.c.b16 %v4202, %v4201
      %v4315 = vpack.c.b16 %v4204, %v4203
      %v4316 = vpack.c.b16 %v4206, %v4205
      %v4317 = vpack.c.b16 %v4208, %v4207
      %v4318 = vpack.c.b16 %v4210, %v4209
      %v4319 = vpack.c.b16 %v4212, %v4211
      %v4320 = vpack.c.b16 %v4214, %v4213
      %v4321 = vpack.c.b16 %v4216, %v4215
      %v4322 = vpack.c.b16 %v4218, %v4217
      %v4323 = vpack.c.b16 %v4220, %v4219
      %v4324 = vpack.c.b16 %v4222, %v4221
      %v4325 = vpack.c.b16 %v4224, %v4223
      %v4326 = vpack.c.b16 %v4226, %v4225
      %v4327 = vpack.c.b16 %v4228, %v4227
      %v4328 = vpack.c.b16 %v4230, %v4229
      %v4329 = vpack.c.b16 %v4232, %v4231
      %v4330 = vpack.c.b16 %v4234, %v4233
      %v4331 = vpack.c.b16 %v4236, %v4235
      %v4332 = vpack.c.b16 %v4238, %v4237
      %v4333 = vpack.c.b16 %v4240, %v4239
      %v4334 = vpack.c.b16 %v4242, %v4241
      %v4335 = vpack.c.b16 %v4244, %v4243
      %v4336 = vpack.c.b16 %v4246, %v4245
      %v4337 = vpack.c.b16 %v4248, %v4247
      %v4338 = vpack.c.b16 %v4250, %v4249
      %v4339 = vpack.c.b16 %v4252, %v4251
      %v4340 = vpack.c.b16 %v4254, %v4253
      %v4341 = vpack.c.b16 %v4256, %v4255
      %v4342 = vpack.c.b16 %v4258, %v4257
      %v4343 = vpack.c.b16 %v4260, %v4259
      %v4344 = vpack.c.b16 %v4262, %v4261
      %v4345 = vpack.c.b16 %v4264, %v4263
      %v4346 = vpack.c.b16 %v4266, %v4265
      %v4347 = vpack.c.b16 %v4268, %v4267
      %v4348 = vpack.c.b16 %v4270, %v4269
      %v4349 = vpack.c.b16 %v4272, %v4271
      %v4350 = vpack.c.b16 %v4274, %v4273
      %v4351 = vpack.c.b16 %v4276, %v4275
      %v4352 = vpack.c.b16 %v4278, %v4277
      %v4353 = vpack.c.b16 %v4280, %v4279
      %v4354 = vpack.c.b16 %v4282, %v4281
      %v4355 = vpack.c.b16 %v4284, %v4283
      %v4356 = vpack.c.b16 %v4286, %v4285
      %v4357 = vpack.c.b16 %v4288, %v4287
      %v4358 = vpack.c.b16 %v4290, %v4289
      %v4359 = vpack.c.b16 %v4292, %v4291
      %v4360 = vpack.c.b16 %v4294, %v4293
      %v4361 = vpack.c.b16 %v4296, %v4295
      %v4362 = vpack.c.b16 %v4298, %v4297
      %4427 = vmatpush.bf16.msra.mxu0 %v4306
      %4428 = vmatpush.bf16.msra.mxu0 %v4305
      %4429 = vmatpush.bf16.msra.mxu0 %v4304
      %4430 = vmatpush.bf16.msra.mxu0 %v4303
      %4431 = vmatpush.bf16.msra.mxu0 %v4302
      %4432 = vmatpush.bf16.msra.mxu0 %v4301
      %4433 = vmatpush.bf16.msra.mxu0 %v4300
      %4434 = vmatpush.bf16.msra.mxu0 %v4299
      %4435 = vmatmul.bf16.gmra.mxu0 %v3711
      %v4436 = vpop.f32.mrf.mxu0
      %v4437 = vadd.f32 %v4041, %v4436
      %v4438 = vpop.f32.mrf.mxu0
      %v4439 = vadd.f32 %v4041, %v4438
      %4440 = vmatmul.bf16.gmra.mxu0 %v3719
      %v4441 = vpop.f32.mrf.mxu0
      %v4442 = vadd.f32 %v4041, %v4441
      %v4443 = vpop.f32.mrf.mxu0
      %v4444 = vadd.f32 %v4041, %v4443
      %4445 = vmatmul.bf16.gmra.mxu0 %v3727
      %v4446 = vpop.f32.mrf.mxu0
      %v4447 = vadd.f32 %v4041, %v4446
      %v4448 = vpop.f32.mrf.mxu0
      %v4449 = vadd.f32 %v4041, %v4448
      %4450 = vmatmul.bf16.gmra.mxu0 %v3735
      %v4451 = vpop.f32.mrf.mxu0
      %v4452 = vadd.f32 %v4041, %v4451
      %v4453 = vpop.f32.mrf.mxu0
      %v4454 = vadd.f32 %v4041, %v4453
      %4455 = vmatmul.bf16.gmra.mxu0 %v3743
      %v4456 = vpop.f32.mrf.mxu0
      %v4457 = vadd.f32 %v4041, %v4456
      %v4458 = vpop.f32.mrf.mxu0
      %v4459 = vadd.f32 %v4041, %v4458
      %4460 = vmatmul.bf16.gmra.mxu0 %v3751
      %v4461 = vpop.f32.mrf.mxu0
      %v4462 = vadd.f32 %v4041, %v4461
      %v4463 = vpop.f32.mrf.mxu0
      %v4464 = vadd.f32 %v4041, %v4463
      %4465 = vmatmul.bf16.gmra.mxu0 %v3759
      %v4466 = vpop.f32.mrf.mxu0
      %v4467 = vadd.f32 %v4041, %v4466
      %v4468 = vpop.f32.mrf.mxu0
      %v4469 = vadd.f32 %v4041, %v4468
      %4470 = vmatmul.bf16.gmra.mxu0 %v3767
      %v4471 = vpop.f32.mrf.mxu0
      %v4472 = vadd.f32 %v4041, %v4471
      %v4473 = vpop.f32.mrf.mxu0
      %v4474 = vadd.f32 %v4041, %v4473
      %4475 = vmatmul.bf16.gmra.mxu0 %v3775
      %v4476 = vpop.f32.mrf.mxu0
      %v4477 = vadd.f32 %v4041, %v4476
      %v4478 = vpop.f32.mrf.mxu0
      %v4479 = vadd.f32 %v4041, %v4478
      %4480 = vmatmul.bf16.gmra.mxu0 %v3783
      %v4481 = vpop.f32.mrf.mxu0
      %v4482 = vadd.f32 %v4041, %v4481
      %v4483 = vpop.f32.mrf.mxu0
      %v4484 = vadd.f32 %v4041, %v4483
      %4485 = vmatmul.bf16.gmra.mxu0 %v3791
      %v4486 = vpop.f32.mrf.mxu0
      %v4487 = vadd.f32 %v4041, %v4486
      %v4488 = vpop.f32.mrf.mxu0
      %v4489 = vadd.f32 %v4041, %v4488
      %4490 = vmatmul.bf16.gmra.mxu0 %v3799
      %v4491 = vpop.f32.mrf.mxu0
      %v4492 = vadd.f32 %v4041, %v4491
      %v4493 = vpop.f32.mrf.mxu0
      %v4494 = vadd.f32 %v4041, %v4493
      %4495 = vmatmul.bf16.gmra.mxu0 %v3807
      %v4496 = vpop.f32.mrf.mxu0
      %v4497 = vadd.f32 %v4041, %v4496
      %v4498 = vpop.f32.mrf.mxu0
      %v4499 = vadd.f32 %v4041, %v4498
      %4500 = vmatmul.bf16.gmra.mxu0 %v3815
      %v4501 = vpop.f32.mrf.mxu0
      %v4502 = vadd.f32 %v4041, %v4501
      %v4503 = vpop.f32.mrf.mxu0
      %v4504 = vadd.f32 %v4041, %v4503
      %4505 = vmatmul.bf16.gmra.mxu0 %v3823
      %v4506 = vpop.f32.mrf.mxu0
      %v4507 = vadd.f32 %v4041, %v4506
      %v4508 = vpop.f32.mrf.mxu0
      %v4509 = vadd.f32 %v4041, %v4508
      %4510 = vmatmul.bf16.gmra.mxu0 %v3831
      %v4511 = vpop.f32.mrf.mxu0
      %v4512 = vadd.f32 %v4041, %v4511
      %v4513 = vpop.f32.mrf.mxu0
      %v4514 = vadd.f32 %v4041, %v4513
      %4515 = vmatmul.bf16.gmra.mxu0 %v3839
      %v4516 = vpop.f32.mrf.mxu0
      %v4517 = vadd.f32 %v4041, %v4516
      %v4518 = vpop.f32.mrf.mxu0
      %v4519 = vadd.f32 %v4041, %v4518
      %4520 = vmatmul.bf16.gmra.mxu0 %v3847
      %v4521 = vpop.f32.mrf.mxu0
      %v4522 = vadd.f32 %v4041, %v4521
      %v4523 = vpop.f32.mrf.mxu0
      %v4524 = vadd.f32 %v4041, %v4523
      %4525 = vmatmul.bf16.gmra.mxu0 %v3855
      %v4526 = vpop.f32.mrf.mxu0
      %v4527 = vadd.f32 %v4041, %v4526
      %v4528 = vpop.f32.mrf.mxu0
      %v4529 = vadd.f32 %v4041, %v4528
      %4530 = vmatmul.bf16.gmra.mxu0 %v3863
      %v4531 = vpop.f32.mrf.mxu0
      %v4532 = vadd.f32 %v4041, %v4531
      %v4533 = vpop.f32.mrf.mxu0
      %v4534 = vadd.f32 %v4041, %v4533
      %4535 = vmatmul.bf16.gmra.mxu0 %v3871
      %v4536 = vpop.f32.mrf.mxu0
      %v4537 = vadd.f32 %v4041, %v4536
      %v4538 = vpop.f32.mrf.mxu0
      %v4539 = vadd.f32 %v4041, %v4538
      %4540 = vmatmul.bf16.gmra.mxu0 %v3879
      %v4541 = vpop.f32.mrf.mxu0
      %v4542 = vadd.f32 %v4041, %v4541
      %v4543 = vpop.f32.mrf.mxu0
      %v4544 = vadd.f32 %v4041, %v4543
      %4545 = vmatmul.bf16.gmra.mxu0 %v3887
      %v4546 = vpop.f32.mrf.mxu0
      %v4547 = vadd.f32 %v4041, %v4546
      %v4548 = vpop.f32.mrf.mxu0
      %v4549 = vadd.f32 %v4041, %v4548
      %4550 = vmatmul.bf16.gmra.mxu0 %v3895
      %v4551 = vpop.f32.mrf.mxu0
      %v4552 = vadd.f32 %v4041, %v4551
      %v4553 = vpop.f32.mrf.mxu0
      %v4554 = vadd.f32 %v4041, %v4553
      %4555 = vmatmul.bf16.gmra.mxu0 %v3903
      %v4556 = vpop.f32.mrf.mxu0
      %v4557 = vadd.f32 %v4041, %v4556
      %v4558 = vpop.f32.mrf.mxu0
      %v4559 = vadd.f32 %v4041, %v4558
      %4560 = vdwg.mxu0
      %4561 = vmatpush.bf16.msra.mxu0 %v4314
      %4562 = vmatpush.bf16.msra.mxu0 %v4313
      %4563 = vmatpush.bf16.msra.mxu0 %v4312
      %4564 = vmatpush.bf16.msra.mxu0 %v4311
      %4565 = vmatpush.bf16.msra.mxu0 %v4310
      %4566 = vmatpush.bf16.msra.mxu0 %v4309
      %4567 = vmatpush.bf16.msra.mxu0 %v4308
      %4568 = vmatpush.bf16.msra.mxu0 %v4307
      %4569 = vmatmul.bf16.gmra.mxu0 %v3712
      %v4570 = vpop.f32.mrf.mxu0
      %v4571 = vadd.f32 %v4437, %v4570
      %v4572 = vpop.f32.mrf.mxu0
      %v4573 = vadd.f32 %v4439, %v4572
      %4574 = vmatmul.bf16.gmra.mxu0 %v3720
      %v4575 = vpop.f32.mrf.mxu0
      %v4576 = vadd.f32 %v4442, %v4575
      %v4577 = vpop.f32.mrf.mxu0
      %v4578 = vadd.f32 %v4444, %v4577
      %4579 = vmatmul.bf16.gmra.mxu0 %v3728
      %v4580 = vpop.f32.mrf.mxu0
      %v4581 = vadd.f32 %v4447, %v4580
      %v4582 = vpop.f32.mrf.mxu0
      %v4583 = vadd.f32 %v4449, %v4582
      %4584 = vmatmul.bf16.gmra.mxu0 %v3736
      %v4585 = vpop.f32.mrf.mxu0
      %v4586 = vadd.f32 %v4452, %v4585
      %v4587 = vpop.f32.mrf.mxu0
      %v4588 = vadd.f32 %v4454, %v4587
      %4589 = vmatmul.bf16.gmra.mxu0 %v3744
      %v4590 = vpop.f32.mrf.mxu0
      %v4591 = vadd.f32 %v4457, %v4590
      %v4592 = vpop.f32.mrf.mxu0
      %v4593 = vadd.f32 %v4459, %v4592
      %4594 = vmatmul.bf16.gmra.mxu0 %v3752
      %v4595 = vpop.f32.mrf.mxu0
      %v4596 = vadd.f32 %v4462, %v4595
      %v4597 = vpop.f32.mrf.mxu0
      %v4598 = vadd.f32 %v4464, %v4597
      %4599 = vmatmul.bf16.gmra.mxu0 %v3760
      %v4600 = vpop.f32.mrf.mxu0
      %v4601 = vadd.f32 %v4467, %v4600
      %v4602 = vpop.f32.mrf.mxu0
      %v4603 = vadd.f32 %v4469, %v4602
      %4604 = vmatmul.bf16.gmra.mxu0 %v3768
      %v4605 = vpop.f32.mrf.mxu0
      %v4606 = vadd.f32 %v4472, %v4605
      %v4607 = vpop.f32.mrf.mxu0
      %v4608 = vadd.f32 %v4474, %v4607
      %4609 = vmatmul.bf16.gmra.mxu0 %v3776
      %v4610 = vpop.f32.mrf.mxu0
      %v4611 = vadd.f32 %v4477, %v4610
      %v4612 = vpop.f32.mrf.mxu0
      %v4613 = vadd.f32 %v4479, %v4612
      %4614 = vmatmul.bf16.gmra.mxu0 %v3784
      %v4615 = vpop.f32.mrf.mxu0
      %v4616 = vadd.f32 %v4482, %v4615
      %v4617 = vpop.f32.mrf.mxu0
      %v4618 = vadd.f32 %v4484, %v4617
      %4619 = vmatmul.bf16.gmra.mxu0 %v3792
      %v4620 = vpop.f32.mrf.mxu0
      %v4621 = vadd.f32 %v4487, %v4620
      %v4622 = vpop.f32.mrf.mxu0
      %v4623 = vadd.f32 %v4489, %v4622
      %4624 = vmatmul.bf16.gmra.mxu0 %v3800
      %v4625 = vpop.f32.mrf.mxu0
      %v4626 = vadd.f32 %v4492, %v4625
      %v4627 = vpop.f32.mrf.mxu0
      %v4628 = vadd.f32 %v4494, %v4627
      %4629 = vmatmul.bf16.gmra.mxu0 %v3808
      %v4630 = vpop.f32.mrf.mxu0
      %v4631 = vadd.f32 %v4497, %v4630
      %v4632 = vpop.f32.mrf.mxu0
      %v4633 = vadd.f32 %v4499, %v4632
      %4634 = vmatmul.bf16.gmra.mxu0 %v3816
      %v4635 = vpop.f32.mrf.mxu0
      %v4636 = vadd.f32 %v4502, %v4635
      %v4637 = vpop.f32.mrf.mxu0
      %v4638 = vadd.f32 %v4504, %v4637
      %4639 = vmatmul.bf16.gmra.mxu0 %v3824
      %v4640 = vpop.f32.mrf.mxu0
      %v4641 = vadd.f32 %v4507, %v4640
      %v4642 = vpop.f32.mrf.mxu0
      %v4643 = vadd.f32 %v4509, %v4642
      %4644 = vmatmul.bf16.gmra.mxu0 %v3832
      %v4645 = vpop.f32.mrf.mxu0
      %v4646 = vadd.f32 %v4512, %v4645
      %v4647 = vpop.f32.mrf.mxu0
      %v4648 = vadd.f32 %v4514, %v4647
      %4649 = vmatmul.bf16.gmra.mxu0 %v3840
      %v4650 = vpop.f32.mrf.mxu0
      %v4651 = vadd.f32 %v4517, %v4650
      %v4652 = vpop.f32.mrf.mxu0
      %v4653 = vadd.f32 %v4519, %v4652
      %4654 = vmatmul.bf16.gmra.mxu0 %v3848
      %v4655 = vpop.f32.mrf.mxu0
      %v4656 = vadd.f32 %v4522, %v4655
      %v4657 = vpop.f32.mrf.mxu0
      %v4658 = vadd.f32 %v4524, %v4657
      %4659 = vmatmul.bf16.gmra.mxu0 %v3856
      %v4660 = vpop.f32.mrf.mxu0
      %v4661 = vadd.f32 %v4527, %v4660
      %v4662 = vpop.f32.mrf.mxu0
      %v4663 = vadd.f32 %v4529, %v4662
      %4664 = vmatmul.bf16.gmra.mxu0 %v3864
      %v4665 = vpop.f32.mrf.mxu0
      %v4666 = vadd.f32 %v4532, %v4665
      %v4667 = vpop.f32.mrf.mxu0
      %v4668 = vadd.f32 %v4534, %v4667
      %4669 = vmatmul.bf16.gmra.mxu0 %v3872
      %v4670 = vpop.f32.mrf.mxu0
      %v4671 = vadd.f32 %v4537, %v4670
      %v4672 = vpop.f32.mrf.mxu0
      %v4673 = vadd.f32 %v4539, %v4672
      %4674 = vmatmul.bf16.gmra.mxu0 %v3880
      %v4675 = vpop.f32.mrf.mxu0
      %v4676 = vadd.f32 %v4542, %v4675
      %v4677 = vpop.f32.mrf.mxu0
      %v4678 = vadd.f32 %v4544, %v4677
      %4679 = vmatmul.bf16.gmra.mxu0 %v3888
      %v4680 = vpop.f32.mrf.mxu0
      %v4681 = vadd.f32 %v4547, %v4680
      %v4682 = vpop.f32.mrf.mxu0
      %v4683 = vadd.f32 %v4549, %v4682
      %4684 = vmatmul.bf16.gmra.mxu0 %v3896
      %v4685 = vpop.f32.mrf.mxu0
      %v4686 = vadd.f32 %v4552, %v4685
      %v4687 = vpop.f32.mrf.mxu0
      %v4688 = vadd.f32 %v4554, %v4687
      %4689 = vmatmul.bf16.gmra.mxu0 %v3904
      %v4690 = vpop.f32.mrf.mxu0
      %v4691 = vadd.f32 %v4557, %v4690
      %v4692 = vpop.f32.mrf.mxu0
      %v4693 = vadd.f32 %v4559, %v4692
      %4694 = vdwg.mxu0
      %4695 = vmatpush.bf16.msra.mxu0 %v4322
      %4696 = vmatpush.bf16.msra.mxu0 %v4321
      %4697 = vmatpush.bf16.msra.mxu0 %v4320
      %4698 = vmatpush.bf16.msra.mxu0 %v4319
      %4699 = vmatpush.bf16.msra.mxu0 %v4318
      %4700 = vmatpush.bf16.msra.mxu0 %v4317
      %4701 = vmatpush.bf16.msra.mxu0 %v4316
      %4702 = vmatpush.bf16.msra.mxu0 %v4315
      %4703 = vmatmul.bf16.gmra.mxu0 %v3713
      %v4704 = vpop.f32.mrf.mxu0
      %v4705 = vadd.f32 %v4571, %v4704
      %v4706 = vpop.f32.mrf.mxu0
      %v4707 = vadd.f32 %v4573, %v4706
      %4708 = vmatmul.bf16.gmra.mxu0 %v3721
      %v4709 = vpop.f32.mrf.mxu0
      %v4710 = vadd.f32 %v4576, %v4709
      %v4711 = vpop.f32.mrf.mxu0
      %v4712 = vadd.f32 %v4578, %v4711
      %4713 = vmatmul.bf16.gmra.mxu0 %v3729
      %v4714 = vpop.f32.mrf.mxu0
      %v4715 = vadd.f32 %v4581, %v4714
      %v4716 = vpop.f32.mrf.mxu0
      %v4717 = vadd.f32 %v4583, %v4716
      %4718 = vmatmul.bf16.gmra.mxu0 %v3737
      %v4719 = vpop.f32.mrf.mxu0
      %v4720 = vadd.f32 %v4586, %v4719
      %v4721 = vpop.f32.mrf.mxu0
      %v4722 = vadd.f32 %v4588, %v4721
      %4723 = vmatmul.bf16.gmra.mxu0 %v3745
      %v4724 = vpop.f32.mrf.mxu0
      %v4725 = vadd.f32 %v4591, %v4724
      %v4726 = vpop.f32.mrf.mxu0
      %v4727 = vadd.f32 %v4593, %v4726
      %4728 = vmatmul.bf16.gmra.mxu0 %v3753
      %v4729 = vpop.f32.mrf.mxu0
      %v4730 = vadd.f32 %v4596, %v4729
      %v4731 = vpop.f32.mrf.mxu0
      %v4732 = vadd.f32 %v4598, %v4731
      %4733 = vmatmul.bf16.gmra.mxu0 %v3761
      %v4734 = vpop.f32.mrf.mxu0
      %v4735 = vadd.f32 %v4601, %v4734
      %v4736 = vpop.f32.mrf.mxu0
      %v4737 = vadd.f32 %v4603, %v4736
      %4738 = vmatmul.bf16.gmra.mxu0 %v3769
      %v4739 = vpop.f32.mrf.mxu0
      %v4740 = vadd.f32 %v4606, %v4739
      %v4741 = vpop.f32.mrf.mxu0
      %v4742 = vadd.f32 %v4608, %v4741
      %4743 = vmatmul.bf16.gmra.mxu0 %v3777
      %v4744 = vpop.f32.mrf.mxu0
      %v4745 = vadd.f32 %v4611, %v4744
      %v4746 = vpop.f32.mrf.mxu0
      %v4747 = vadd.f32 %v4613, %v4746
      %4748 = vmatmul.bf16.gmra.mxu0 %v3785
      %v4749 = vpop.f32.mrf.mxu0
      %v4750 = vadd.f32 %v4616, %v4749
      %v4751 = vpop.f32.mrf.mxu0
      %v4752 = vadd.f32 %v4618, %v4751
      %4753 = vmatmul.bf16.gmra.mxu0 %v3793
      %v4754 = vpop.f32.mrf.mxu0
      %v4755 = vadd.f32 %v4621, %v4754
      %v4756 = vpop.f32.mrf.mxu0
      %v4757 = vadd.f32 %v4623, %v4756
      %4758 = vmatmul.bf16.gmra.mxu0 %v3801
      %v4759 = vpop.f32.mrf.mxu0
      %v4760 = vadd.f32 %v4626, %v4759
      %v4761 = vpop.f32.mrf.mxu0
      %v4762 = vadd.f32 %v4628, %v4761
      %4763 = vmatmul.bf16.gmra.mxu0 %v3809
      %v4764 = vpop.f32.mrf.mxu0
      %v4765 = vadd.f32 %v4631, %v4764
      %v4766 = vpop.f32.mrf.mxu0
      %v4767 = vadd.f32 %v4633, %v4766
      %4768 = vmatmul.bf16.gmra.mxu0 %v3817
      %v4769 = vpop.f32.mrf.mxu0
      %v4770 = vadd.f32 %v4636, %v4769
      %v4771 = vpop.f32.mrf.mxu0
      %v4772 = vadd.f32 %v4638, %v4771
      %4773 = vmatmul.bf16.gmra.mxu0 %v3825
      %v4774 = vpop.f32.mrf.mxu0
      %v4775 = vadd.f32 %v4641, %v4774
      %v4776 = vpop.f32.mrf.mxu0
      %v4777 = vadd.f32 %v4643, %v4776
      %4778 = vmatmul.bf16.gmra.mxu0 %v3833
      %v4779 = vpop.f32.mrf.mxu0
      %v4780 = vadd.f32 %v4646, %v4779
      %v4781 = vpop.f32.mrf.mxu0
      %v4782 = vadd.f32 %v4648, %v4781
      %4783 = vmatmul.bf16.gmra.mxu0 %v3841
      %v4784 = vpop.f32.mrf.mxu0
      %v4785 = vadd.f32 %v4651, %v4784
      %v4786 = vpop.f32.mrf.mxu0
      %v4787 = vadd.f32 %v4653, %v4786
      %4788 = vmatmul.bf16.gmra.mxu0 %v3849
      %v4789 = vpop.f32.mrf.mxu0
      %v4790 = vadd.f32 %v4656, %v4789
      %v4791 = vpop.f32.mrf.mxu0
      %v4792 = vadd.f32 %v4658, %v4791
      %4793 = vmatmul.bf16.gmra.mxu0 %v3857
      %v4794 = vpop.f32.mrf.mxu0
      %v4795 = vadd.f32 %v4661, %v4794
      %v4796 = vpop.f32.mrf.mxu0
      %v4797 = vadd.f32 %v4663, %v4796
      %4798 = vmatmul.bf16.gmra.mxu0 %v3865
      %v4799 = vpop.f32.mrf.mxu0
      %v4800 = vadd.f32 %v4666, %v4799
      %v4801 = vpop.f32.mrf.mxu0
      %v4802 = vadd.f32 %v4668, %v4801
      %4803 = vmatmul.bf16.gmra.mxu0 %v3873
      %v4804 = vpop.f32.mrf.mxu0
      %v4805 = vadd.f32 %v4671, %v4804
      %v4806 = vpop.f32.mrf.mxu0
      %v4807 = vadd.f32 %v4673, %v4806
      %4808 = vmatmul.bf16.gmra.mxu0 %v3881
      %v4809 = vpop.f32.mrf.mxu0
      %v4810 = vadd.f32 %v4676, %v4809
      %v4811 = vpop.f32.mrf.mxu0
      %v4812 = vadd.f32 %v4678, %v4811
      %4813 = vmatmul.bf16.gmra.mxu0 %v3889
      %v4814 = vpop.f32.mrf.mxu0
      %v4815 = vadd.f32 %v4681, %v4814
      %v4816 = vpop.f32.mrf.mxu0
      %v4817 = vadd.f32 %v4683, %v4816
      %4818 = vmatmul.bf16.gmra.mxu0 %v3897
      %v4819 = vpop.f32.mrf.mxu0
      %v4820 = vadd.f32 %v4686, %v4819
      %v4821 = vpop.f32.mrf.mxu0
      %v4822 = vadd.f32 %v4688, %v4821
      %4823 = vmatmul.bf16.gmra.mxu0 %v3905
      %v4824 = vpop.f32.mrf.mxu0
      %v4825 = vadd.f32 %v4691, %v4824
      %v4826 = vpop.f32.mrf.mxu0
      %v4827 = vadd.f32 %v4693, %v4826
      %4828 = vdwg.mxu0
      %4829 = vmatpush.bf16.msra.mxu0 %v4330
      %4830 = vmatpush.bf16.msra.mxu0 %v4329
      %4831 = vmatpush.bf16.msra.mxu0 %v4328
      %4832 = vmatpush.bf16.msra.mxu0 %v4327
      %4833 = vmatpush.bf16.msra.mxu0 %v4326
      %4834 = vmatpush.bf16.msra.mxu0 %v4325
      %4835 = vmatpush.bf16.msra.mxu0 %v4324
      %4836 = vmatpush.bf16.msra.mxu0 %v4323
      %4837 = vmatmul.bf16.gmra.mxu0 %v3714
      %v4838 = vpop.f32.mrf.mxu0
      %v4839 = vadd.f32 %v4705, %v4838
      %v4840 = vpop.f32.mrf.mxu0
      %v4841 = vadd.f32 %v4707, %v4840
      %4842 = vmatmul.bf16.gmra.mxu0 %v3722
      %v4843 = vpop.f32.mrf.mxu0
      %v4844 = vadd.f32 %v4710, %v4843
      %v4845 = vpop.f32.mrf.mxu0
      %v4846 = vadd.f32 %v4712, %v4845
      %4847 = vmatmul.bf16.gmra.mxu0 %v3730
      %v4848 = vpop.f32.mrf.mxu0
      %v4849 = vadd.f32 %v4715, %v4848
      %v4850 = vpop.f32.mrf.mxu0
      %v4851 = vadd.f32 %v4717, %v4850
      %4852 = vmatmul.bf16.gmra.mxu0 %v3738
      %v4853 = vpop.f32.mrf.mxu0
      %v4854 = vadd.f32 %v4720, %v4853
      %v4855 = vpop.f32.mrf.mxu0
      %v4856 = vadd.f32 %v4722, %v4855
      %4857 = vmatmul.bf16.gmra.mxu0 %v3746
      %v4858 = vpop.f32.mrf.mxu0
      %v4859 = vadd.f32 %v4725, %v4858
      %v4860 = vpop.f32.mrf.mxu0
      %v4861 = vadd.f32 %v4727, %v4860
      %4862 = vmatmul.bf16.gmra.mxu0 %v3754
      %v4863 = vpop.f32.mrf.mxu0
      %v4864 = vadd.f32 %v4730, %v4863
      %v4865 = vpop.f32.mrf.mxu0
      %v4866 = vadd.f32 %v4732, %v4865
      %4867 = vmatmul.bf16.gmra.mxu0 %v3762
      %v4868 = vpop.f32.mrf.mxu0
      %v4869 = vadd.f32 %v4735, %v4868
      %v4870 = vpop.f32.mrf.mxu0
      %v4871 = vadd.f32 %v4737, %v4870
      %4872 = vmatmul.bf16.gmra.mxu0 %v3770
      %v4873 = vpop.f32.mrf.mxu0
      %v4874 = vadd.f32 %v4740, %v4873
      %v4875 = vpop.f32.mrf.mxu0
      %v4876 = vadd.f32 %v4742, %v4875
      %4877 = vmatmul.bf16.gmra.mxu0 %v3778
      %v4878 = vpop.f32.mrf.mxu0
      %v4879 = vadd.f32 %v4745, %v4878
      %v4880 = vpop.f32.mrf.mxu0
      %v4881 = vadd.f32 %v4747, %v4880
      %4882 = vmatmul.bf16.gmra.mxu0 %v3786
      %v4883 = vpop.f32.mrf.mxu0
      %v4884 = vadd.f32 %v4750, %v4883
      %v4885 = vpop.f32.mrf.mxu0
      %v4886 = vadd.f32 %v4752, %v4885
      %4887 = vmatmul.bf16.gmra.mxu0 %v3794
      %v4888 = vpop.f32.mrf.mxu0
      %v4889 = vadd.f32 %v4755, %v4888
      %v4890 = vpop.f32.mrf.mxu0
      %v4891 = vadd.f32 %v4757, %v4890
      %4892 = vmatmul.bf16.gmra.mxu0 %v3802
      %v4893 = vpop.f32.mrf.mxu0
      %v4894 = vadd.f32 %v4760, %v4893
      %v4895 = vpop.f32.mrf.mxu0
      %v4896 = vadd.f32 %v4762, %v4895
      %4897 = vmatmul.bf16.gmra.mxu0 %v3810
      %v4898 = vpop.f32.mrf.mxu0
      %v4899 = vadd.f32 %v4765, %v4898
      %v4900 = vpop.f32.mrf.mxu0
      %v4901 = vadd.f32 %v4767, %v4900
      %4902 = vmatmul.bf16.gmra.mxu0 %v3818
      %v4903 = vpop.f32.mrf.mxu0
      %v4904 = vadd.f32 %v4770, %v4903
      %v4905 = vpop.f32.mrf.mxu0
      %v4906 = vadd.f32 %v4772, %v4905
      %4907 = vmatmul.bf16.gmra.mxu0 %v3826
      %v4908 = vpop.f32.mrf.mxu0
      %v4909 = vadd.f32 %v4775, %v4908
      %v4910 = vpop.f32.mrf.mxu0
      %v4911 = vadd.f32 %v4777, %v4910
      %4912 = vmatmul.bf16.gmra.mxu0 %v3834
      %v4913 = vpop.f32.mrf.mxu0
      %v4914 = vadd.f32 %v4780, %v4913
      %v4915 = vpop.f32.mrf.mxu0
      %v4916 = vadd.f32 %v4782, %v4915
      %4917 = vmatmul.bf16.gmra.mxu0 %v3842
      %v4918 = vpop.f32.mrf.mxu0
      %v4919 = vadd.f32 %v4785, %v4918
      %v4920 = vpop.f32.mrf.mxu0
      %v4921 = vadd.f32 %v4787, %v4920
      %4922 = vmatmul.bf16.gmra.mxu0 %v3850
      %v4923 = vpop.f32.mrf.mxu0
      %v4924 = vadd.f32 %v4790, %v4923
      %v4925 = vpop.f32.mrf.mxu0
      %v4926 = vadd.f32 %v4792, %v4925
      %4927 = vmatmul.bf16.gmra.mxu0 %v3858
      %v4928 = vpop.f32.mrf.mxu0
      %v4929 = vadd.f32 %v4795, %v4928
      %v4930 = vpop.f32.mrf.mxu0
      %v4931 = vadd.f32 %v4797, %v4930
      %4932 = vmatmul.bf16.gmra.mxu0 %v3866
      %v4933 = vpop.f32.mrf.mxu0
      %v4934 = vadd.f32 %v4800, %v4933
      %v4935 = vpop.f32.mrf.mxu0
      %v4936 = vadd.f32 %v4802, %v4935
      %4937 = vmatmul.bf16.gmra.mxu0 %v3874
      %v4938 = vpop.f32.mrf.mxu0
      %v4939 = vadd.f32 %v4805, %v4938
      %v4940 = vpop.f32.mrf.mxu0
      %v4941 = vadd.f32 %v4807, %v4940
      %4942 = vmatmul.bf16.gmra.mxu0 %v3882
      %v4943 = vpop.f32.mrf.mxu0
      %v4944 = vadd.f32 %v4810, %v4943
      %v4945 = vpop.f32.mrf.mxu0
      %v4946 = vadd.f32 %v4812, %v4945
      %4947 = vmatmul.bf16.gmra.mxu0 %v3890
      %v4948 = vpop.f32.mrf.mxu0
      %v4949 = vadd.f32 %v4815, %v4948
      %v4950 = vpop.f32.mrf.mxu0
      %v4951 = vadd.f32 %v4817, %v4950
      %4952 = vmatmul.bf16.gmra.mxu0 %v3898
      %v4953 = vpop.f32.mrf.mxu0
      %v4954 = vadd.f32 %v4820, %v4953
      %v4955 = vpop.f32.mrf.mxu0
      %v4956 = vadd.f32 %v4822, %v4955
      %4957 = vmatmul.bf16.gmra.mxu0 %v3906
      %v4958 = vpop.f32.mrf.mxu0
      %v4959 = vadd.f32 %v4825, %v4958
      %v4960 = vpop.f32.mrf.mxu0
      %v4961 = vadd.f32 %v4827, %v4960
      %4962 = vdwg.mxu0
      %4963 = vmatpush.bf16.msra.mxu0 %v4338
      %4964 = vmatpush.bf16.msra.mxu0 %v4337
      %4965 = vmatpush.bf16.msra.mxu0 %v4336
      %4966 = vmatpush.bf16.msra.mxu0 %v4335
      %4967 = vmatpush.bf16.msra.mxu0 %v4334
      %4968 = vmatpush.bf16.msra.mxu0 %v4333
      %4969 = vmatpush.bf16.msra.mxu0 %v4332
      %4970 = vmatpush.bf16.msra.mxu0 %v4331
      %4971 = vmatmul.bf16.gmra.mxu0 %v3715
      %v4972 = vpop.f32.mrf.mxu0
      %v4973 = vadd.f32 %v4839, %v4972
      %v4974 = vpop.f32.mrf.mxu0
      %v4975 = vadd.f32 %v4841, %v4974
      %4976 = vmatmul.bf16.gmra.mxu0 %v3723
      %v4977 = vpop.f32.mrf.mxu0
      %v4978 = vadd.f32 %v4844, %v4977
      %v4979 = vpop.f32.mrf.mxu0
      %v4980 = vadd.f32 %v4846, %v4979
      %4981 = vmatmul.bf16.gmra.mxu0 %v3731
      %v4982 = vpop.f32.mrf.mxu0
      %v4983 = vadd.f32 %v4849, %v4982
      %v4984 = vpop.f32.mrf.mxu0
      %v4985 = vadd.f32 %v4851, %v4984
      %4986 = vmatmul.bf16.gmra.mxu0 %v3739
      %v4987 = vpop.f32.mrf.mxu0
      %v4988 = vadd.f32 %v4854, %v4987
      %v4989 = vpop.f32.mrf.mxu0
      %v4990 = vadd.f32 %v4856, %v4989
      %4991 = vmatmul.bf16.gmra.mxu0 %v3747
      %v4992 = vpop.f32.mrf.mxu0
      %v4993 = vadd.f32 %v4859, %v4992
      %v4994 = vpop.f32.mrf.mxu0
      %v4995 = vadd.f32 %v4861, %v4994
      %4996 = vmatmul.bf16.gmra.mxu0 %v3755
      %v4997 = vpop.f32.mrf.mxu0
      %v4998 = vadd.f32 %v4864, %v4997
      %v4999 = vpop.f32.mrf.mxu0
      %v5000 = vadd.f32 %v4866, %v4999
      %5001 = vmatmul.bf16.gmra.mxu0 %v3763
      %v5002 = vpop.f32.mrf.mxu0
      %v5003 = vadd.f32 %v4869, %v5002
      %v5004 = vpop.f32.mrf.mxu0
      %v5005 = vadd.f32 %v4871, %v5004
      %5006 = vmatmul.bf16.gmra.mxu0 %v3771
      %v5007 = vpop.f32.mrf.mxu0
      %v5008 = vadd.f32 %v4874, %v5007
      %v5009 = vpop.f32.mrf.mxu0
      %v5010 = vadd.f32 %v4876, %v5009
      %5011 = vmatmul.bf16.gmra.mxu0 %v3779
      %v5012 = vpop.f32.mrf.mxu0
      %v5013 = vadd.f32 %v4879, %v5012
      %v5014 = vpop.f32.mrf.mxu0
      %v5015 = vadd.f32 %v4881, %v5014
      %5016 = vmatmul.bf16.gmra.mxu0 %v3787
      %v5017 = vpop.f32.mrf.mxu0
      %v5018 = vadd.f32 %v4884, %v5017
      %v5019 = vpop.f32.mrf.mxu0
      %v5020 = vadd.f32 %v4886, %v5019
      %5021 = vmatmul.bf16.gmra.mxu0 %v3795
      %v5022 = vpop.f32.mrf.mxu0
      %v5023 = vadd.f32 %v4889, %v5022
      %v5024 = vpop.f32.mrf.mxu0
      %v5025 = vadd.f32 %v4891, %v5024
      %5026 = vmatmul.bf16.gmra.mxu0 %v3803
      %v5027 = vpop.f32.mrf.mxu0
      %v5028 = vadd.f32 %v4894, %v5027
      %v5029 = vpop.f32.mrf.mxu0
      %v5030 = vadd.f32 %v4896, %v5029
      %5031 = vmatmul.bf16.gmra.mxu0 %v3811
      %v5032 = vpop.f32.mrf.mxu0
      %v5033 = vadd.f32 %v4899, %v5032
      %v5034 = vpop.f32.mrf.mxu0
      %v5035 = vadd.f32 %v4901, %v5034
      %5036 = vmatmul.bf16.gmra.mxu0 %v3819
      %v5037 = vpop.f32.mrf.mxu0
      %v5038 = vadd.f32 %v4904, %v5037
      %v5039 = vpop.f32.mrf.mxu0
      %v5040 = vadd.f32 %v4906, %v5039
      %5041 = vmatmul.bf16.gmra.mxu0 %v3827
      %v5042 = vpop.f32.mrf.mxu0
      %v5043 = vadd.f32 %v4909, %v5042
      %v5044 = vpop.f32.mrf.mxu0
      %v5045 = vadd.f32 %v4911, %v5044
      %5046 = vmatmul.bf16.gmra.mxu0 %v3835
      %v5047 = vpop.f32.mrf.mxu0
      %v5048 = vadd.f32 %v4914, %v5047
      %v5049 = vpop.f32.mrf.mxu0
      %v5050 = vadd.f32 %v4916, %v5049
      %5051 = vmatmul.bf16.gmra.mxu0 %v3843
      %v5052 = vpop.f32.mrf.mxu0
      %v5053 = vadd.f32 %v4919, %v5052
      %v5054 = vpop.f32.mrf.mxu0
      %v5055 = vadd.f32 %v4921, %v5054
      %5056 = vmatmul.bf16.gmra.mxu0 %v3851
      %v5057 = vpop.f32.mrf.mxu0
      %v5058 = vadd.f32 %v4924, %v5057
      %v5059 = vpop.f32.mrf.mxu0
      %v5060 = vadd.f32 %v4926, %v5059
      %5061 = vmatmul.bf16.gmra.mxu0 %v3859
      %v5062 = vpop.f32.mrf.mxu0
      %v5063 = vadd.f32 %v4929, %v5062
      %v5064 = vpop.f32.mrf.mxu0
      %v5065 = vadd.f32 %v4931, %v5064
      %5066 = vmatmul.bf16.gmra.mxu0 %v3867
      %v5067 = vpop.f32.mrf.mxu0
      %v5068 = vadd.f32 %v4934, %v5067
      %v5069 = vpop.f32.mrf.mxu0
      %v5070 = vadd.f32 %v4936, %v5069
      %5071 = vmatmul.bf16.gmra.mxu0 %v3875
      %v5072 = vpop.f32.mrf.mxu0
      %v5073 = vadd.f32 %v4939, %v5072
      %v5074 = vpop.f32.mrf.mxu0
      %v5075 = vadd.f32 %v4941, %v5074
      %5076 = vmatmul.bf16.gmra.mxu0 %v3883
      %v5077 = vpop.f32.mrf.mxu0
      %v5078 = vadd.f32 %v4944, %v5077
      %v5079 = vpop.f32.mrf.mxu0
      %v5080 = vadd.f32 %v4946, %v5079
      %5081 = vmatmul.bf16.gmra.mxu0 %v3891
      %v5082 = vpop.f32.mrf.mxu0
      %v5083 = vadd.f32 %v4949, %v5082
      %v5084 = vpop.f32.mrf.mxu0
      %v5085 = vadd.f32 %v4951, %v5084
      %5086 = vmatmul.bf16.gmra.mxu0 %v3899
      %v5087 = vpop.f32.mrf.mxu0
      %v5088 = vadd.f32 %v4954, %v5087
      %v5089 = vpop.f32.mrf.mxu0
      %v5090 = vadd.f32 %v4956, %v5089
      %5091 = vmatmul.bf16.gmra.mxu0 %v3907
      %v5092 = vpop.f32.mrf.mxu0
      %v5093 = vadd.f32 %v4959, %v5092
      %v5094 = vpop.f32.mrf.mxu0
      %v5095 = vadd.f32 %v4961, %v5094
      %5096 = vdwg.mxu0
      %5097 = vmatpush.bf16.msra.mxu0 %v4346
      %5098 = vmatpush.bf16.msra.mxu0 %v4345
      %5099 = vmatpush.bf16.msra.mxu0 %v4344
      %5100 = vmatpush.bf16.msra.mxu0 %v4343
      %5101 = vmatpush.bf16.msra.mxu0 %v4342
      %5102 = vmatpush.bf16.msra.mxu0 %v4341
      %5103 = vmatpush.bf16.msra.mxu0 %v4340
      %5104 = vmatpush.bf16.msra.mxu0 %v4339
      %5105 = vmatmul.bf16.gmra.mxu0 %v3716
      %v5106 = vpop.f32.mrf.mxu0
      %v5107 = vadd.f32 %v4973, %v5106
      %v5108 = vpop.f32.mrf.mxu0
      %v5109 = vadd.f32 %v4975, %v5108
      %5110 = vmatmul.bf16.gmra.mxu0 %v3724
      %v5111 = vpop.f32.mrf.mxu0
      %v5112 = vadd.f32 %v4978, %v5111
      %v5113 = vpop.f32.mrf.mxu0
      %v5114 = vadd.f32 %v4980, %v5113
      %5115 = vmatmul.bf16.gmra.mxu0 %v3732
      %v5116 = vpop.f32.mrf.mxu0
      %v5117 = vadd.f32 %v4983, %v5116
      %v5118 = vpop.f32.mrf.mxu0
      %v5119 = vadd.f32 %v4985, %v5118
      %5120 = vmatmul.bf16.gmra.mxu0 %v3740
      %v5121 = vpop.f32.mrf.mxu0
      %v5122 = vadd.f32 %v4988, %v5121
      %v5123 = vpop.f32.mrf.mxu0
      %v5124 = vadd.f32 %v4990, %v5123
      %5125 = vmatmul.bf16.gmra.mxu0 %v3748
      %v5126 = vpop.f32.mrf.mxu0
      %v5127 = vadd.f32 %v4993, %v5126
      %v5128 = vpop.f32.mrf.mxu0
      %v5129 = vadd.f32 %v4995, %v5128
      %5130 = vmatmul.bf16.gmra.mxu0 %v3756
      %v5131 = vpop.f32.mrf.mxu0
      %v5132 = vadd.f32 %v4998, %v5131
      %v5133 = vpop.f32.mrf.mxu0
      %v5134 = vadd.f32 %v5000, %v5133
      %5135 = vmatmul.bf16.gmra.mxu0 %v3764
      %v5136 = vpop.f32.mrf.mxu0
      %v5137 = vadd.f32 %v5003, %v5136
      %v5138 = vpop.f32.mrf.mxu0
      %v5139 = vadd.f32 %v5005, %v5138
      %5140 = vmatmul.bf16.gmra.mxu0 %v3772
      %v5141 = vpop.f32.mrf.mxu0
      %v5142 = vadd.f32 %v5008, %v5141
      %v5143 = vpop.f32.mrf.mxu0
      %v5144 = vadd.f32 %v5010, %v5143
      %5145 = vmatmul.bf16.gmra.mxu0 %v3780
      %v5146 = vpop.f32.mrf.mxu0
      %v5147 = vadd.f32 %v5013, %v5146
      %v5148 = vpop.f32.mrf.mxu0
      %v5149 = vadd.f32 %v5015, %v5148
      %5150 = vmatmul.bf16.gmra.mxu0 %v3788
      %v5151 = vpop.f32.mrf.mxu0
      %v5152 = vadd.f32 %v5018, %v5151
      %v5153 = vpop.f32.mrf.mxu0
      %v5154 = vadd.f32 %v5020, %v5153
      %5155 = vmatmul.bf16.gmra.mxu0 %v3796
      %v5156 = vpop.f32.mrf.mxu0
      %v5157 = vadd.f32 %v5023, %v5156
      %v5158 = vpop.f32.mrf.mxu0
      %v5159 = vadd.f32 %v5025, %v5158
      %5160 = vmatmul.bf16.gmra.mxu0 %v3804
      %v5161 = vpop.f32.mrf.mxu0
      %v5162 = vadd.f32 %v5028, %v5161
      %v5163 = vpop.f32.mrf.mxu0
      %v5164 = vadd.f32 %v5030, %v5163
      %5165 = vmatmul.bf16.gmra.mxu0 %v3812
      %v5166 = vpop.f32.mrf.mxu0
      %v5167 = vadd.f32 %v5033, %v5166
      %v5168 = vpop.f32.mrf.mxu0
      %v5169 = vadd.f32 %v5035, %v5168
      %5170 = vmatmul.bf16.gmra.mxu0 %v3820
      %v5171 = vpop.f32.mrf.mxu0
      %v5172 = vadd.f32 %v5038, %v5171
      %v5173 = vpop.f32.mrf.mxu0
      %v5174 = vadd.f32 %v5040, %v5173
      %5175 = vmatmul.bf16.gmra.mxu0 %v3828
      %v5176 = vpop.f32.mrf.mxu0
      %v5177 = vadd.f32 %v5043, %v5176
      %v5178 = vpop.f32.mrf.mxu0
      %v5179 = vadd.f32 %v5045, %v5178
      %5180 = vmatmul.bf16.gmra.mxu0 %v3836
      %v5181 = vpop.f32.mrf.mxu0
      %v5182 = vadd.f32 %v5048, %v5181
      %v5183 = vpop.f32.mrf.mxu0
      %v5184 = vadd.f32 %v5050, %v5183
      %5185 = vmatmul.bf16.gmra.mxu0 %v3844
      %v5186 = vpop.f32.mrf.mxu0
      %v5187 = vadd.f32 %v5053, %v5186
      %v5188 = vpop.f32.mrf.mxu0
      %v5189 = vadd.f32 %v5055, %v5188
      %5190 = vmatmul.bf16.gmra.mxu0 %v3852
      %v5191 = vpop.f32.mrf.mxu0
      %v5192 = vadd.f32 %v5058, %v5191
      %v5193 = vpop.f32.mrf.mxu0
      %v5194 = vadd.f32 %v5060, %v5193
      %5195 = vmatmul.bf16.gmra.mxu0 %v3860
      %v5196 = vpop.f32.mrf.mxu0
      %v5197 = vadd.f32 %v5063, %v5196
      %v5198 = vpop.f32.mrf.mxu0
      %v5199 = vadd.f32 %v5065, %v5198
      %5200 = vmatmul.bf16.gmra.mxu0 %v3868
      %v5201 = vpop.f32.mrf.mxu0
      %v5202 = vadd.f32 %v5068, %v5201
      %v5203 = vpop.f32.mrf.mxu0
      %v5204 = vadd.f32 %v5070, %v5203
      %5205 = vmatmul.bf16.gmra.mxu0 %v3876
      %v5206 = vpop.f32.mrf.mxu0
      %v5207 = vadd.f32 %v5073, %v5206
      %v5208 = vpop.f32.mrf.mxu0
      %v5209 = vadd.f32 %v5075, %v5208
      %5210 = vmatmul.bf16.gmra.mxu0 %v3884
      %v5211 = vpop.f32.mrf.mxu0
      %v5212 = vadd.f32 %v5078, %v5211
      %v5213 = vpop.f32.mrf.mxu0
      %v5214 = vadd.f32 %v5080, %v5213
      %5215 = vmatmul.bf16.gmra.mxu0 %v3892
      %v5216 = vpop.f32.mrf.mxu0
      %v5217 = vadd.f32 %v5083, %v5216
      %v5218 = vpop.f32.mrf.mxu0
      %v5219 = vadd.f32 %v5085, %v5218
      %5220 = vmatmul.bf16.gmra.mxu0 %v3900
      %v5221 = vpop.f32.mrf.mxu0
      %v5222 = vadd.f32 %v5088, %v5221
      %v5223 = vpop.f32.mrf.mxu0
      %v5224 = vadd.f32 %v5090, %v5223
      %5225 = vmatmul.bf16.gmra.mxu0 %v3908
      %v5226 = vpop.f32.mrf.mxu0
      %v5227 = vadd.f32 %v5093, %v5226
      %v5228 = vpop.f32.mrf.mxu0
      %v5229 = vadd.f32 %v5095, %v5228
      %5230 = vdwg.mxu0
      %5231 = vmatpush.bf16.msra.mxu0 %v4354
      %5232 = vmatpush.bf16.msra.mxu0 %v4353
      %5233 = vmatpush.bf16.msra.mxu0 %v4352
      %5234 = vmatpush.bf16.msra.mxu0 %v4351
      %5235 = vmatpush.bf16.msra.mxu0 %v4350
      %5236 = vmatpush.bf16.msra.mxu0 %v4349
      %5237 = vmatpush.bf16.msra.mxu0 %v4348
      %5238 = vmatpush.bf16.msra.mxu0 %v4347
      %5239 = vmatmul.bf16.gmra.mxu0 %v3717
      %v5240 = vpop.f32.mrf.mxu0
      %v5241 = vadd.f32 %v5107, %v5240
      %v5242 = vpop.f32.mrf.mxu0
      %v5243 = vadd.f32 %v5109, %v5242
      %5244 = vmatmul.bf16.gmra.mxu0 %v3725
      %v5245 = vpop.f32.mrf.mxu0
      %v5246 = vadd.f32 %v5112, %v5245
      %v5247 = vpop.f32.mrf.mxu0
      %v5248 = vadd.f32 %v5114, %v5247
      %5249 = vmatmul.bf16.gmra.mxu0 %v3733
      %v5250 = vpop.f32.mrf.mxu0
      %v5251 = vadd.f32 %v5117, %v5250
      %v5252 = vpop.f32.mrf.mxu0
      %v5253 = vadd.f32 %v5119, %v5252
      %5254 = vmatmul.bf16.gmra.mxu0 %v3741
      %v5255 = vpop.f32.mrf.mxu0
      %v5256 = vadd.f32 %v5122, %v5255
      %v5257 = vpop.f32.mrf.mxu0
      %v5258 = vadd.f32 %v5124, %v5257
      %5259 = vmatmul.bf16.gmra.mxu0 %v3749
      %v5260 = vpop.f32.mrf.mxu0
      %v5261 = vadd.f32 %v5127, %v5260
      %v5262 = vpop.f32.mrf.mxu0
      %v5263 = vadd.f32 %v5129, %v5262
      %5264 = vmatmul.bf16.gmra.mxu0 %v3757
      %v5265 = vpop.f32.mrf.mxu0
      %v5266 = vadd.f32 %v5132, %v5265
      %v5267 = vpop.f32.mrf.mxu0
      %v5268 = vadd.f32 %v5134, %v5267
      %5269 = vmatmul.bf16.gmra.mxu0 %v3765
      %v5270 = vpop.f32.mrf.mxu0
      %v5271 = vadd.f32 %v5137, %v5270
      %v5272 = vpop.f32.mrf.mxu0
      %v5273 = vadd.f32 %v5139, %v5272
      %5274 = vmatmul.bf16.gmra.mxu0 %v3773
      %v5275 = vpop.f32.mrf.mxu0
      %v5276 = vadd.f32 %v5142, %v5275
      %v5277 = vpop.f32.mrf.mxu0
      %v5278 = vadd.f32 %v5144, %v5277
      %5279 = vmatmul.bf16.gmra.mxu0 %v3781
      %v5280 = vpop.f32.mrf.mxu0
      %v5281 = vadd.f32 %v5147, %v5280
      %v5282 = vpop.f32.mrf.mxu0
      %v5283 = vadd.f32 %v5149, %v5282
      %5284 = vmatmul.bf16.gmra.mxu0 %v3789
      %v5285 = vpop.f32.mrf.mxu0
      %v5286 = vadd.f32 %v5152, %v5285
      %v5287 = vpop.f32.mrf.mxu0
      %v5288 = vadd.f32 %v5154, %v5287
      %5289 = vmatmul.bf16.gmra.mxu0 %v3797
      %v5290 = vpop.f32.mrf.mxu0
      %v5291 = vadd.f32 %v5157, %v5290
      %v5292 = vpop.f32.mrf.mxu0
      %v5293 = vadd.f32 %v5159, %v5292
      %5294 = vmatmul.bf16.gmra.mxu0 %v3805
      %v5295 = vpop.f32.mrf.mxu0
      %v5296 = vadd.f32 %v5162, %v5295
      %v5297 = vpop.f32.mrf.mxu0
      %v5298 = vadd.f32 %v5164, %v5297
      %5299 = vmatmul.bf16.gmra.mxu0 %v3813
      %v5300 = vpop.f32.mrf.mxu0
      %v5301 = vadd.f32 %v5167, %v5300
      %v5302 = vpop.f32.mrf.mxu0
      %v5303 = vadd.f32 %v5169, %v5302
      %5304 = vmatmul.bf16.gmra.mxu0 %v3821
      %v5305 = vpop.f32.mrf.mxu0
      %v5306 = vadd.f32 %v5172, %v5305
      %v5307 = vpop.f32.mrf.mxu0
      %v5308 = vadd.f32 %v5174, %v5307
      %5309 = vmatmul.bf16.gmra.mxu0 %v3829
      %v5310 = vpop.f32.mrf.mxu0
      %v5311 = vadd.f32 %v5177, %v5310
      %v5312 = vpop.f32.mrf.mxu0
      %v5313 = vadd.f32 %v5179, %v5312
      %5314 = vmatmul.bf16.gmra.mxu0 %v3837
      %v5315 = vpop.f32.mrf.mxu0
      %v5316 = vadd.f32 %v5182, %v5315
      %v5317 = vpop.f32.mrf.mxu0
      %v5318 = vadd.f32 %v5184, %v5317
      %5319 = vmatmul.bf16.gmra.mxu0 %v3845
      %v5320 = vpop.f32.mrf.mxu0
      %v5321 = vadd.f32 %v5187, %v5320
      %v5322 = vpop.f32.mrf.mxu0
      %v5323 = vadd.f32 %v5189, %v5322
      %5324 = vmatmul.bf16.gmra.mxu0 %v3853
      %v5325 = vpop.f32.mrf.mxu0
      %v5326 = vadd.f32 %v5192, %v5325
      %v5327 = vpop.f32.mrf.mxu0
      %v5328 = vadd.f32 %v5194, %v5327
      %5329 = vmatmul.bf16.gmra.mxu0 %v3861
      %v5330 = vpop.f32.mrf.mxu0
      %v5331 = vadd.f32 %v5197, %v5330
      %v5332 = vpop.f32.mrf.mxu0
      %v5333 = vadd.f32 %v5199, %v5332
      %5334 = vmatmul.bf16.gmra.mxu0 %v3869
      %v5335 = vpop.f32.mrf.mxu0
      %v5336 = vadd.f32 %v5202, %v5335
      %v5337 = vpop.f32.mrf.mxu0
      %v5338 = vadd.f32 %v5204, %v5337
      %5339 = vmatmul.bf16.gmra.mxu0 %v3877
      %v5340 = vpop.f32.mrf.mxu0
      %v5341 = vadd.f32 %v5207, %v5340
      %v5342 = vpop.f32.mrf.mxu0
      %v5343 = vadd.f32 %v5209, %v5342
      %5344 = vmatmul.bf16.gmra.mxu0 %v3885
      %v5345 = vpop.f32.mrf.mxu0
      %v5346 = vadd.f32 %v5212, %v5345
      %v5347 = vpop.f32.mrf.mxu0
      %v5348 = vadd.f32 %v5214, %v5347
      %5349 = vmatmul.bf16.gmra.mxu0 %v3893
      %v5350 = vpop.f32.mrf.mxu0
      %v5351 = vadd.f32 %v5217, %v5350
      %v5352 = vpop.f32.mrf.mxu0
      %v5353 = vadd.f32 %v5219, %v5352
      %5354 = vmatmul.bf16.gmra.mxu0 %v3901
      %v5355 = vpop.f32.mrf.mxu0
      %v5356 = vadd.f32 %v5222, %v5355
      %v5357 = vpop.f32.mrf.mxu0
      %v5358 = vadd.f32 %v5224, %v5357
      %5359 = vmatmul.bf16.gmra.mxu0 %v3909
      %v5360 = vpop.f32.mrf.mxu0
      %v5361 = vadd.f32 %v5227, %v5360
      %v5362 = vpop.f32.mrf.mxu0
      %v5363 = vadd.f32 %v5229, %v5362
      %5364 = vdwg.mxu0
      %5365 = vmatpush.bf16.msra.mxu0 %v4362
      %5366 = vmatpush.bf16.msra.mxu0 %v4361
      %5367 = vmatpush.bf16.msra.mxu0 %v4360
      %5368 = vmatpush.bf16.msra.mxu0 %v4359
      %5369 = vmatpush.bf16.msra.mxu0 %v4358
      %5370 = vmatpush.bf16.msra.mxu0 %v4357
      %5371 = vmatpush.bf16.msra.mxu0 %v4356
      %5372 = vmatpush.bf16.msra.mxu0 %v4355
      %5373 = vmatmul.bf16.gmra.mxu0 %v3718
      %v5374 = vpop.f32.mrf.mxu0
      %v5375 = vadd.f32 %v5241, %v5374
      %v5376 = vpop.f32.mrf.mxu0
      %v5377 = vadd.f32 %v5243, %v5376
      %5378 = vmatmul.bf16.gmra.mxu0 %v3726
      %v5379 = vpop.f32.mrf.mxu0
      %v5380 = vadd.f32 %v5246, %v5379
      %v5381 = vpop.f32.mrf.mxu0
      %v5382 = vadd.f32 %v5248, %v5381
      %5383 = vmatmul.bf16.gmra.mxu0 %v3734
      %v5384 = vpop.f32.mrf.mxu0
      %v5385 = vadd.f32 %v5251, %v5384
      %v5386 = vpop.f32.mrf.mxu0
      %v5387 = vadd.f32 %v5253, %v5386
      %5388 = vmatmul.bf16.gmra.mxu0 %v3742
      %v5389 = vpop.f32.mrf.mxu0
      %v5390 = vadd.f32 %v5256, %v5389
      %v5391 = vpop.f32.mrf.mxu0
      %v5392 = vadd.f32 %v5258, %v5391
      %5393 = vmatmul.bf16.gmra.mxu0 %v3750
      %v5394 = vpop.f32.mrf.mxu0
      %v5395 = vadd.f32 %v5261, %v5394
      %v5396 = vpop.f32.mrf.mxu0
      %v5397 = vadd.f32 %v5263, %v5396
      %5398 = vmatmul.bf16.gmra.mxu0 %v3758
      %v5399 = vpop.f32.mrf.mxu0
      %v5400 = vadd.f32 %v5266, %v5399
      %v5401 = vpop.f32.mrf.mxu0
      %v5402 = vadd.f32 %v5268, %v5401
      %5403 = vmatmul.bf16.gmra.mxu0 %v3766
      %v5404 = vpop.f32.mrf.mxu0
      %v5405 = vadd.f32 %v5271, %v5404
      %v5406 = vpop.f32.mrf.mxu0
      %v5407 = vadd.f32 %v5273, %v5406
      %5408 = vmatmul.bf16.gmra.mxu0 %v3774
      %v5409 = vpop.f32.mrf.mxu0
      %v5410 = vadd.f32 %v5276, %v5409
      %v5411 = vpop.f32.mrf.mxu0
      %v5412 = vadd.f32 %v5278, %v5411
      %5413 = vmatmul.bf16.gmra.mxu0 %v3782
      %v5414 = vpop.f32.mrf.mxu0
      %v5415 = vadd.f32 %v5281, %v5414
      %v5416 = vpop.f32.mrf.mxu0
      %v5417 = vadd.f32 %v5283, %v5416
      %5418 = vmatmul.bf16.gmra.mxu0 %v3790
      %v5419 = vpop.f32.mrf.mxu0
      %v5420 = vadd.f32 %v5286, %v5419
      %v5421 = vpop.f32.mrf.mxu0
      %v5422 = vadd.f32 %v5288, %v5421
      %5423 = vmatmul.bf16.gmra.mxu0 %v3798
      %v5424 = vpop.f32.mrf.mxu0
      %v5425 = vadd.f32 %v5291, %v5424
      %v5426 = vpop.f32.mrf.mxu0
      %v5427 = vadd.f32 %v5293, %v5426
      %5428 = vmatmul.bf16.gmra.mxu0 %v3806
      %v5429 = vpop.f32.mrf.mxu0
      %v5430 = vadd.f32 %v5296, %v5429
      %v5431 = vpop.f32.mrf.mxu0
      %v5432 = vadd.f32 %v5298, %v5431
      %5433 = vmatmul.bf16.gmra.mxu0 %v3814
      %v5434 = vpop.f32.mrf.mxu0
      %v5435 = vadd.f32 %v5301, %v5434
      %v5436 = vpop.f32.mrf.mxu0
      %v5437 = vadd.f32 %v5303, %v5436
      %5438 = vmatmul.bf16.gmra.mxu0 %v3822
      %v5439 = vpop.f32.mrf.mxu0
      %v5440 = vadd.f32 %v5306, %v5439
      %v5441 = vpop.f32.mrf.mxu0
      %v5442 = vadd.f32 %v5308, %v5441
      %5443 = vmatmul.bf16.gmra.mxu0 %v3830
      %v5444 = vpop.f32.mrf.mxu0
      %v5445 = vadd.f32 %v5311, %v5444
      %v5446 = vpop.f32.mrf.mxu0
      %v5447 = vadd.f32 %v5313, %v5446
      %5448 = vmatmul.bf16.gmra.mxu0 %v3838
      %v5449 = vpop.f32.mrf.mxu0
      %v5450 = vadd.f32 %v5316, %v5449
      %v5451 = vpop.f32.mrf.mxu0
      %v5452 = vadd.f32 %v5318, %v5451
      %5453 = vmatmul.bf16.gmra.mxu0 %v3846
      %v5454 = vpop.f32.mrf.mxu0
      %v5455 = vadd.f32 %v5321, %v5454
      %v5456 = vpop.f32.mrf.mxu0
      %v5457 = vadd.f32 %v5323, %v5456
      %5458 = vmatmul.bf16.gmra.mxu0 %v3854
      %v5459 = vpop.f32.mrf.mxu0
      %v5460 = vadd.f32 %v5326, %v5459
      %v5461 = vpop.f32.mrf.mxu0
      %v5462 = vadd.f32 %v5328, %v5461
      %5463 = vmatmul.bf16.gmra.mxu0 %v3862
      %v5464 = vpop.f32.mrf.mxu0
      %v5465 = vadd.f32 %v5331, %v5464
      %v5466 = vpop.f32.mrf.mxu0
      %v5467 = vadd.f32 %v5333, %v5466
      %5468 = vmatmul.bf16.gmra.mxu0 %v3870
      %v5469 = vpop.f32.mrf.mxu0
      %v5470 = vadd.f32 %v5336, %v5469
      %v5471 = vpop.f32.mrf.mxu0
      %v5472 = vadd.f32 %v5338, %v5471
      %5473 = vmatmul.bf16.gmra.mxu0 %v3878
      %v5474 = vpop.f32.mrf.mxu0
      %v5475 = vadd.f32 %v5341, %v5474
      %v5476 = vpop.f32.mrf.mxu0
      %v5477 = vadd.f32 %v5343, %v5476
      %5478 = vmatmul.bf16.gmra.mxu0 %v3886
      %v5479 = vpop.f32.mrf.mxu0
      %v5480 = vadd.f32 %v5346, %v5479
      %v5481 = vpop.f32.mrf.mxu0
      %v5482 = vadd.f32 %v5348, %v5481
      %5483 = vmatmul.bf16.gmra.mxu0 %v3894
      %v5484 = vpop.f32.mrf.mxu0
      %v5485 = vadd.f32 %v5351, %v5484
      %v5486 = vpop.f32.mrf.mxu0
      %v5487 = vadd.f32 %v5353, %v5486
      %5488 = vmatmul.bf16.gmra.mxu0 %v3902
      %v5489 = vpop.f32.mrf.mxu0
      %v5490 = vadd.f32 %v5356, %v5489
      %v5491 = vpop.f32.mrf.mxu0
      %v5492 = vadd.f32 %v5358, %v5491
      %5493 = vmatmul.bf16.gmra.mxu0 %v3910
      %v5494 = vpop.f32.mrf.mxu0
      %v5495 = vadd.f32 %v5361, %v5494
      %v5496 = vpop.f32.mrf.mxu0
      %v5497 = vadd.f32 %v5363, %v5496
      %5498 = vdwg.mxu0
      %v5499 = vpack.c.bf16 %v5375, %v5375
      %v5500 = vpack.c.bf16 %v5377, %v5377
      %v5501 = vpack.c.bf16 %v5380, %v5380
      %v5502 = vpack.c.bf16 %v5382, %v5382
      %v5503 = vpack.c.bf16 %v5385, %v5385
      %v5504 = vpack.c.bf16 %v5387, %v5387
      %v5505 = vpack.c.bf16 %v5390, %v5390
      %v5506 = vpack.c.bf16 %v5392, %v5392
      %v5507 = vpack.c.bf16 %v5395, %v5395
      %v5508 = vpack.c.bf16 %v5397, %v5397
      %v5509 = vpack.c.bf16 %v5400, %v5400
      %v5510 = vpack.c.bf16 %v5402, %v5402
      %v5511 = vpack.c.bf16 %v5405, %v5405
      %v5512 = vpack.c.bf16 %v5407, %v5407
      %v5513 = vpack.c.bf16 %v5410, %v5410
      %v5514 = vpack.c.bf16 %v5412, %v5412
      %v5515 = vpack.c.bf16 %v5415, %v5415
      %v5516 = vpack.c.bf16 %v5417, %v5417
      %v5517 = vpack.c.bf16 %v5420, %v5420
      %v5518 = vpack.c.bf16 %v5422, %v5422
      %v5519 = vpack.c.bf16 %v5425, %v5425
      %v5520 = vpack.c.bf16 %v5427, %v5427
      %v5521 = vpack.c.bf16 %v5430, %v5430
      %v5522 = vpack.c.bf16 %v5432, %v5432
      %v5523 = vpack.c.bf16 %v5435, %v5435
      %v5524 = vpack.c.bf16 %v5437, %v5437
      %v5525 = vpack.c.bf16 %v5440, %v5440
      %v5526 = vpack.c.bf16 %v5442, %v5442
      %v5527 = vpack.c.bf16 %v5445, %v5445
      %v5528 = vpack.c.bf16 %v5447, %v5447
      %v5529 = vpack.c.bf16 %v5450, %v5450
      %v5530 = vpack.c.bf16 %v5452, %v5452
      %v5531 = vpack.c.bf16 %v5455, %v5455
      %v5532 = vpack.c.bf16 %v5457, %v5457
      %v5533 = vpack.c.bf16 %v5460, %v5460
      %v5534 = vpack.c.bf16 %v5462, %v5462
      %v5535 = vpack.c.bf16 %v5465, %v5465
      %v5536 = vpack.c.bf16 %v5467, %v5467
      %v5537 = vpack.c.bf16 %v5470, %v5470
      %v5538 = vpack.c.bf16 %v5472, %v5472
      %v5539 = vpack.c.bf16 %v5475, %v5475
      %v5540 = vpack.c.bf16 %v5477, %v5477
      %v5541 = vpack.c.bf16 %v5480, %v5480
      %v5542 = vpack.c.bf16 %v5482, %v5482
      %v5543 = vpack.c.bf16 %v5485, %v5485
      %v5544 = vpack.c.bf16 %v5487, %v5487
      %v5545 = vpack.c.bf16 %v5490, %v5490
      %v5546 = vpack.c.bf16 %v5492, %v5492
      %v5547 = vpack.c.bf16 %v5495, %v5495
      %v5548 = vpack.c.bf16 %v5497, %v5497
      %5549 = vst [vmem:[%s229] sm:$0xf] %v5499
      %5550 = vst [vmem:[%s229 + $0x4] sm:$0xf] %v5500
      %5551 = vst [vmem:[%s229 + $0x8] sm:$0xf] %v5501
      %5552 = vst [vmem:[%s229 + $0xc] sm:$0xf] %v5502
      %5553 = vst [vmem:[%s229 + $0x10] sm:$0xf] %v5503
      %5554 = vst [vmem:[%s229 + $0x14] sm:$0xf] %v5504
      %5555 = vst [vmem:[%s229 + $0x18] sm:$0xf] %v5505
      %5556 = vst [vmem:[%s229 + $0x1c] sm:$0xf] %v5506
      %5557 = vst [vmem:[%s229 + $0x20] sm:$0xf] %v5507
      %5558 = vst [vmem:[%s229 + $0x24] sm:$0xf] %v5508
      %5559 = vst [vmem:[%s229 + $0x28] sm:$0xf] %v5509
      %5560 = vst [vmem:[%s229 + $0x2c] sm:$0xf] %v5510
      %5561 = vst [vmem:[%s229 + $0x30] sm:$0xf] %v5511
      %5562 = vst [vmem:[%s229 + $0x34] sm:$0xf] %v5512
      %5563 = vst [vmem:[%s229 + $0x38] sm:$0xf] %v5513
      %5564 = vst [vmem:[%s229 + $0x3c] sm:$0xf] %v5514
      %5565 = vst [vmem:[%s229 + $0x40] sm:$0xf] %v5515
      %5566 = vst [vmem:[%s229 + $0x44] sm:$0xf] %v5516
      %5567 = vst [vmem:[%s229 + $0x48] sm:$0xf] %v5517
      %5568 = vst [vmem:[%s229 + $0x4c] sm:$0xf] %v5518
      %5569 = vst [vmem:[%s229 + $0x50] sm:$0xf] %v5519
      %5570 = vst [vmem:[%s229 + $0x54] sm:$0xf] %v5520
      %5571 = vst [vmem:[%s229 + $0x58] sm:$0xf] %v5521
      %5572 = vst [vmem:[%s229 + $0x5c] sm:$0xf] %v5522
      %5573 = vst [vmem:[%s229 + $0x60] sm:$0xf] %v5523
      %5574 = vst [vmem:[%s229 + $0x64] sm:$0xf] %v5524
      %5575 = vst [vmem:[%s229 + $0x68] sm:$0xf] %v5525
      %5576 = vst [vmem:[%s229 + $0x6c] sm:$0xf] %v5526
      %5577 = vst [vmem:[%s229 + $0x70] sm:$0xf] %v5527
      %5578 = vst [vmem:[%s229 + $0x74] sm:$0xf] %v5528
      %5579 = vst [vmem:[%s229 + $0x78] sm:$0xf] %v5529
      %5580 = vst [vmem:[%s229 + $0x7c] sm:$0xf] %v5530
      %5581 = vst [vmem:[%s229 + $0x80] sm:$0xf] %v5531
      %5582 = vst [vmem:[%s229 + $0x84] sm:$0xf] %v5532
      %5583 = vst [vmem:[%s229 + $0x88] sm:$0xf] %v5533
      %5584 = vst [vmem:[%s229 + $0x8c] sm:$0xf] %v5534
      %5585 = vst [vmem:[%s229 + $0x90] sm:$0xf] %v5535
      %5586 = vst [vmem:[%s229 + $0x94] sm:$0xf] %v5536
      %5587 = vst [vmem:[%s229 + $0x98] sm:$0xf] %v5537
      %5588 = vst [vmem:[%s229 + $0x9c] sm:$0xf] %v5538
      %5589 = vst [vmem:[%s229 + $0xa0] sm:$0xf] %v5539
      %5590 = vst [vmem:[%s229 + $0xa4] sm:$0xf] %v5540
      %5591 = vst [vmem:[%s229 + $0xa8] sm:$0xf] %v5541
      %5592 = vst [vmem:[%s229 + $0xac] sm:$0xf] %v5542
      %5593 = vst [vmem:[%s229 + $0xb0] sm:$0xf] %v5543
      %5594 = vst [vmem:[%s229 + $0xb4] sm:$0xf] %v5544
      %5595 = vst [vmem:[%s229 + $0xb8] sm:$0xf] %v5545
      %5596 = vst [vmem:[%s229 + $0xbc] sm:$0xf] %v5546
      %5597 = vst [vmem:[%s229 + $0xc0] sm:$0xf] %v5547
      %5598 = vst [vmem:[%s229 + $0xc4] sm:$0xf] %v5548
      %s5599 = smul.u32 50, %s16
      %p5600 = scmp.lt.s32.totalorder %s5599, 99
      %s5601 = scalar_select %p5600, %s5599, 99
      %s5602 = smul.addr %s5601, 4
      %s5603 = scalar_lea.vmem %s5, %s5602
      // Predicated region
      $region41: #{maskrcnn_heads_forward.3} parent=39 // pred_check
        %p5604 = pneg %p144
      $region42: #{maskrcnn_heads_forward.3} parent=39 // pred_check_branch
        %5606 = sbr.rel (%p5604) target = $region44
      $region43: #{maskrcnn_heads_forward.3} parent=39 // pred_region
        %s5607 = smul.u32 50, %s16
      $region44: #{maskrcnn_heads_forward.3} parent=39 // pred_fallthru
        _
    $region40: #{maskrcnn_heads_forward.3} parent=5 // pred_fallthru
      _
    %p5608 = scmp.le.s32.totalorder 2, %s11
    // Predicated region
    $region45: #{maskrcnn_heads_forward.3} parent=5 // pred_check
      %p5609 = pneg %p5608
    $region46: #{maskrcnn_heads_forward.3} parent=5 // pred_check_branch
      %5611 = sbr.rel (%p5609) target = $region48
    $region47: #{maskrcnn_heads_forward.3} parent=5 // pred_region
      %s5612 = ssub.s32 %s11, 2
      // Predicated region
      $region49: #{maskrcnn_heads_forward.3} parent=47 // pred_check
        %p5613 = pneg %p150
      $region50: #{maskrcnn_heads_forward.3} parent=47 // pred_check_branch
        %5615 = sbr.rel (%p5613) target = $region52
      $region51: #{maskrcnn_heads_forward.3} parent=47 // pred_region
        %s5616 = smul.u32 50, %s17
        %p5617 = scmp.lt.s32.totalorder %s5616, 99
        %s5618 = scalar_select %p5617, %s5616, 99
        %s5619 = smul.addr %s5618, 4
        %s5620 = scalar_lea.vmem %s5, %s5619
      $region52: #{maskrcnn_heads_forward.3} parent=47 // pred_fallthru
        _
    $region48: #{maskrcnn_heads_forward.3} parent=5 // pred_fallthru
      _
  $region6: #{maskrcnn_heads_forward.3} parent=0 // loop_footer
    %s15 = sadd.s32 1, %s11
  $region7: #{maskrcnn_heads_forward.3} parent=0 // loop_footer_branch
    %10 = sbr.rel target = $region3
  $region8: #{maskrcnn_heads_forward.3} parent=0 // loop_exit
    _

</llo_original>
